<compile_context>
chip_gen: v5e
topology: v5e:2x2
jax: 0.10.0
libtpu: 0.0.40
codegen_flags: <defaults>
</compile_context>

<pallas_src>
import math

import jax
import jax.numpy as jnp
import numpy as np
from jax.experimental import pallas as pl
from jax.experimental.pallas import tpu as pltpu

# ----------------------------- configuration -----------------------------
D_MODEL = 32
NHEAD = 4
DIM_FF = 64
NUM_LAYERS = 2
T_LEN = 8      # tgt (query) sequence length
S_LEN = 16     # memory sequence length
BATCH = 2
EPS = 1e-5

# order of weight refs passed to the fused decoder kernel
WKEYS = [
    "sa_in_w", "sa_in_b", "sa_out_w", "sa_out_b",
    "ca_in_w", "ca_in_b", "ca_out_w", "ca_out_b",
    "lin1_w", "lin1_b", "lin2_w", "lin2_b",
    "n1_g", "n1_b", "n2_g", "n2_b", "n3_g", "n3_b",
    "norm_g", "norm_b",
]


# ------------------------------ kernel math -------------------------------
def _layer_norm(x, gamma, beta):
    mu = jnp.mean(x, axis=-1, keepdims=True)
    var = jnp.mean(jnp.square(x - mu), axis=-1, keepdims=True)
    return (x - mu) * jax.lax.rsqrt(var + EPS) * gamma + beta


def _to_batch_major(x2, b, d):
    """(L, B*D) value -> (B*L, D) batch-major slab (lane slices + sublane concat)."""
    return jnp.concatenate([x2[:, i * d:(i + 1) * d] for i in range(b)], axis=0)


def _attention(q, k, v, b, t_q, s_k, nhead):
    """Softmax attention on batch-major slabs.

    q: (b*t_q, D), k/v: (b*s_k, D).  Static per-head loop with the batch dim
    folded into each contraction (no transposes, no kh.T).  Returns (b*t_q, D)
    with heads concatenated on lanes (ready for one output projection).
    """
    d = q.shape[-1]
    dh = d // nhead
    scale = 1.0 / math.sqrt(dh)
    q3 = (q * scale).reshape(b, t_q, d)
    k3 = k.reshape(b, s_k, d)
    v3 = v.reshape(b, s_k, d)
    heads = []
    for h in range(nhead):
        lo, hi = h * dh, (h + 1) * dh
        logits = jnp.einsum("btd,bsd->bts", q3[:, :, lo:hi], k3[:, :, lo:hi],
                            preferred_element_type=jnp.float32)
        m = jnp.max(logits, axis=-1, keepdims=True)
        p = jnp.exp(logits - m)
        p = p * pl.reciprocal(jnp.sum(p, axis=-1, keepdims=True), approx=True)
        heads.append(jnp.einsum("bts,bsd->btd", p, v3[:, :, lo:hi],
                                preferred_element_type=jnp.float32))
    return jnp.concatenate(heads, axis=-1).reshape(b * t_q, d)


def _make_decoder_kernel(B, T, S, D, H, n_layers, has_qpos, has_pos):
    """Fused kernel: all decoder layers + final LayerNorm in one invocation."""

    def kernel(*refs):
        tgt_ref, mem_ref = refs[0], refs[1]
        idx = 2
        qpos_ref = refs[idx] if has_qpos else None
        idx += int(has_qpos)
        pos_ref = refs[idx] if has_pos else None
        idx += int(has_pos)
        w = {k: refs[idx + j][...] for j, k in enumerate(WKEYS)}
        out_ref = refs[idx + len(WKEYS)]

        # batch-major activation slabs (B*T, D) / (B*S, D)
        x = _to_batch_major(tgt_ref[...].astype(jnp.float32), B, D)
        mem = _to_batch_major(mem_ref[...].astype(jnp.float32), B, D)
        qp = (_to_batch_major(qpos_ref[...].astype(jnp.float32), B, D)
              if has_qpos else None)
        if has_pos:
            mem_k = _to_batch_major(
                (mem_ref[...] + pos_ref[...]).astype(jnp.float32), B, D)
        else:
            mem_k = mem

        # cross-attention K/V projections are loop-invariant (shared weights,
        # fixed memory) -> compute once, reuse in every layer.
        ca_k = jnp.dot(mem_k, w["ca_in_w"][:, D:2 * D],
                       preferred_element_type=jnp.float32) + w["ca_in_b"][:, D:2 * D]
        ca_v = jnp.dot(mem, w["ca_in_w"][:, 2 * D:],
                       preferred_element_type=jnp.float32) + w["ca_in_b"][:, 2 * D:]

        for _ in range(n_layers):   # _get_clones: all layers share the same weights
            # --- self attention: q = k = x + query_pos, v = x (fused QK proj) ---
            qk_in = x + qp if has_qpos else x
            qk = jnp.dot(qk_in, w["sa_in_w"][:, :2 * D],
                         preferred_element_type=jnp.float32) + w["sa_in_b"][:, :2 * D]
            sv = jnp.dot(x, w["sa_in_w"][:, 2 * D:],
                         preferred_element_type=jnp.float32) + w["sa_in_b"][:, 2 * D:]
            att = _attention(qk[:, :D], qk[:, D:], sv, B, T, T, H)
            sa = jnp.dot(att, w["sa_out_w"],
                         preferred_element_type=jnp.float32) + w["sa_out_b"]
            x = _layer_norm(x + sa, w["n1_g"], w["n1_b"])

            # --- cross attention: q = x + query_pos, k = memory+pos, v = memory ---
            cq_in = x + qp if has_qpos else x
            cq = jnp.dot(cq_in, w["ca_in_w"][:, :D],
                         preferred_element_type=jnp.float32) + w["ca_in_b"][:, :D]
            att = _attention(cq, ca_k, ca_v, B, T, S, H)
            ca = jnp.dot(att, w["ca_out_w"],
                         preferred_element_type=jnp.float32) + w["ca_out_b"]
            x = _layer_norm(x + ca, w["n2_g"], w["n2_b"])

            # --- feed-forward (ReLU); dropout = identity (eval mode) ---
            h1 = jnp.maximum(
                jnp.dot(x, w["lin1_w"], preferred_element_type=jnp.float32)
                + w["lin1_b"], 0.0)
            ff = jnp.dot(h1, w["lin2_w"],
                         preferred_element_type=jnp.float32) + w["lin2_b"]
            x = _layer_norm(x + ff, w["n3_g"], w["n3_b"])

        x = _layer_norm(x, w["norm_g"], w["norm_b"])    # final self.norm

        # lane-dense store: (T, B*D) slab == row-major layout of (T, B, D)
        out_ref[...] = jnp.concatenate(
            [x[b * T:(b + 1) * T, :] for b in range(B)], axis=-1
        ).astype(out_ref.dtype)

    return kernel


# ------------------------------- wrapper ----------------------------------
def _full_spec(shape):
    nd = len(shape)

    def index_map(i):
        return (0,) * nd

    return pl.BlockSpec(shape, index_map)


@jax.jit
def transformer_decoder_forward(tgt, memory, params, pos=None, query_pos=None):
    """tgt: (T, B, D), memory: (S, B, D)  ->  (1, T, B, D)  (return_intermediate=False)."""
    # TODO(synk): tgt_mask / memory_mask / key_padding_masks are None in the
    # reference call path exercised here and are not implemented.
    T, B, D = tgt.shape
    S = memory.shape[0]
    has_qpos = query_pos is not None
    has_pos = pos is not None

    # free row-major reshapes (no transposes / no materialized zeros for None)
    inputs = [tgt.reshape(T, B * D), memory.reshape(S, B * D)]
    if has_qpos:
        inputs.append(query_pos.reshape(T, B * D))
    if has_pos:
        inputs.append(pos.reshape(S, B * D))
    inputs += [params[k] for k in WKEYS]

    kernel = _make_decoder_kernel(B, T, S, D, NHEAD, NUM_LAYERS, has_qpos, has_pos)
    out = pl.pallas_call(
        kernel,
        grid=(1,),
        in_specs=[_full_spec(a.shape) for a in inputs],
        out_specs=_full_spec((T, B * D)),
        out_shape=jax.ShapeDtypeStruct((T, B * D), jnp.float32),
        compiler_params=pltpu.CompilerParams(dimension_semantics=("arbitrary",)),
    )(*inputs)

    return out.reshape(T, B, D)[None]       # free reshape; .unsqueeze(0)


# ------------------------- pure-JAX reference ------------------------------
def _ref_mha(q_in, k_in, v_in, in_w, in_b, out_w, out_b, nhead):
    d = q_in.shape[-1]
    dh = d // nhead
    q = q_in @ in_w[:, :d] + in_b[0, :d]
    k = k_in @ in_w[:, d:2 * d] + in_b[0, d:2 * d]
    v = v_in @ in_w[:, 2 * d:] + in_b[0, 2 * d:]
    T, S = q.shape[0], k.shape[0]
    q = q.reshape(T, nhead, dh).transpose(1, 0, 2) / np.sqrt(dh)
    k = k.reshape(S, nhead, dh).transpose(1, 0, 2)
    v = v.reshape(S, nhead, dh).transpose(1, 0, 2)
    p = jax.nn.softmax(jnp.einsum("htd,hsd->hts", q, k), axis=-1)
    o = jnp.einsum("hts,hsd->htd", p, v).transpose(1, 0, 2).reshape(T, d)
    return o @ out_w + out_b[0]


def reference_forward(tgt, memory, params, pos, query_pos):
    p = params
    T, B, D = tgt.shape
    outs = []
    for b in range(B):
        x, mem = tgt[:, b], memory[:, b]
        qp, ps = query_pos[:, b], pos[:, b]
        for _ in range(NUM_LAYERS):
            qk = x + qp
            sa = _ref_mha(qk, qk, x, p["sa_in_w"], p["sa_in_b"],
                          p["sa_out_w"], p["sa_out_b"], NHEAD)
            x = _layer_norm(x + sa, p["n1_g"][0], p["n1_b"][0])
            ca = _ref_mha(x + qp, mem + ps, mem, p["ca_in_w"], p["ca_in_b"],
                          p["ca_out_w"], p["ca_out_b"], NHEAD)
            x = _layer_norm(x + ca, p["n2_g"][0], p["n2_b"][0])
            ff = jnp.maximum(x @ p["lin1_w"] + p["lin1_b"][0], 0.0) @ p["lin2_w"] + p["lin2_b"][0]
            x = _layer_norm(x + ff, p["n3_g"][0], p["n3_b"][0])
        x = _layer_norm(x, p["norm_g"][0], p["norm_b"][0])
        outs.append(x)
    return jnp.stack(outs, axis=1)[None]   # (1, T, B, D)


# --------------------------------- main ------------------------------------
def init_params(key, d, f):
    ks = jax.random.split(key, 8)
    n = lambda k, shape: (0.02 * jax.random.normal(k, shape)).astype(jnp.float32)
    return {
        # pre-transposed so kernels compute x @ W
        "sa_in_w": n(ks[0], (d, 3 * d)), "sa_in_b": jnp.zeros((1, 3 * d), jnp.float32),
        "sa_out_w": n(ks[1], (d, d)),    "sa_out_b": jnp.zeros((1, d), jnp.float32),
        "ca_in_w": n(ks[2], (d, 3 * d)), "ca_in_b": jnp.zeros((1, 3 * d), jnp.float32),
        "ca_out_w": n(ks[3], (d, d)),    "ca_out_b": jnp.zeros((1, d), jnp.float32),
        "lin1_w": n(ks[4], (d, f)),      "lin1_b": jnp.zeros((1, f), jnp.float32),
        "lin2_w": n(ks[5], (f, d)),      "lin2_b": jnp.zeros((1, d), jnp.float32),
        "n1_g": jnp.ones((1, d), jnp.float32), "n1_b": jnp.zeros((1, d), jnp.float32),
        "n2_g": jnp.ones((1, d), jnp.float32), "n2_b": jnp.zeros((1, d), jnp.float32),
        "n3_g": jnp.ones((1, d), jnp.float32), "n3_b": jnp.zeros((1, d), jnp.float32),
        "norm_g": jnp.ones((1, d), jnp.float32), "norm_b": jnp.zeros((1, d), jnp.float32),
    }


if __name__ == "__main__":
    key = jax.random.PRNGKey(0)
    k_t, k_m, k_p, k_q, k_w = jax.random.split(key, 5)

    tgt = jax.random.normal(k_t, (T_LEN, BATCH, D_MODEL), jnp.float32)
    memory = jax.random.normal(k_m, (S_LEN, BATCH, D_MODEL), jnp.float32)
    pos = jax.random.normal(k_p, (S_LEN, BATCH, D_MODEL), jnp.float32)
    query_pos = jax.random.normal(k_q, (T_LEN, BATCH, D_MODEL), jnp.float32)
    params = init_params(k_w, D_MODEL, DIM_FF)

    out = transformer_decoder_forward(tgt, memory, params, pos=pos, query_pos=query_pos)
    out = jax.block_until_ready(out)
    assert out.shape == (1, T_LEN, BATCH, D_MODEL), out.shape

    ref = reference_forward(tgt, memory, params, pos, query_pos)
    np.testing.assert_allclose(np.asarray(out), np.asarray(ref), rtol=1e-2, atol=1e-2)

    print("KERNEL_OK")
</pallas_src>

<mosaic_0001>
module attributes {stable_mosaic.version = 11 : i64} {
  func.func @kernel(%arg0: i32, %arg1: memref<8x64xf32, #tpu.memory_space<vmem>>, %arg2: memref<16x64xf32, #tpu.memory_space<vmem>>, %arg3: memref<8x64xf32, #tpu.memory_space<vmem>>, %arg4: memref<16x64xf32, #tpu.memory_space<vmem>>, %arg5: memref<32x96xf32, #tpu.memory_space<vmem>>, %arg6: memref<1x96xf32, #tpu.memory_space<vmem>>, %arg7: memref<32x32xf32, #tpu.memory_space<vmem>>, %arg8: memref<1x32xf32, #tpu.memory_space<vmem>>, %arg9: memref<32x96xf32, #tpu.memory_space<vmem>>, %arg10: memref<1x96xf32, #tpu.memory_space<vmem>>, %arg11: memref<32x32xf32, #tpu.memory_space<vmem>>, %arg12: memref<1x32xf32, #tpu.memory_space<vmem>>, %arg13: memref<32x64xf32, #tpu.memory_space<vmem>>, %arg14: memref<1x64xf32, #tpu.memory_space<vmem>>, %arg15: memref<64x32xf32, #tpu.memory_space<vmem>>, %arg16: memref<1x32xf32, #tpu.memory_space<vmem>>, %arg17: memref<1x32xf32, #tpu.memory_space<vmem>>, %arg18: memref<1x32xf32, #tpu.memory_space<vmem>>, %arg19: memref<1x32xf32, #tpu.memory_space<vmem>>, %arg20: memref<1x32xf32, #tpu.memory_space<vmem>>, %arg21: memref<1x32xf32, #tpu.memory_space<vmem>>, %arg22: memref<1x32xf32, #tpu.memory_space<vmem>>, %arg23: memref<1x32xf32, #tpu.memory_space<vmem>>, %arg24: memref<1x32xf32, #tpu.memory_space<vmem>>, %arg25: memref<8x64xf32, #tpu.memory_space<vmem>>) attributes {dimension_semantics = [#tpu.dimension_semantics<arbitrary>], iteration_bounds = array<i64: 1>, scalar_prefetch = 0 : i64, scratch_operands = 0 : i64, tpu.core_type = #tpu.core_type<tc>, window_params = [{pipeline_mode = #tpu.pipeline_mode<synchronous>, transform_indices = @transform_0, window_bounds = array<i64: 8, 64>}, {pipeline_mode = #tpu.pipeline_mode<synchronous>, transform_indices = @transform_1, window_bounds = array<i64: 16, 64>}, {pipeline_mode = #tpu.pipeline_mode<synchronous>, transform_indices = @transform_2, window_bounds = array<i64: 8, 64>}, {pipeline_mode = #tpu.pipeline_mode<synchronous>, transform_indices = @transform_3, window_bounds = array<i64: 16, 64>}, {pipeline_mode = #tpu.pipeline_mode<synchronous>, transform_indices = @transform_4, window_bounds = array<i64: 32, 96>}, {pipeline_mode = #tpu.pipeline_mode<synchronous>, transform_indices = @transform_5, window_bounds = array<i64: 1, 96>}, {pipeline_mode = #tpu.pipeline_mode<synchronous>, transform_indices = @transform_6, window_bounds = array<i64: 32, 32>}, {pipeline_mode = #tpu.pipeline_mode<synchronous>, transform_indices = @transform_7, window_bounds = array<i64: 1, 32>}, {pipeline_mode = #tpu.pipeline_mode<synchronous>, transform_indices = @transform_8, window_bounds = array<i64: 32, 96>}, {pipeline_mode = #tpu.pipeline_mode<synchronous>, transform_indices = @transform_9, window_bounds = array<i64: 1, 96>}, {pipeline_mode = #tpu.pipeline_mode<synchronous>, transform_indices = @transform_10, window_bounds = array<i64: 32, 32>}, {pipeline_mode = #tpu.pipeline_mode<synchronous>, transform_indices = @transform_11, window_bounds = array<i64: 1, 32>}, {pipeline_mode = #tpu.pipeline_mode<synchronous>, transform_indices = @transform_12, window_bounds = array<i64: 32, 64>}, {pipeline_mode = #tpu.pipeline_mode<synchronous>, transform_indices = @transform_13, window_bounds = array<i64: 1, 64>}, {pipeline_mode = #tpu.pipeline_mode<synchronous>, transform_indices = @transform_14, window_bounds = array<i64: 64, 32>}, {pipeline_mode = #tpu.pipeline_mode<synchronous>, transform_indices = @transform_15, window_bounds = array<i64: 1, 32>}, {pipeline_mode = #tpu.pipeline_mode<synchronous>, transform_indices = @transform_16, window_bounds = array<i64: 1, 32>}, {pipeline_mode = #tpu.pipeline_mode<synchronous>, transform_indices = @transform_17, window_bounds = array<i64: 1, 32>}, {pipeline_mode = #tpu.pipeline_mode<synchronous>, transform_indices = @transform_18, window_bounds = array<i64: 1, 32>}, {pipeline_mode = #tpu.pipeline_mode<synchronous>, transform_indices = @transform_19, window_bounds = array<i64: 1, 32>}, {pipeline_mode = #tpu.pipeline_mode<synchronous>, transform_indices = @transform_20, window_bounds = array<i64: 1, 32>}, {pipeline_mode = #tpu.pipeline_mode<synchronous>, transform_indices = @transform_21, window_bounds = array<i64: 1, 32>}, {pipeline_mode = #tpu.pipeline_mode<synchronous>, transform_indices = @transform_22, window_bounds = array<i64: 1, 32>}, {pipeline_mode = #tpu.pipeline_mode<synchronous>, transform_indices = @transform_23, window_bounds = array<i64: 1, 32>}, {pipeline_mode = #tpu.pipeline_mode<synchronous>, transform_indices = @transform_24, window_bounds = array<i64: 8, 64>}]} {
    %c0 = arith.constant 0 : index
    %c0_0 = arith.constant 0 : index
    %0 = vector.load %arg5[%c0, %c0_0] : memref<32x96xf32, #tpu.memory_space<vmem>>, vector<32x96xf32>
    %c0_1 = arith.constant 0 : index
    %c0_2 = arith.constant 0 : index
    %1 = vector.load %arg6[%c0_1, %c0_2] : memref<1x96xf32, #tpu.memory_space<vmem>>, vector<1x96xf32>
    %c0_3 = arith.constant 0 : index
    %c0_4 = arith.constant 0 : index
    %2 = vector.load %arg7[%c0_3, %c0_4] : memref<32x32xf32, #tpu.memory_space<vmem>>, vector<32x32xf32>
    %c0_5 = arith.constant 0 : index
    %c0_6 = arith.constant 0 : index
    %3 = vector.load %arg8[%c0_5, %c0_6] : memref<1x32xf32, #tpu.memory_space<vmem>>, vector<1x32xf32>
    %c0_7 = arith.constant 0 : index
    %c0_8 = arith.constant 0 : index
    %4 = vector.load %arg9[%c0_7, %c0_8] : memref<32x96xf32, #tpu.memory_space<vmem>>, vector<32x96xf32>
    %c0_9 = arith.constant 0 : index
    %c0_10 = arith.constant 0 : index
    %5 = vector.load %arg10[%c0_9, %c0_10] : memref<1x96xf32, #tpu.memory_space<vmem>>, vector<1x96xf32>
    %c0_11 = arith.constant 0 : index
    %c0_12 = arith.constant 0 : index
    %6 = vector.load %arg11[%c0_11, %c0_12] : memref<32x32xf32, #tpu.memory_space<vmem>>, vector<32x32xf32>
    %c0_13 = arith.constant 0 : index
    %c0_14 = arith.constant 0 : index
    %7 = vector.load %arg12[%c0_13, %c0_14] : memref<1x32xf32, #tpu.memory_space<vmem>>, vector<1x32xf32>
    %c0_15 = arith.constant 0 : index
    %c0_16 = arith.constant 0 : index
    %8 = vector.load %arg13[%c0_15, %c0_16] : memref<32x64xf32, #tpu.memory_space<vmem>>, vector<32x64xf32>
    %c0_17 = arith.constant 0 : index
    %c0_18 = arith.constant 0 : index
    %9 = vector.load %arg14[%c0_17, %c0_18] : memref<1x64xf32, #tpu.memory_space<vmem>>, vector<1x64xf32>
    %c0_19 = arith.constant 0 : index
    %c0_20 = arith.constant 0 : index
    %10 = vector.load %arg15[%c0_19, %c0_20] : memref<64x32xf32, #tpu.memory_space<vmem>>, vector<64x32xf32>
    %c0_21 = arith.constant 0 : index
    %c0_22 = arith.constant 0 : index
    %11 = vector.load %arg16[%c0_21, %c0_22] : memref<1x32xf32, #tpu.memory_space<vmem>>, vector<1x32xf32>
    %c0_23 = arith.constant 0 : index
    %c0_24 = arith.constant 0 : index
    %12 = vector.load %arg17[%c0_23, %c0_24] : memref<1x32xf32, #tpu.memory_space<vmem>>, vector<1x32xf32>
    %c0_25 = arith.constant 0 : index
    %c0_26 = arith.constant 0 : index
    %13 = vector.load %arg18[%c0_25, %c0_26] : memref<1x32xf32, #tpu.memory_space<vmem>>, vector<1x32xf32>
    %c0_27 = arith.constant 0 : index
    %c0_28 = arith.constant 0 : index
    %14 = vector.load %arg19[%c0_27, %c0_28] : memref<1x32xf32, #tpu.memory_space<vmem>>, vector<1x32xf32>
    %c0_29 = arith.constant 0 : index
    %c0_30 = arith.constant 0 : index
    %15 = vector.load %arg20[%c0_29, %c0_30] : memref<1x32xf32, #tpu.memory_space<vmem>>, vector<1x32xf32>
    %c0_31 = arith.constant 0 : index
    %c0_32 = arith.constant 0 : index
    %16 = vector.load %arg21[%c0_31, %c0_32] : memref<1x32xf32, #tpu.memory_space<vmem>>, vector<1x32xf32>
    %c0_33 = arith.constant 0 : index
    %c0_34 = arith.constant 0 : index
    %17 = vector.load %arg22[%c0_33, %c0_34] : memref<1x32xf32, #tpu.memory_space<vmem>>, vector<1x32xf32>
    %c0_35 = arith.constant 0 : index
    %c0_36 = arith.constant 0 : index
    %18 = vector.load %arg23[%c0_35, %c0_36] : memref<1x32xf32, #tpu.memory_space<vmem>>, vector<1x32xf32>
    %c0_37 = arith.constant 0 : index
    %c0_38 = arith.constant 0 : index
    %19 = vector.load %arg24[%c0_37, %c0_38] : memref<1x32xf32, #tpu.memory_space<vmem>>, vector<1x32xf32>
    %c0_39 = arith.constant 0 : index
    %c0_40 = arith.constant 0 : index
    %20 = vector.load %arg1[%c0_39, %c0_40] : memref<8x64xf32, #tpu.memory_space<vmem>>, vector<8x64xf32>
    %21 = vector.extract_strided_slice %20 {offsets = [0, 0], sizes = [8, 32], strides = [1, 1]} : vector<8x64xf32> to vector<8x32xf32>
    %22 = vector.extract_strided_slice %20 {offsets = [0, 32], sizes = [8, 32], strides = [1, 1]} : vector<8x64xf32> to vector<8x32xf32>
    %23 = tpu.concatenate %21, %22 in 0 : vector<8x32xf32>, vector<8x32xf32> -> vector<16x32xf32>
    %c0_41 = arith.constant 0 : index
    %c0_42 = arith.constant 0 : index
    %24 = vector.load %arg2[%c0_41, %c0_42] : memref<16x64xf32, #tpu.memory_space<vmem>>, vector<16x64xf32>
    %25 = vector.extract_strided_slice %24 {offsets = [0, 0], sizes = [16, 32], strides = [1, 1]} : vector<16x64xf32> to vector<16x32xf32>
    %26 = vector.extract_strided_slice %24 {offsets = [0, 32], sizes = [16, 32], strides = [1, 1]} : vector<16x64xf32> to vector<16x32xf32>
    %27 = tpu.concatenate %25, %26 in 0 : vector<16x32xf32>, vector<16x32xf32> -> vector<32x32xf32>
    %c0_43 = arith.constant 0 : index
    %c0_44 = arith.constant 0 : index
    %28 = vector.load %arg3[%c0_43, %c0_44] : memref<8x64xf32, #tpu.memory_space<vmem>>, vector<8x64xf32>
    %29 = vector.extract_strided_slice %28 {offsets = [0, 0], sizes = [8, 32], strides = [1, 1]} : vector<8x64xf32> to vector<8x32xf32>
    %30 = vector.extract_strided_slice %28 {offsets = [0, 32], sizes = [8, 32], strides = [1, 1]} : vector<8x64xf32> to vector<8x32xf32>
    %31 = tpu.concatenate %29, %30 in 0 : vector<8x32xf32>, vector<8x32xf32> -> vector<16x32xf32>
    %c0_45 = arith.constant 0 : index
    %c0_46 = arith.constant 0 : index
    %32 = vector.load %arg2[%c0_45, %c0_46] : memref<16x64xf32, #tpu.memory_space<vmem>>, vector<16x64xf32>
    %c0_47 = arith.constant 0 : index
    %c0_48 = arith.constant 0 : index
    %33 = vector.load %arg4[%c0_47, %c0_48] : memref<16x64xf32, #tpu.memory_space<vmem>>, vector<16x64xf32>
    %34 = arith.addf %32, %33 : vector<16x64xf32>
    %35 = vector.extract_strided_slice %34 {offsets = [0, 0], sizes = [16, 32], strides = [1, 1]} : vector<16x64xf32> to vector<16x32xf32>
    %36 = vector.extract_strided_slice %34 {offsets = [0, 32], sizes = [16, 32], strides = [1, 1]} : vector<16x64xf32> to vector<16x32xf32>
    %37 = tpu.concatenate %35, %36 in 0 : vector<16x32xf32>, vector<16x32xf32> -> vector<32x32xf32>
    %38 = vector.extract_strided_slice %4 {offsets = [0, 32], sizes = [32, 32], strides = [1, 1]} : vector<32x96xf32> to vector<32x32xf32>
    %cst = arith.constant dense<0.000000e+00> : vector<32x32xf32>
    %39 = tpu.matmul %37, %38, %cst {dimension_numbers = #tpu.dot_dimension_numbers<[1], [0], [0], [1], [0, 0, 1, 1], [], []>} : vector<32x32xf32>, vector<32x32xf32>, vector<32x32xf32> -> vector<32x32xf32>
    %40 = vector.extract_strided_slice %5 {offsets = [0, 32], sizes = [1, 32], strides = [1, 1]} : vector<1x96xf32> to vector<1x32xf32>
    %41 = vector.broadcast %40 : vector<1x32xf32> to vector<32x32xf32>
    %42 = arith.addf %39, %41 : vector<32x32xf32>
    %43 = vector.extract_strided_slice %4 {offsets = [0, 64], sizes = [32, 32], strides = [1, 1]} : vector<32x96xf32> to vector<32x32xf32>
    %cst_49 = arith.constant dense<0.000000e+00> : vector<32x32xf32>
    %44 = tpu.matmul %27, %43, %cst_49 {dimension_numbers = #tpu.dot_dimension_numbers<[1], [0], [0], [1], [0, 0, 1, 1], [], []>} : vector<32x32xf32>, vector<32x32xf32>, vector<32x32xf32> -> vector<32x32xf32>
    %45 = vector.extract_strided_slice %5 {offsets = [0, 64], sizes = [1, 32], strides = [1, 1]} : vector<1x96xf32> to vector<1x32xf32>
    %46 = vector.broadcast %45 : vector<1x32xf32> to vector<32x32xf32>
    %47 = arith.addf %44, %46 : vector<32x32xf32>
    %48 = arith.addf %23, %31 : vector<16x32xf32>
    %49 = vector.extract_strided_slice %0 {offsets = [0, 0], sizes = [32, 64], strides = [1, 1]} : vector<32x96xf32> to vector<32x64xf32>
    %cst_50 = arith.constant dense<0.000000e+00> : vector<16x64xf32>
    %50 = tpu.matmul %48, %49, %cst_50 {dimension_numbers = #tpu.dot_dimension_numbers<[1], [0], [0], [1], [0, 0, 1, 1], [], []>} : vector<16x32xf32>, vector<32x64xf32>, vector<16x64xf32> -> vector<16x64xf32>
    %51 = vector.extract_strided_slice %1 {offsets = [0, 0], sizes = [1, 64], strides = [1, 1]} : vector<1x96xf32> to vector<1x64xf32>
    %52 = vector.broadcast %51 : vector<1x64xf32> to vector<16x64xf32>
    %53 = arith.addf %50, %52 : vector<16x64xf32>
    %54 = vector.extract_strided_slice %0 {offsets = [0, 64], sizes = [32, 32], strides = [1, 1]} : vector<32x96xf32> to vector<32x32xf32>
    %cst_51 = arith.constant dense<0.000000e+00> : vector<16x32xf32>
    %55 = tpu.matmul %23, %54, %cst_51 {dimension_numbers = #tpu.dot_dimension_numbers<[1], [0], [0], [1], [0, 0, 1, 1], [], []>} : vector<16x32xf32>, vector<32x32xf32>, vector<16x32xf32> -> vector<16x32xf32>
    %56 = vector.extract_strided_slice %1 {offsets = [0, 64], sizes = [1, 32], strides = [1, 1]} : vector<1x96xf32> to vector<1x32xf32>
    %57 = vector.broadcast %56 : vector<1x32xf32> to vector<16x32xf32>
    %58 = arith.addf %55, %57 : vector<16x32xf32>
    %59 = vector.extract_strided_slice %53 {offsets = [0, 0], sizes = [16, 32], strides = [1, 1]} : vector<16x64xf32> to vector<16x32xf32>
    %60 = vector.extract_strided_slice %53 {offsets = [0, 32], sizes = [16, 32], strides = [1, 1]} : vector<16x64xf32> to vector<16x32xf32>
    %cst_52 = arith.constant 0.353553385 : f32
    %61 = vector.broadcast %cst_52 : f32 to vector<16x32xf32>
    %62 = arith.mulf %59, %61 : vector<16x32xf32>
    %63 = vector.shape_cast %62 : vector<16x32xf32> to vector<2x8x32xf32>
    %64 = vector.shape_cast %60 : vector<16x32xf32> to vector<2x8x32xf32>
    %65 = vector.shape_cast %58 : vector<16x32xf32> to vector<2x8x32xf32>
    %66 = vector.extract_strided_slice %63 {offsets = [0, 0, 0], sizes = [2, 8, 8], strides = [1, 1, 1]} : vector<2x8x32xf32> to vector<2x8x8xf32>
    %67 = vector.extract_strided_slice %64 {offsets = [0, 0, 0], sizes = [2, 8, 8], strides = [1, 1, 1]} : vector<2x8x32xf32> to vector<2x8x8xf32>
    "tpu.trace_start"() <{level = 10 : i32, message = "btd,bsd->bts"}> : () -> ()
    %cst_53 = arith.constant dense<0.000000e+00> : vector<2x8x8xf32>
    %68 = tpu.matmul %66, %67, %cst_53 {dimension_numbers = #tpu.dot_dimension_numbers<[2], [2], [1], [1], [0, 0, 0, 1, 1, 1], [0], [0]>} : vector<2x8x8xf32>, vector<2x8x8xf32>, vector<2x8x8xf32> -> vector<2x8x8xf32>
    "tpu.trace_stop"() : () -> ()
    %cst_54 = arith.constant dense<0xFF800000> : vector<2x8xf32>
    %69 = vector.multi_reduction <maximumf>, %68, %cst_54 [2] : vector<2x8x8xf32> to vector<2x8xf32>
    %70 = vector.shape_cast %69 : vector<2x8xf32> to vector<2x8x1xf32>
    %71 = vector.broadcast %70 : vector<2x8x1xf32> to vector<2x8x8xf32>
    %72 = arith.subf %68, %71 : vector<2x8x8xf32>
    %73 = math.exp %72 : vector<2x8x8xf32>
    %cst_55 = arith.constant dense<0.000000e+00> : vector<2x8xf32>
    %74 = vector.multi_reduction <add>, %73, %cst_55 [2] : vector<2x8x8xf32> to vector<2x8xf32>
    %75 = vector.shape_cast %74 : vector<2x8xf32> to vector<2x8x1xf32>
    %76 = tpu.reciprocal %75 {approx = true} : vector<2x8x1xf32> -> vector<2x8x1xf32>
    %77 = vector.broadcast %76 : vector<2x8x1xf32> to vector<2x8x8xf32>
    %78 = arith.mulf %73, %77 : vector<2x8x8xf32>
    %79 = vector.extract_strided_slice %65 {offsets = [0, 0, 0], sizes = [2, 8, 8], strides = [1, 1, 1]} : vector<2x8x32xf32> to vector<2x8x8xf32>
    "tpu.trace_start"() <{level = 10 : i32, message = "bts,bsd->btd"}> : () -> ()
    %cst_56 = arith.constant dense<0.000000e+00> : vector<2x8x8xf32>
    %80 = tpu.matmul %78, %79, %cst_56 {dimension_numbers = #tpu.dot_dimension_numbers<[2], [1], [1], [2], [0, 0, 0, 1, 1, 2], [0], [0]>} : vector<2x8x8xf32>, vector<2x8x8xf32>, vector<2x8x8xf32> -> vector<2x8x8xf32>
    "tpu.trace_stop"() : () -> ()
    %81 = vector.extract_strided_slice %63 {offsets = [0, 0, 8], sizes = [2, 8, 8], strides = [1, 1, 1]} : vector<2x8x32xf32> to vector<2x8x8xf32>
    %82 = vector.extract_strided_slice %64 {offsets = [0, 0, 8], sizes = [2, 8, 8], strides = [1, 1, 1]} : vector<2x8x32xf32> to vector<2x8x8xf32>
    "tpu.trace_start"() <{level = 10 : i32, message = "btd,bsd->bts"}> : () -> ()
    %cst_57 = arith.constant dense<0.000000e+00> : vector<2x8x8xf32>
    %83 = tpu.matmul %81, %82, %cst_57 {dimension_numbers = #tpu.dot_dimension_numbers<[2], [2], [1], [1], [0, 0, 0, 1, 1, 1], [0], [0]>} : vector<2x8x8xf32>, vector<2x8x8xf32>, vector<2x8x8xf32> -> vector<2x8x8xf32>
    "tpu.trace_stop"() : () -> ()
    %cst_58 = arith.constant dense<0xFF800000> : vector<2x8xf32>
    %84 = vector.multi_reduction <maximumf>, %83, %cst_58 [2] : vector<2x8x8xf32> to vector<2x8xf32>
    %85 = vector.shape_cast %84 : vector<2x8xf32> to vector<2x8x1xf32>
    %86 = vector.broadcast %85 : vector<2x8x1xf32> to vector<2x8x8xf32>
    %87 = arith.subf %83, %86 : vector<2x8x8xf32>
    %88 = math.exp %87 : vector<2x8x8xf32>
    %cst_59 = arith.constant dense<0.000000e+00> : vector<2x8xf32>
    %89 = vector.multi_reduction <add>, %88, %cst_59 [2] : vector<2x8x8xf32> to vector<2x8xf32>
    %90 = vector.shape_cast %89 : vector<2x8xf32> to vector<2x8x1xf32>
    %91 = tpu.reciprocal %90 {approx = true} : vector<2x8x1xf32> -> vector<2x8x1xf32>
    %92 = vector.broadcast %91 : vector<2x8x1xf32> to vector<2x8x8xf32>
    %93 = arith.mulf %88, %92 : vector<2x8x8xf32>
    %94 = vector.extract_strided_slice %65 {offsets = [0, 0, 8], sizes = [2, 8, 8], strides = [1, 1, 1]} : vector<2x8x32xf32> to vector<2x8x8xf32>
    "tpu.trace_start"() <{level = 10 : i32, message = "bts,bsd->btd"}> : () -> ()
    %cst_60 = arith.constant dense<0.000000e+00> : vector<2x8x8xf32>
    %95 = tpu.matmul %93, %94, %cst_60 {dimension_numbers = #tpu.dot_dimension_numbers<[2], [1], [1], [2], [0, 0, 0, 1, 1, 2], [0], [0]>} : vector<2x8x8xf32>, vector<2x8x8xf32>, vector<2x8x8xf32> -> vector<2x8x8xf32>
    "tpu.trace_stop"() : () -> ()
    %96 = vector.extract_strided_slice %63 {offsets = [0, 0, 16], sizes = [2, 8, 8], strides = [1, 1, 1]} : vector<2x8x32xf32> to vector<2x8x8xf32>
    %97 = vector.extract_strided_slice %64 {offsets = [0, 0, 16], sizes = [2, 8, 8], strides = [1, 1, 1]} : vector<2x8x32xf32> to vector<2x8x8xf32>
    "tpu.trace_start"() <{level = 10 : i32, message = "btd,bsd->bts"}> : () -> ()
    %cst_61 = arith.constant dense<0.000000e+00> : vector<2x8x8xf32>
    %98 = tpu.matmul %96, %97, %cst_61 {dimension_numbers = #tpu.dot_dimension_numbers<[2], [2], [1], [1], [0, 0, 0, 1, 1, 1], [0], [0]>} : vector<2x8x8xf32>, vector<2x8x8xf32>, vector<2x8x8xf32> -> vector<2x8x8xf32>
    "tpu.trace_stop"() : () -> ()
    %cst_62 = arith.constant dense<0xFF800000> : vector<2x8xf32>
    %99 = vector.multi_reduction <maximumf>, %98, %cst_62 [2] : vector<2x8x8xf32> to vector<2x8xf32>
    %100 = vector.shape_cast %99 : vector<2x8xf32> to vector<2x8x1xf32>
    %101 = vector.broadcast %100 : vector<2x8x1xf32> to vector<2x8x8xf32>
    %102 = arith.subf %98, %101 : vector<2x8x8xf32>
    %103 = math.exp %102 : vector<2x8x8xf32>
    %cst_63 = arith.constant dense<0.000000e+00> : vector<2x8xf32>
    %104 = vector.multi_reduction <add>, %103, %cst_63 [2] : vector<2x8x8xf32> to vector<2x8xf32>
    %105 = vector.shape_cast %104 : vector<2x8xf32> to vector<2x8x1xf32>
    %106 = tpu.reciprocal %105 {approx = true} : vector<2x8x1xf32> -> vector<2x8x1xf32>
    %107 = vector.broadcast %106 : vector<2x8x1xf32> to vector<2x8x8xf32>
    %108 = arith.mulf %103, %107 : vector<2x8x8xf32>
    %109 = vector.extract_strided_slice %65 {offsets = [0, 0, 16], sizes = [2, 8, 8], strides = [1, 1, 1]} : vector<2x8x32xf32> to vector<2x8x8xf32>
    "tpu.trace_start"() <{level = 10 : i32, message = "bts,bsd->btd"}> : () -> ()
    %cst_64 = arith.constant dense<0.000000e+00> : vector<2x8x8xf32>
    %110 = tpu.matmul %108, %109, %cst_64 {dimension_numbers = #tpu.dot_dimension_numbers<[2], [1], [1], [2], [0, 0, 0, 1, 1, 2], [0], [0]>} : vector<2x8x8xf32>, vector<2x8x8xf32>, vector<2x8x8xf32> -> vector<2x8x8xf32>
    "tpu.trace_stop"() : () -> ()
    %111 = vector.extract_strided_slice %63 {offsets = [0, 0, 24], sizes = [2, 8, 8], strides = [1, 1, 1]} : vector<2x8x32xf32> to vector<2x8x8xf32>
    %112 = vector.extract_strided_slice %64 {offsets = [0, 0, 24], sizes = [2, 8, 8], strides = [1, 1, 1]} : vector<2x8x32xf32> to vector<2x8x8xf32>
    "tpu.trace_start"() <{level = 10 : i32, message = "btd,bsd->bts"}> : () -> ()
    %cst_65 = arith.constant dense<0.000000e+00> : vector<2x8x8xf32>
    %113 = tpu.matmul %111, %112, %cst_65 {dimension_numbers = #tpu.dot_dimension_numbers<[2], [2], [1], [1], [0, 0, 0, 1, 1, 1], [0], [0]>} : vector<2x8x8xf32>, vector<2x8x8xf32>, vector<2x8x8xf32> -> vector<2x8x8xf32>
    "tpu.trace_stop"() : () -> ()
    %cst_66 = arith.constant dense<0xFF800000> : vector<2x8xf32>
    %114 = vector.multi_reduction <maximumf>, %113, %cst_66 [2] : vector<2x8x8xf32> to vector<2x8xf32>
    %115 = vector.shape_cast %114 : vector<2x8xf32> to vector<2x8x1xf32>
    %116 = vector.broadcast %115 : vector<2x8x1xf32> to vector<2x8x8xf32>
    %117 = arith.subf %113, %116 : vector<2x8x8xf32>
    %118 = math.exp %117 : vector<2x8x8xf32>
    %cst_67 = arith.constant dense<0.000000e+00> : vector<2x8xf32>
    %119 = vector.multi_reduction <add>, %118, %cst_67 [2] : vector<2x8x8xf32> to vector<2x8xf32>
    %120 = vector.shape_cast %119 : vector<2x8xf32> to vector<2x8x1xf32>
    %121 = tpu.reciprocal %120 {approx = true} : vector<2x8x1xf32> -> vector<2x8x1xf32>
    %122 = vector.broadcast %121 : vector<2x8x1xf32> to vector<2x8x8xf32>
    %123 = arith.mulf %118, %122 : vector<2x8x8xf32>
    %124 = vector.extract_strided_slice %65 {offsets = [0, 0, 24], sizes = [2, 8, 8], strides = [1, 1, 1]} : vector<2x8x32xf32> to vector<2x8x8xf32>
    "tpu.trace_start"() <{level = 10 : i32, message = "bts,bsd->btd"}> : () -> ()
    %cst_68 = arith.constant dense<0.000000e+00> : vector<2x8x8xf32>
    %125 = tpu.matmul %123, %124, %cst_68 {dimension_numbers = #tpu.dot_dimension_numbers<[2], [1], [1], [2], [0, 0, 0, 1, 1, 2], [0], [0]>} : vector<2x8x8xf32>, vector<2x8x8xf32>, vector<2x8x8xf32> -> vector<2x8x8xf32>
    "tpu.trace_stop"() : () -> ()
    %126 = tpu.concatenate %80, %95, %110, %125 in 2 : vector<2x8x8xf32>, vector<2x8x8xf32>, vector<2x8x8xf32>, vector<2x8x8xf32> -> vector<2x8x32xf32>
    %127 = vector.shape_cast %126 : vector<2x8x32xf32> to vector<16x32xf32>
    %cst_69 = arith.constant dense<0.000000e+00> : vector<16x32xf32>
    %128 = tpu.matmul %127, %2, %cst_69 {dimension_numbers = #tpu.dot_dimension_numbers<[1], [0], [0], [1], [0, 0, 1, 1], [], []>} : vector<16x32xf32>, vector<32x32xf32>, vector<16x32xf32> -> vector<16x32xf32>
    %129 = vector.broadcast %3 : vector<1x32xf32> to vector<16x32xf32>
    %130 = arith.addf %128, %129 : vector<16x32xf32>
    %131 = arith.addf %23, %130 : vector<16x32xf32>
    %cst_70 = arith.constant dense<0.000000e+00> : vector<16xf32>
    %132 = vector.multi_reduction <add>, %131, %cst_70 [1] : vector<16x32xf32> to vector<16xf32>
    %133 = vector.shape_cast %132 : vector<16xf32> to vector<16x1xf32>
    %cst_71 = arith.constant 3.200000e+01 : f32
    %134 = vector.broadcast %cst_71 : f32 to vector<16x1xf32>
    %135 = arith.divf %133, %134 : vector<16x1xf32>
    %136 = vector.broadcast %135 : vector<16x1xf32> to vector<16x32xf32>
    %137 = arith.subf %131, %136 : vector<16x32xf32>
    %138 = arith.mulf %137, %137 : vector<16x32xf32>
    %cst_72 = arith.constant dense<0.000000e+00> : vector<16xf32>
    %139 = vector.multi_reduction <add>, %138, %cst_72 [1] : vector<16x32xf32> to vector<16xf32>
    %140 = vector.shape_cast %139 : vector<16xf32> to vector<16x1xf32>
    %cst_73 = arith.constant 3.200000e+01 : f32
    %141 = vector.broadcast %cst_73 : f32 to vector<16x1xf32>
    %142 = arith.divf %140, %141 : vector<16x1xf32>
    %143 = vector.broadcast %135 : vector<16x1xf32> to vector<16x32xf32>
    %144 = arith.subf %131, %143 : vector<16x32xf32>
    %cst_74 = arith.constant 9.99999974E-6 : f32
    %145 = vector.broadcast %cst_74 : f32 to vector<16x1xf32>
    %146 = arith.addf %142, %145 : vector<16x1xf32>
    %147 = math.rsqrt %146 : vector<16x1xf32>
    %148 = vector.broadcast %147 : vector<16x1xf32> to vector<16x32xf32>
    %149 = arith.mulf %144, %148 : vector<16x32xf32>
    %150 = vector.broadcast %12 : vector<1x32xf32> to vector<16x32xf32>
    %151 = arith.mulf %149, %150 : vector<16x32xf32>
    %152 = vector.broadcast %13 : vector<1x32xf32> to vector<16x32xf32>
    %153 = arith.addf %151, %152 : vector<16x32xf32>
    %154 = arith.addf %153, %31 : vector<16x32xf32>
    %155 = vector.extract_strided_slice %4 {offsets = [0, 0], sizes = [32, 32], strides = [1, 1]} : vector<32x96xf32> to vector<32x32xf32>
    %cst_75 = arith.constant dense<0.000000e+00> : vector<16x32xf32>
    %156 = tpu.matmul %154, %155, %cst_75 {dimension_numbers = #tpu.dot_dimension_numbers<[1], [0], [0], [1], [0, 0, 1, 1], [], []>} : vector<16x32xf32>, vector<32x32xf32>, vector<16x32xf32> -> vector<16x32xf32>
    %157 = vector.extract_strided_slice %5 {offsets = [0, 0], sizes = [1, 32], strides = [1, 1]} : vector<1x96xf32> to vector<1x32xf32>
    %158 = vector.broadcast %157 : vector<1x32xf32> to vector<16x32xf32>
    %159 = arith.addf %156, %158 : vector<16x32xf32>
    %cst_76 = arith.constant 0.353553385 : f32
    %160 = vector.broadcast %cst_76 : f32 to vector<16x32xf32>
    %161 = arith.mulf %159, %160 : vector<16x32xf32>
    %162 = vector.shape_cast %161 : vector<16x32xf32> to vector<2x8x32xf32>
    %163 = vector.shape_cast %42 : vector<32x32xf32> to vector<2x16x32xf32>
    %164 = vector.shape_cast %47 : vector<32x32xf32> to vector<2x16x32xf32>
    %165 = vector.extract_strided_slice %162 {offsets = [0, 0, 0], sizes = [2, 8, 8], strides = [1, 1, 1]} : vector<2x8x32xf32> to vector<2x8x8xf32>
    %166 = vector.extract_strided_slice %163 {offsets = [0, 0, 0], sizes = [2, 16, 8], strides = [1, 1, 1]} : vector<2x16x32xf32> to vector<2x16x8xf32>
    "tpu.trace_start"() <{level = 10 : i32, message = "btd,bsd->bts"}> : () -> ()
    %cst_77 = arith.constant dense<0.000000e+00> : vector<2x8x16xf32>
    %167 = tpu.matmul %165, %166, %cst_77 {dimension_numbers = #tpu.dot_dimension_numbers<[2], [2], [1], [1], [0, 0, 0, 1, 1, 1], [0], [0]>} : vector<2x8x8xf32>, vector<2x16x8xf32>, vector<2x8x16xf32> -> vector<2x8x16xf32>
    "tpu.trace_stop"() : () -> ()
    %cst_78 = arith.constant dense<0xFF800000> : vector<2x8xf32>
    %168 = vector.multi_reduction <maximumf>, %167, %cst_78 [2] : vector<2x8x16xf32> to vector<2x8xf32>
    %169 = vector.shape_cast %168 : vector<2x8xf32> to vector<2x8x1xf32>
    %170 = vector.broadcast %169 : vector<2x8x1xf32> to vector<2x8x16xf32>
    %171 = arith.subf %167, %170 : vector<2x8x16xf32>
    %172 = math.exp %171 : vector<2x8x16xf32>
    %cst_79 = arith.constant dense<0.000000e+00> : vector<2x8xf32>
    %173 = vector.multi_reduction <add>, %172, %cst_79 [2] : vector<2x8x16xf32> to vector<2x8xf32>
    %174 = vector.shape_cast %173 : vector<2x8xf32> to vector<2x8x1xf32>
    %175 = tpu.reciprocal %174 {approx = true} : vector<2x8x1xf32> -> vector<2x8x1xf32>
    %176 = vector.broadcast %175 : vector<2x8x1xf32> to vector<2x8x16xf32>
    %177 = arith.mulf %172, %176 : vector<2x8x16xf32>
    %178 = vector.extract_strided_slice %164 {offsets = [0, 0, 0], sizes = [2, 16, 8], strides = [1, 1, 1]} : vector<2x16x32xf32> to vector<2x16x8xf32>
    "tpu.trace_start"() <{level = 10 : i32, message = "bts,bsd->btd"}> : () -> ()
    %cst_80 = arith.constant dense<0.000000e+00> : vector<2x8x8xf32>
    %179 = tpu.matmul %177, %178, %cst_80 {dimension_numbers = #tpu.dot_dimension_numbers<[2], [1], [1], [2], [0, 0, 0, 1, 1, 2], [0], [0]>} : vector<2x8x16xf32>, vector<2x16x8xf32>, vector<2x8x8xf32> -> vector<2x8x8xf32>
    "tpu.trace_stop"() : () -> ()
    %180 = vector.extract_strided_slice %162 {offsets = [0, 0, 8], sizes = [2, 8, 8], strides = [1, 1, 1]} : vector<2x8x32xf32> to vector<2x8x8xf32>
    %181 = vector.extract_strided_slice %163 {offsets = [0, 0, 8], sizes = [2, 16, 8], strides = [1, 1, 1]} : vector<2x16x32xf32> to vector<2x16x8xf32>
    "tpu.trace_start"() <{level = 10 : i32, message = "btd,bsd->bts"}> : () -> ()
    %cst_81 = arith.constant dense<0.000000e+00> : vector<2x8x16xf32>
    %182 = tpu.matmul %180, %181, %cst_81 {dimension_numbers = #tpu.dot_dimension_numbers<[2], [2], [1], [1], [0, 0, 0, 1, 1, 1], [0], [0]>} : vector<2x8x8xf32>, vector<2x16x8xf32>, vector<2x8x16xf32> -> vector<2x8x16xf32>
    "tpu.trace_stop"() : () -> ()
    %cst_82 = arith.constant dense<0xFF800000> : vector<2x8xf32>
    %183 = vector.multi_reduction <maximumf>, %182, %cst_82 [2] : vector<2x8x16xf32> to vector<2x8xf32>
    %184 = vector.shape_cast %183 : vector<2x8xf32> to vector<2x8x1xf32>
    %185 = vector.broadcast %184 : vector<2x8x1xf32> to vector<2x8x16xf32>
    %186 = arith.subf %182, %185 : vector<2x8x16xf32>
    %187 = math.exp %186 : vector<2x8x16xf32>
    %cst_83 = arith.constant dense<0.000000e+00> : vector<2x8xf32>
    %188 = vector.multi_reduction <add>, %187, %cst_83 [2] : vector<2x8x16xf32> to vector<2x8xf32>
    %189 = vector.shape_cast %188 : vector<2x8xf32> to vector<2x8x1xf32>
    %190 = tpu.reciprocal %189 {approx = true} : vector<2x8x1xf32> -> vector<2x8x1xf32>
    %191 = vector.broadcast %190 : vector<2x8x1xf32> to vector<2x8x16xf32>
    %192 = arith.mulf %187, %191 : vector<2x8x16xf32>
    %193 = vector.extract_strided_slice %164 {offsets = [0, 0, 8], sizes = [2, 16, 8], strides = [1, 1, 1]} : vector<2x16x32xf32> to vector<2x16x8xf32>
    "tpu.trace_start"() <{level = 10 : i32, message = "bts,bsd->btd"}> : () -> ()
    %cst_84 = arith.constant dense<0.000000e+00> : vector<2x8x8xf32>
    %194 = tpu.matmul %192, %193, %cst_84 {dimension_numbers = #tpu.dot_dimension_numbers<[2], [1], [1], [2], [0, 0, 0, 1, 1, 2], [0], [0]>} : vector<2x8x16xf32>, vector<2x16x8xf32>, vector<2x8x8xf32> -> vector<2x8x8xf32>
    "tpu.trace_stop"() : () -> ()
    %195 = vector.extract_strided_slice %162 {offsets = [0, 0, 16], sizes = [2, 8, 8], strides = [1, 1, 1]} : vector<2x8x32xf32> to vector<2x8x8xf32>
    %196 = vector.extract_strided_slice %163 {offsets = [0, 0, 16], sizes = [2, 16, 8], strides = [1, 1, 1]} : vector<2x16x32xf32> to vector<2x16x8xf32>
    "tpu.trace_start"() <{level = 10 : i32, message = "btd,bsd->bts"}> : () -> ()
    %cst_85 = arith.constant dense<0.000000e+00> : vector<2x8x16xf32>
    %197 = tpu.matmul %195, %196, %cst_85 {dimension_numbers = #tpu.dot_dimension_numbers<[2], [2], [1], [1], [0, 0, 0, 1, 1, 1], [0], [0]>} : vector<2x8x8xf32>, vector<2x16x8xf32>, vector<2x8x16xf32> -> vector<2x8x16xf32>
    "tpu.trace_stop"() : () -> ()
    %cst_86 = arith.constant dense<0xFF800000> : vector<2x8xf32>
    %198 = vector.multi_reduction <maximumf>, %197, %cst_86 [2] : vector<2x8x16xf32> to vector<2x8xf32>
    %199 = vector.shape_cast %198 : vector<2x8xf32> to vector<2x8x1xf32>
    %200 = vector.broadcast %199 : vector<2x8x1xf32> to vector<2x8x16xf32>
    %201 = arith.subf %197, %200 : vector<2x8x16xf32>
    %202 = math.exp %201 : vector<2x8x16xf32>
    %cst_87 = arith.constant dense<0.000000e+00> : vector<2x8xf32>
    %203 = vector.multi_reduction <add>, %202, %cst_87 [2] : vector<2x8x16xf32> to vector<2x8xf32>
    %204 = vector.shape_cast %203 : vector<2x8xf32> to vector<2x8x1xf32>
    %205 = tpu.reciprocal %204 {approx = true} : vector<2x8x1xf32> -> vector<2x8x1xf32>
    %206 = vector.broadcast %205 : vector<2x8x1xf32> to vector<2x8x16xf32>
    %207 = arith.mulf %202, %206 : vector<2x8x16xf32>
    %208 = vector.extract_strided_slice %164 {offsets = [0, 0, 16], sizes = [2, 16, 8], strides = [1, 1, 1]} : vector<2x16x32xf32> to vector<2x16x8xf32>
    "tpu.trace_start"() <{level = 10 : i32, message = "bts,bsd->btd"}> : () -> ()
    %cst_88 = arith.constant dense<0.000000e+00> : vector<2x8x8xf32>
    %209 = tpu.matmul %207, %208, %cst_88 {dimension_numbers = #tpu.dot_dimension_numbers<[2], [1], [1], [2], [0, 0, 0, 1, 1, 2], [0], [0]>} : vector<2x8x16xf32>, vector<2x16x8xf32>, vector<2x8x8xf32> -> vector<2x8x8xf32>
    "tpu.trace_stop"() : () -> ()
    %210 = vector.extract_strided_slice %162 {offsets = [0, 0, 24], sizes = [2, 8, 8], strides = [1, 1, 1]} : vector<2x8x32xf32> to vector<2x8x8xf32>
    %211 = vector.extract_strided_slice %163 {offsets = [0, 0, 24], sizes = [2, 16, 8], strides = [1, 1, 1]} : vector<2x16x32xf32> to vector<2x16x8xf32>
    "tpu.trace_start"() <{level = 10 : i32, message = "btd,bsd->bts"}> : () -> ()
    %cst_89 = arith.constant dense<0.000000e+00> : vector<2x8x16xf32>
    %212 = tpu.matmul %210, %211, %cst_89 {dimension_numbers = #tpu.dot_dimension_numbers<[2], [2], [1], [1], [0, 0, 0, 1, 1, 1], [0], [0]>} : vector<2x8x8xf32>, vector<2x16x8xf32>, vector<2x8x16xf32> -> vector<2x8x16xf32>
    "tpu.trace_stop"() : () -> ()
    %cst_90 = arith.constant dense<0xFF800000> : vector<2x8xf32>
    %213 = vector.multi_reduction <maximumf>, %212, %cst_90 [2] : vector<2x8x16xf32> to vector<2x8xf32>
    %214 = vector.shape_cast %213 : vector<2x8xf32> to vector<2x8x1xf32>
    %215 = vector.broadcast %214 : vector<2x8x1xf32> to vector<2x8x16xf32>
    %216 = arith.subf %212, %215 : vector<2x8x16xf32>
    %217 = math.exp %216 : vector<2x8x16xf32>
    %cst_91 = arith.constant dense<0.000000e+00> : vector<2x8xf32>
    %218 = vector.multi_reduction <add>, %217, %cst_91 [2] : vector<2x8x16xf32> to vector<2x8xf32>
    %219 = vector.shape_cast %218 : vector<2x8xf32> to vector<2x8x1xf32>
    %220 = tpu.reciprocal %219 {approx = true} : vector<2x8x1xf32> -> vector<2x8x1xf32>
    %221 = vector.broadcast %220 : vector<2x8x1xf32> to vector<2x8x16xf32>
    %222 = arith.mulf %217, %221 : vector<2x8x16xf32>
    %223 = vector.extract_strided_slice %164 {offsets = [0, 0, 24], sizes = [2, 16, 8], strides = [1, 1, 1]} : vector<2x16x32xf32> to vector<2x16x8xf32>
    "tpu.trace_start"() <{level = 10 : i32, message = "bts,bsd->btd"}> : () -> ()
    %cst_92 = arith.constant dense<0.000000e+00> : vector<2x8x8xf32>
    %224 = tpu.matmul %222, %223, %cst_92 {dimension_numbers = #tpu.dot_dimension_numbers<[2], [1], [1], [2], [0, 0, 0, 1, 1, 2], [0], [0]>} : vector<2x8x16xf32>, vector<2x16x8xf32>, vector<2x8x8xf32> -> vector<2x8x8xf32>
    "tpu.trace_stop"() : () -> ()
    %225 = tpu.concatenate %179, %194, %209, %224 in 2 : vector<2x8x8xf32>, vector<2x8x8xf32>, vector<2x8x8xf32>, vector<2x8x8xf32> -> vector<2x8x32xf32>
    %226 = vector.shape_cast %225 : vector<2x8x32xf32> to vector<16x32xf32>
    %cst_93 = arith.constant dense<0.000000e+00> : vector<16x32xf32>
    %227 = tpu.matmul %226, %6, %cst_93 {dimension_numbers = #tpu.dot_dimension_numbers<[1], [0], [0], [1], [0, 0, 1, 1], [], []>} : vector<16x32xf32>, vector<32x32xf32>, vector<16x32xf32> -> vector<16x32xf32>
    %228 = vector.broadcast %7 : vector<1x32xf32> to vector<16x32xf32>
    %229 = arith.addf %227, %228 : vector<16x32xf32>
    %230 = arith.addf %153, %229 : vector<16x32xf32>
    %cst_94 = arith.constant dense<0.000000e+00> : vector<16xf32>
    %231 = vector.multi_reduction <add>, %230, %cst_94 [1] : vector<16x32xf32> to vector<16xf32>
    %232 = vector.shape_cast %231 : vector<16xf32> to vector<16x1xf32>
    %cst_95 = arith.constant 3.200000e+01 : f32
    %233 = vector.broadcast %cst_95 : f32 to vector<16x1xf32>
    %234 = arith.divf %232, %233 : vector<16x1xf32>
    %235 = vector.broadcast %234 : vector<16x1xf32> to vector<16x32xf32>
    %236 = arith.subf %230, %235 : vector<16x32xf32>
    %237 = arith.mulf %236, %236 : vector<16x32xf32>
    %cst_96 = arith.constant dense<0.000000e+00> : vector<16xf32>
    %238 = vector.multi_reduction <add>, %237, %cst_96 [1] : vector<16x32xf32> to vector<16xf32>
    %239 = vector.shape_cast %238 : vector<16xf32> to vector<16x1xf32>
    %cst_97 = arith.constant 3.200000e+01 : f32
    %240 = vector.broadcast %cst_97 : f32 to vector<16x1xf32>
    %241 = arith.divf %239, %240 : vector<16x1xf32>
    %242 = vector.broadcast %234 : vector<16x1xf32> to vector<16x32xf32>
    %243 = arith.subf %230, %242 : vector<16x32xf32>
    %cst_98 = arith.constant 9.99999974E-6 : f32
    %244 = vector.broadcast %cst_98 : f32 to vector<16x1xf32>
    %245 = arith.addf %241, %244 : vector<16x1xf32>
    %246 = math.rsqrt %245 : vector<16x1xf32>
    %247 = vector.broadcast %246 : vector<16x1xf32> to vector<16x32xf32>
    %248 = arith.mulf %243, %247 : vector<16x32xf32>
    %249 = vector.broadcast %14 : vector<1x32xf32> to vector<16x32xf32>
    %250 = arith.mulf %248, %249 : vector<16x32xf32>
    %251 = vector.broadcast %15 : vector<1x32xf32> to vector<16x32xf32>
    %252 = arith.addf %250, %251 : vector<16x32xf32>
    %cst_99 = arith.constant dense<0.000000e+00> : vector<16x64xf32>
    %253 = tpu.matmul %252, %8, %cst_99 {dimension_numbers = #tpu.dot_dimension_numbers<[1], [0], [0], [1], [0, 0, 1, 1], [], []>} : vector<16x32xf32>, vector<32x64xf32>, vector<16x64xf32> -> vector<16x64xf32>
    %254 = vector.broadcast %9 : vector<1x64xf32> to vector<16x64xf32>
    %255 = arith.addf %253, %254 : vector<16x64xf32>
    %cst_100 = arith.constant 0.000000e+00 : f32
    %256 = vector.broadcast %cst_100 : f32 to vector<16x64xf32>
    %257 = arith.maximumf %255, %256 : vector<16x64xf32>
    %cst_101 = arith.constant dense<0.000000e+00> : vector<16x32xf32>
    %258 = tpu.matmul %257, %10, %cst_101 {dimension_numbers = #tpu.dot_dimension_numbers<[1], [0], [0], [1], [0, 0, 1, 1], [], []>} : vector<16x64xf32>, vector<64x32xf32>, vector<16x32xf32> -> vector<16x32xf32>
    %259 = vector.broadcast %11 : vector<1x32xf32> to vector<16x32xf32>
    %260 = arith.addf %258, %259 : vector<16x32xf32>
    %261 = arith.addf %252, %260 : vector<16x32xf32>
    %cst_102 = arith.constant dense<0.000000e+00> : vector<16xf32>
    %262 = vector.multi_reduction <add>, %261, %cst_102 [1] : vector<16x32xf32> to vector<16xf32>
    %263 = vector.shape_cast %262 : vector<16xf32> to vector<16x1xf32>
    %cst_103 = arith.constant 3.200000e+01 : f32
    %264 = vector.broadcast %cst_103 : f32 to vector<16x1xf32>
    %265 = arith.divf %263, %264 : vector<16x1xf32>
    %266 = vector.broadcast %265 : vector<16x1xf32> to vector<16x32xf32>
    %267 = arith.subf %261, %266 : vector<16x32xf32>
    %268 = arith.mulf %267, %267 : vector<16x32xf32>
    %cst_104 = arith.constant dense<0.000000e+00> : vector<16xf32>
    %269 = vector.multi_reduction <add>, %268, %cst_104 [1] : vector<16x32xf32> to vector<16xf32>
    %270 = vector.shape_cast %269 : vector<16xf32> to vector<16x1xf32>
    %cst_105 = arith.constant 3.200000e+01 : f32
    %271 = vector.broadcast %cst_105 : f32 to vector<16x1xf32>
    %272 = arith.divf %270, %271 : vector<16x1xf32>
    %273 = vector.broadcast %265 : vector<16x1xf32> to vector<16x32xf32>
    %274 = arith.subf %261, %273 : vector<16x32xf32>
    %cst_106 = arith.constant 9.99999974E-6 : f32
    %275 = vector.broadcast %cst_106 : f32 to vector<16x1xf32>
    %276 = arith.addf %272, %275 : vector<16x1xf32>
    %277 = math.rsqrt %276 : vector<16x1xf32>
    %278 = vector.broadcast %277 : vector<16x1xf32> to vector<16x32xf32>
    %279 = arith.mulf %274, %278 : vector<16x32xf32>
    %280 = vector.broadcast %16 : vector<1x32xf32> to vector<16x32xf32>
    %281 = arith.mulf %279, %280 : vector<16x32xf32>
    %282 = vector.broadcast %17 : vector<1x32xf32> to vector<16x32xf32>
    %283 = arith.addf %281, %282 : vector<16x32xf32>
    %284 = arith.addf %283, %31 : vector<16x32xf32>
    %285 = vector.extract_strided_slice %0 {offsets = [0, 0], sizes = [32, 64], strides = [1, 1]} : vector<32x96xf32> to vector<32x64xf32>
    %cst_107 = arith.constant dense<0.000000e+00> : vector<16x64xf32>
    %286 = tpu.matmul %284, %285, %cst_107 {dimension_numbers = #tpu.dot_dimension_numbers<[1], [0], [0], [1], [0, 0, 1, 1], [], []>} : vector<16x32xf32>, vector<32x64xf32>, vector<16x64xf32> -> vector<16x64xf32>
    %287 = vector.extract_strided_slice %1 {offsets = [0, 0], sizes = [1, 64], strides = [1, 1]} : vector<1x96xf32> to vector<1x64xf32>
    %288 = vector.broadcast %287 : vector<1x64xf32> to vector<16x64xf32>
    %289 = arith.addf %286, %288 : vector<16x64xf32>
    %290 = vector.extract_strided_slice %0 {offsets = [0, 64], sizes = [32, 32], strides = [1, 1]} : vector<32x96xf32> to vector<32x32xf32>
    %cst_108 = arith.constant dense<0.000000e+00> : vector<16x32xf32>
    %291 = tpu.matmul %283, %290, %cst_108 {dimension_numbers = #tpu.dot_dimension_numbers<[1], [0], [0], [1], [0, 0, 1, 1], [], []>} : vector<16x32xf32>, vector<32x32xf32>, vector<16x32xf32> -> vector<16x32xf32>
    %292 = vector.extract_strided_slice %1 {offsets = [0, 64], sizes = [1, 32], strides = [1, 1]} : vector<1x96xf32> to vector<1x32xf32>
    %293 = vector.broadcast %292 : vector<1x32xf32> to vector<16x32xf32>
    %294 = arith.addf %291, %293 : vector<16x32xf32>
    %295 = vector.extract_strided_slice %289 {offsets = [0, 0], sizes = [16, 32], strides = [1, 1]} : vector<16x64xf32> to vector<16x32xf32>
    %296 = vector.extract_strided_slice %289 {offsets = [0, 32], sizes = [16, 32], strides = [1, 1]} : vector<16x64xf32> to vector<16x32xf32>
    %cst_109 = arith.constant 0.353553385 : f32
    %297 = vector.broadcast %cst_109 : f32 to vector<16x32xf32>
    %298 = arith.mulf %295, %297 : vector<16x32xf32>
    %299 = vector.shape_cast %298 : vector<16x32xf32> to vector<2x8x32xf32>
    %300 = vector.shape_cast %296 : vector<16x32xf32> to vector<2x8x32xf32>
    %301 = vector.shape_cast %294 : vector<16x32xf32> to vector<2x8x32xf32>
    %302 = vector.extract_strided_slice %299 {offsets = [0, 0, 0], sizes = [2, 8, 8], strides = [1, 1, 1]} : vector<2x8x32xf32> to vector<2x8x8xf32>
    %303 = vector.extract_strided_slice %300 {offsets = [0, 0, 0], sizes = [2, 8, 8], strides = [1, 1, 1]} : vector<2x8x32xf32> to vector<2x8x8xf32>
    "tpu.trace_start"() <{level = 10 : i32, message = "btd,bsd->bts"}> : () -> ()
    %cst_110 = arith.constant dense<0.000000e+00> : vector<2x8x8xf32>
    %304 = tpu.matmul %302, %303, %cst_110 {dimension_numbers = #tpu.dot_dimension_numbers<[2], [2], [1], [1], [0, 0, 0, 1, 1, 1], [0], [0]>} : vector<2x8x8xf32>, vector<2x8x8xf32>, vector<2x8x8xf32> -> vector<2x8x8xf32>
    "tpu.trace_stop"() : () -> ()
    %cst_111 = arith.constant dense<0xFF800000> : vector<2x8xf32>
    %305 = vector.multi_reduction <maximumf>, %304, %cst_111 [2] : vector<2x8x8xf32> to vector<2x8xf32>
    %306 = vector.shape_cast %305 : vector<2x8xf32> to vector<2x8x1xf32>
    %307 = vector.broadcast %306 : vector<2x8x1xf32> to vector<2x8x8xf32>
    %308 = arith.subf %304, %307 : vector<2x8x8xf32>
    %309 = math.exp %308 : vector<2x8x8xf32>
    %cst_112 = arith.constant dense<0.000000e+00> : vector<2x8xf32>
    %310 = vector.multi_reduction <add>, %309, %cst_112 [2] : vector<2x8x8xf32> to vector<2x8xf32>
    %311 = vector.shape_cast %310 : vector<2x8xf32> to vector<2x8x1xf32>
    %312 = tpu.reciprocal %311 {approx = true} : vector<2x8x1xf32> -> vector<2x8x1xf32>
    %313 = vector.broadcast %312 : vector<2x8x1xf32> to vector<2x8x8xf32>
    %314 = arith.mulf %309, %313 : vector<2x8x8xf32>
    %315 = vector.extract_strided_slice %301 {offsets = [0, 0, 0], sizes = [2, 8, 8], strides = [1, 1, 1]} : vector<2x8x32xf32> to vector<2x8x8xf32>
    "tpu.trace_start"() <{level = 10 : i32, message = "bts,bsd->btd"}> : () -> ()
    %cst_113 = arith.constant dense<0.000000e+00> : vector<2x8x8xf32>
    %316 = tpu.matmul %314, %315, %cst_113 {dimension_numbers = #tpu.dot_dimension_numbers<[2], [1], [1], [2], [0, 0, 0, 1, 1, 2], [0], [0]>} : vector<2x8x8xf32>, vector<2x8x8xf32>, vector<2x8x8xf32> -> vector<2x8x8xf32>
    "tpu.trace_stop"() : () -> ()
    %317 = vector.extract_strided_slice %299 {offsets = [0, 0, 8], sizes = [2, 8, 8], strides = [1, 1, 1]} : vector<2x8x32xf32> to vector<2x8x8xf32>
    %318 = vector.extract_strided_slice %300 {offsets = [0, 0, 8], sizes = [2, 8, 8], strides = [1, 1, 1]} : vector<2x8x32xf32> to vector<2x8x8xf32>
    "tpu.trace_start"() <{level = 10 : i32, message = "btd,bsd->bts"}> : () -> ()
    %cst_114 = arith.constant dense<0.000000e+00> : vector<2x8x8xf32>
    %319 = tpu.matmul %317, %318, %cst_114 {dimension_numbers = #tpu.dot_dimension_numbers<[2], [2], [1], [1], [0, 0, 0, 1, 1, 1], [0], [0]>} : vector<2x8x8xf32>, vector<2x8x8xf32>, vector<2x8x8xf32> -> vector<2x8x8xf32>
    "tpu.trace_stop"() : () -> ()
    %cst_115 = arith.constant dense<0xFF800000> : vector<2x8xf32>
    %320 = vector.multi_reduction <maximumf>, %319, %cst_115 [2] : vector<2x8x8xf32> to vector<2x8xf32>
    %321 = vector.shape_cast %320 : vector<2x8xf32> to vector<2x8x1xf32>
    %322 = vector.broadcast %321 : vector<2x8x1xf32> to vector<2x8x8xf32>
    %323 = arith.subf %319, %322 : vector<2x8x8xf32>
    %324 = math.exp %323 : vector<2x8x8xf32>
    %cst_116 = arith.constant dense<0.000000e+00> : vector<2x8xf32>
    %325 = vector.multi_reduction <add>, %324, %cst_116 [2] : vector<2x8x8xf32> to vector<2x8xf32>
    %326 = vector.shape_cast %325 : vector<2x8xf32> to vector<2x8x1xf32>
    %327 = tpu.reciprocal %326 {approx = true} : vector<2x8x1xf32> -> vector<2x8x1xf32>
    %328 = vector.broadcast %327 : vector<2x8x1xf32> to vector<2x8x8xf32>
    %329 = arith.mulf %324, %328 : vector<2x8x8xf32>
    %330 = vector.extract_strided_slice %301 {offsets = [0, 0, 8], sizes = [2, 8, 8], strides = [1, 1, 1]} : vector<2x8x32xf32> to vector<2x8x8xf32>
    "tpu.trace_start"() <{level = 10 : i32, message = "bts,bsd->btd"}> : () -> ()
    %cst_117 = arith.constant dense<0.000000e+00> : vector<2x8x8xf32>
    %331 = tpu.matmul %329, %330, %cst_117 {dimension_numbers = #tpu.dot_dimension_numbers<[2], [1], [1], [2], [0, 0, 0, 1, 1, 2], [0], [0]>} : vector<2x8x8xf32>, vector<2x8x8xf32>, vector<2x8x8xf32> -> vector<2x8x8xf32>
    "tpu.trace_stop"() : () -> ()
    %332 = vector.extract_strided_slice %299 {offsets = [0, 0, 16], sizes = [2, 8, 8], strides = [1, 1, 1]} : vector<2x8x32xf32> to vector<2x8x8xf32>
    %333 = vector.extract_strided_slice %300 {offsets = [0, 0, 16], sizes = [2, 8, 8], strides = [1, 1, 1]} : vector<2x8x32xf32> to vector<2x8x8xf32>
    "tpu.trace_start"() <{level = 10 : i32, message = "btd,bsd->bts"}> : () -> ()
    %cst_118 = arith.constant dense<0.000000e+00> : vector<2x8x8xf32>
    %334 = tpu.matmul %332, %333, %cst_118 {dimension_numbers = #tpu.dot_dimension_numbers<[2], [2], [1], [1], [0, 0, 0, 1, 1, 1], [0], [0]>} : vector<2x8x8xf32>, vector<2x8x8xf32>, vector<2x8x8xf32> -> vector<2x8x8xf32>
    "tpu.trace_stop"() : () -> ()
    %cst_119 = arith.constant dense<0xFF800000> : vector<2x8xf32>
    %335 = vector.multi_reduction <maximumf>, %334, %cst_119 [2] : vector<2x8x8xf32> to vector<2x8xf32>
    %336 = vector.shape_cast %335 : vector<2x8xf32> to vector<2x8x1xf32>
    %337 = vector.broadcast %336 : vector<2x8x1xf32> to vector<2x8x8xf32>
    %338 = arith.subf %334, %337 : vector<2x8x8xf32>
    %339 = math.exp %338 : vector<2x8x8xf32>
    %cst_120 = arith.constant dense<0.000000e+00> : vector<2x8xf32>
    %340 = vector.multi_reduction <add>, %339, %cst_120 [2] : vector<2x8x8xf32> to vector<2x8xf32>
    %341 = vector.shape_cast %340 : vector<2x8xf32> to vector<2x8x1xf32>
    %342 = tpu.reciprocal %341 {approx = true} : vector<2x8x1xf32> -> vector<2x8x1xf32>
    %343 = vector.broadcast %342 : vector<2x8x1xf32> to vector<2x8x8xf32>
    %344 = arith.mulf %339, %343 : vector<2x8x8xf32>
    %345 = vector.extract_strided_slice %301 {offsets = [0, 0, 16], sizes = [2, 8, 8], strides = [1, 1, 1]} : vector<2x8x32xf32> to vector<2x8x8xf32>
    "tpu.trace_start"() <{level = 10 : i32, message = "bts,bsd->btd"}> : () -> ()
    %cst_121 = arith.constant dense<0.000000e+00> : vector<2x8x8xf32>
    %346 = tpu.matmul %344, %345, %cst_121 {dimension_numbers = #tpu.dot_dimension_numbers<[2], [1], [1], [2], [0, 0, 0, 1, 1, 2], [0], [0]>} : vector<2x8x8xf32>, vector<2x8x8xf32>, vector<2x8x8xf32> -> vector<2x8x8xf32>
    "tpu.trace_stop"() : () -> ()
    %347 = vector.extract_strided_slice %299 {offsets = [0, 0, 24], sizes = [2, 8, 8], strides = [1, 1, 1]} : vector<2x8x32xf32> to vector<2x8x8xf32>
    %348 = vector.extract_strided_slice %300 {offsets = [0, 0, 24], sizes = [2, 8, 8], strides = [1, 1, 1]} : vector<2x8x32xf32> to vector<2x8x8xf32>
    "tpu.trace_start"() <{level = 10 : i32, message = "btd,bsd->bts"}> : () -> ()
    %cst_122 = arith.constant dense<0.000000e+00> : vector<2x8x8xf32>
    %349 = tpu.matmul %347, %348, %cst_122 {dimension_numbers = #tpu.dot_dimension_numbers<[2], [2], [1], [1], [0, 0, 0, 1, 1, 1], [0], [0]>} : vector<2x8x8xf32>, vector<2x8x8xf32>, vector<2x8x8xf32> -> vector<2x8x8xf32>
    "tpu.trace_stop"() : () -> ()
    %cst_123 = arith.constant dense<0xFF800000> : vector<2x8xf32>
    %350 = vector.multi_reduction <maximumf>, %349, %cst_123 [2] : vector<2x8x8xf32> to vector<2x8xf32>
    %351 = vector.shape_cast %350 : vector<2x8xf32> to vector<2x8x1xf32>
    %352 = vector.broadcast %351 : vector<2x8x1xf32> to vector<2x8x8xf32>
    %353 = arith.subf %349, %352 : vector<2x8x8xf32>
    %354 = math.exp %353 : vector<2x8x8xf32>
    %cst_124 = arith.constant dense<0.000000e+00> : vector<2x8xf32>
    %355 = vector.multi_reduction <add>, %354, %cst_124 [2] : vector<2x8x8xf32> to vector<2x8xf32>
    %356 = vector.shape_cast %355 : vector<2x8xf32> to vector<2x8x1xf32>
    %357 = tpu.reciprocal %356 {approx = true} : vector<2x8x1xf32> -> vector<2x8x1xf32>
    %358 = vector.broadcast %357 : vector<2x8x1xf32> to vector<2x8x8xf32>
    %359 = arith.mulf %354, %358 : vector<2x8x8xf32>
    %360 = vector.extract_strided_slice %301 {offsets = [0, 0, 24], sizes = [2, 8, 8], strides = [1, 1, 1]} : vector<2x8x32xf32> to vector<2x8x8xf32>
    "tpu.trace_start"() <{level = 10 : i32, message = "bts,bsd->btd"}> : () -> ()
    %cst_125 = arith.constant dense<0.000000e+00> : vector<2x8x8xf32>
    %361 = tpu.matmul %359, %360, %cst_125 {dimension_numbers = #tpu.dot_dimension_numbers<[2], [1], [1], [2], [0, 0, 0, 1, 1, 2], [0], [0]>} : vector<2x8x8xf32>, vector<2x8x8xf32>, vector<2x8x8xf32> -> vector<2x8x8xf32>
    "tpu.trace_stop"() : () -> ()
    %362 = tpu.concatenate %316, %331, %346, %361 in 2 : vector<2x8x8xf32>, vector<2x8x8xf32>, vector<2x8x8xf32>, vector<2x8x8xf32> -> vector<2x8x32xf32>
    %363 = vector.shape_cast %362 : vector<2x8x32xf32> to vector<16x32xf32>
    %cst_126 = arith.constant dense<0.000000e+00> : vector<16x32xf32>
    %364 = tpu.matmul %363, %2, %cst_126 {dimension_numbers = #tpu.dot_dimension_numbers<[1], [0], [0], [1], [0, 0, 1, 1], [], []>} : vector<16x32xf32>, vector<32x32xf32>, vector<16x32xf32> -> vector<16x32xf32>
    %365 = vector.broadcast %3 : vector<1x32xf32> to vector<16x32xf32>
    %366 = arith.addf %364, %365 : vector<16x32xf32>
    %367 = arith.addf %283, %366 : vector<16x32xf32>
    %cst_127 = arith.constant dense<0.000000e+00> : vector<16xf32>
    %368 = vector.multi_reduction <add>, %367, %cst_127 [1] : vector<16x32xf32> to vector<16xf32>
    %369 = vector.shape_cast %368 : vector<16xf32> to vector<16x1xf32>
    %cst_128 = arith.constant 3.200000e+01 : f32
    %370 = vector.broadcast %cst_128 : f32 to vector<16x1xf32>
    %371 = arith.divf %369, %370 : vector<16x1xf32>
    %372 = vector.broadcast %371 : vector<16x1xf32> to vector<16x32xf32>
    %373 = arith.subf %367, %372 : vector<16x32xf32>
    %374 = arith.mulf %373, %373 : vector<16x32xf32>
    %cst_129 = arith.constant dense<0.000000e+00> : vector<16xf32>
    %375 = vector.multi_reduction <add>, %374, %cst_129 [1] : vector<16x32xf32> to vector<16xf32>
    %376 = vector.shape_cast %375 : vector<16xf32> to vector<16x1xf32>
    %cst_130 = arith.constant 3.200000e+01 : f32
    %377 = vector.broadcast %cst_130 : f32 to vector<16x1xf32>
    %378 = arith.divf %376, %377 : vector<16x1xf32>
    %379 = vector.broadcast %371 : vector<16x1xf32> to vector<16x32xf32>
    %380 = arith.subf %367, %379 : vector<16x32xf32>
    %cst_131 = arith.constant 9.99999974E-6 : f32
    %381 = vector.broadcast %cst_131 : f32 to vector<16x1xf32>
    %382 = arith.addf %378, %381 : vector<16x1xf32>
    %383 = math.rsqrt %382 : vector<16x1xf32>
    %384 = vector.broadcast %383 : vector<16x1xf32> to vector<16x32xf32>
    %385 = arith.mulf %380, %384 : vector<16x32xf32>
    %386 = vector.broadcast %12 : vector<1x32xf32> to vector<16x32xf32>
    %387 = arith.mulf %385, %386 : vector<16x32xf32>
    %388 = vector.broadcast %13 : vector<1x32xf32> to vector<16x32xf32>
    %389 = arith.addf %387, %388 : vector<16x32xf32>
    %390 = arith.addf %389, %31 : vector<16x32xf32>
    %391 = vector.extract_strided_slice %4 {offsets = [0, 0], sizes = [32, 32], strides = [1, 1]} : vector<32x96xf32> to vector<32x32xf32>
    %cst_132 = arith.constant dense<0.000000e+00> : vector<16x32xf32>
    %392 = tpu.matmul %390, %391, %cst_132 {dimension_numbers = #tpu.dot_dimension_numbers<[1], [0], [0], [1], [0, 0, 1, 1], [], []>} : vector<16x32xf32>, vector<32x32xf32>, vector<16x32xf32> -> vector<16x32xf32>
    %393 = vector.extract_strided_slice %5 {offsets = [0, 0], sizes = [1, 32], strides = [1, 1]} : vector<1x96xf32> to vector<1x32xf32>
    %394 = vector.broadcast %393 : vector<1x32xf32> to vector<16x32xf32>
    %395 = arith.addf %392, %394 : vector<16x32xf32>
    %cst_133 = arith.constant 0.353553385 : f32
    %396 = vector.broadcast %cst_133 : f32 to vector<16x32xf32>
    %397 = arith.mulf %395, %396 : vector<16x32xf32>
    %398 = vector.shape_cast %397 : vector<16x32xf32> to vector<2x8x32xf32>
    %399 = vector.shape_cast %42 : vector<32x32xf32> to vector<2x16x32xf32>
    %400 = vector.shape_cast %47 : vector<32x32xf32> to vector<2x16x32xf32>
    %401 = vector.extract_strided_slice %398 {offsets = [0, 0, 0], sizes = [2, 8, 8], strides = [1, 1, 1]} : vector<2x8x32xf32> to vector<2x8x8xf32>
    %402 = vector.extract_strided_slice %399 {offsets = [0, 0, 0], sizes = [2, 16, 8], strides = [1, 1, 1]} : vector<2x16x32xf32> to vector<2x16x8xf32>
    "tpu.trace_start"() <{level = 10 : i32, message = "btd,bsd->bts"}> : () -> ()
    %cst_134 = arith.constant dense<0.000000e+00> : vector<2x8x16xf32>
    %403 = tpu.matmul %401, %402, %cst_134 {dimension_numbers = #tpu.dot_dimension_numbers<[2], [2], [1], [1], [0, 0, 0, 1, 1, 1], [0], [0]>} : vector<2x8x8xf32>, vector<2x16x8xf32>, vector<2x8x16xf32> -> vector<2x8x16xf32>
    "tpu.trace_stop"() : () -> ()
    %cst_135 = arith.constant dense<0xFF800000> : vector<2x8xf32>
    %404 = vector.multi_reduction <maximumf>, %403, %cst_135 [2] : vector<2x8x16xf32> to vector<2x8xf32>
    %405 = vector.shape_cast %404 : vector<2x8xf32> to vector<2x8x1xf32>
    %406 = vector.broadcast %405 : vector<2x8x1xf32> to vector<2x8x16xf32>
    %407 = arith.subf %403, %406 : vector<2x8x16xf32>
    %408 = math.exp %407 : vector<2x8x16xf32>
    %cst_136 = arith.constant dense<0.000000e+00> : vector<2x8xf32>
    %409 = vector.multi_reduction <add>, %408, %cst_136 [2] : vector<2x8x16xf32> to vector<2x8xf32>
    %410 = vector.shape_cast %409 : vector<2x8xf32> to vector<2x8x1xf32>
    %411 = tpu.reciprocal %410 {approx = true} : vector<2x8x1xf32> -> vector<2x8x1xf32>
    %412 = vector.broadcast %411 : vector<2x8x1xf32> to vector<2x8x16xf32>
    %413 = arith.mulf %408, %412 : vector<2x8x16xf32>
    %414 = vector.extract_strided_slice %400 {offsets = [0, 0, 0], sizes = [2, 16, 8], strides = [1, 1, 1]} : vector<2x16x32xf32> to vector<2x16x8xf32>
    "tpu.trace_start"() <{level = 10 : i32, message = "bts,bsd->btd"}> : () -> ()
    %cst_137 = arith.constant dense<0.000000e+00> : vector<2x8x8xf32>
    %415 = tpu.matmul %413, %414, %cst_137 {dimension_numbers = #tpu.dot_dimension_numbers<[2], [1], [1], [2], [0, 0, 0, 1, 1, 2], [0], [0]>} : vector<2x8x16xf32>, vector<2x16x8xf32>, vector<2x8x8xf32> -> vector<2x8x8xf32>
    "tpu.trace_stop"() : () -> ()
    %416 = vector.extract_strided_slice %398 {offsets = [0, 0, 8], sizes = [2, 8, 8], strides = [1, 1, 1]} : vector<2x8x32xf32> to vector<2x8x8xf32>
    %417 = vector.extract_strided_slice %399 {offsets = [0, 0, 8], sizes = [2, 16, 8], strides = [1, 1, 1]} : vector<2x16x32xf32> to vector<2x16x8xf32>
    "tpu.trace_start"() <{level = 10 : i32, message = "btd,bsd->bts"}> : () -> ()
    %cst_138 = arith.constant dense<0.000000e+00> : vector<2x8x16xf32>
    %418 = tpu.matmul %416, %417, %cst_138 {dimension_numbers = #tpu.dot_dimension_numbers<[2], [2], [1], [1], [0, 0, 0, 1, 1, 1], [0], [0]>} : vector<2x8x8xf32>, vector<2x16x8xf32>, vector<2x8x16xf32> -> vector<2x8x16xf32>
    "tpu.trace_stop"() : () -> ()
    %cst_139 = arith.constant dense<0xFF800000> : vector<2x8xf32>
    %419 = vector.multi_reduction <maximumf>, %418, %cst_139 [2] : vector<2x8x16xf32> to vector<2x8xf32>
    %420 = vector.shape_cast %419 : vector<2x8xf32> to vector<2x8x1xf32>
    %421 = vector.broadcast %420 : vector<2x8x1xf32> to vector<2x8x16xf32>
    %422 = arith.subf %418, %421 : vector<2x8x16xf32>
    %423 = math.exp %422 : vector<2x8x16xf32>
    %cst_140 = arith.constant dense<0.000000e+00> : vector<2x8xf32>
    %424 = vector.multi_reduction <add>, %423, %cst_140 [2] : vector<2x8x16xf32> to vector<2x8xf32>
    %425 = vector.shape_cast %424 : vector<2x8xf32> to vector<2x8x1xf32>
    %426 = tpu.reciprocal %425 {approx = true} : vector<2x8x1xf32> -> vector<2x8x1xf32>
    %427 = vector.broadcast %426 : vector<2x8x1xf32> to vector<2x8x16xf32>
    %428 = arith.mulf %423, %427 : vector<2x8x16xf32>
    %429 = vector.extract_strided_slice %400 {offsets = [0, 0, 8], sizes = [2, 16, 8], strides = [1, 1, 1]} : vector<2x16x32xf32> to vector<2x16x8xf32>
    "tpu.trace_start"() <{level = 10 : i32, message = "bts,bsd->btd"}> : () -> ()
    %cst_141 = arith.constant dense<0.000000e+00> : vector<2x8x8xf32>
    %430 = tpu.matmul %428, %429, %cst_141 {dimension_numbers = #tpu.dot_dimension_numbers<[2], [1], [1], [2], [0, 0, 0, 1, 1, 2], [0], [0]>} : vector<2x8x16xf32>, vector<2x16x8xf32>, vector<2x8x8xf32> -> vector<2x8x8xf32>
    "tpu.trace_stop"() : () -> ()
    %431 = vector.extract_strided_slice %398 {offsets = [0, 0, 16], sizes = [2, 8, 8], strides = [1, 1, 1]} : vector<2x8x32xf32> to vector<2x8x8xf32>
    %432 = vector.extract_strided_slice %399 {offsets = [0, 0, 16], sizes = [2, 16, 8], strides = [1, 1, 1]} : vector<2x16x32xf32> to vector<2x16x8xf32>
    "tpu.trace_start"() <{level = 10 : i32, message = "btd,bsd->bts"}> : () -> ()
    %cst_142 = arith.constant dense<0.000000e+00> : vector<2x8x16xf32>
    %433 = tpu.matmul %431, %432, %cst_142 {dimension_numbers = #tpu.dot_dimension_numbers<[2], [2], [1], [1], [0, 0, 0, 1, 1, 1], [0], [0]>} : vector<2x8x8xf32>, vector<2x16x8xf32>, vector<2x8x16xf32> -> vector<2x8x16xf32>
    "tpu.trace_stop"() : () -> ()
    %cst_143 = arith.constant dense<0xFF800000> : vector<2x8xf32>
    %434 = vector.multi_reduction <maximumf>, %433, %cst_143 [2] : vector<2x8x16xf32> to vector<2x8xf32>
    %435 = vector.shape_cast %434 : vector<2x8xf32> to vector<2x8x1xf32>
    %436 = vector.broadcast %435 : vector<2x8x1xf32> to vector<2x8x16xf32>
    %437 = arith.subf %433, %436 : vector<2x8x16xf32>
    %438 = math.exp %437 : vector<2x8x16xf32>
    %cst_144 = arith.constant dense<0.000000e+00> : vector<2x8xf32>
    %439 = vector.multi_reduction <add>, %438, %cst_144 [2] : vector<2x8x16xf32> to vector<2x8xf32>
    %440 = vector.shape_cast %439 : vector<2x8xf32> to vector<2x8x1xf32>
    %441 = tpu.reciprocal %440 {approx = true} : vector<2x8x1xf32> -> vector<2x8x1xf32>
    %442 = vector.broadcast %441 : vector<2x8x1xf32> to vector<2x8x16xf32>
    %443 = arith.mulf %438, %442 : vector<2x8x16xf32>
    %444 = vector.extract_strided_slice %400 {offsets = [0, 0, 16], sizes = [2, 16, 8], strides = [1, 1, 1]} : vector<2x16x32xf32> to vector<2x16x8xf32>
    "tpu.trace_start"() <{level = 10 : i32, message = "bts,bsd->btd"}> : () -> ()
    %cst_145 = arith.constant dense<0.000000e+00> : vector<2x8x8xf32>
    %445 = tpu.matmul %443, %444, %cst_145 {dimension_numbers = #tpu.dot_dimension_numbers<[2], [1], [1], [2], [0, 0, 0, 1, 1, 2], [0], [0]>} : vector<2x8x16xf32>, vector<2x16x8xf32>, vector<2x8x8xf32> -> vector<2x8x8xf32>
    "tpu.trace_stop"() : () -> ()
    %446 = vector.extract_strided_slice %398 {offsets = [0, 0, 24], sizes = [2, 8, 8], strides = [1, 1, 1]} : vector<2x8x32xf32> to vector<2x8x8xf32>
    %447 = vector.extract_strided_slice %399 {offsets = [0, 0, 24], sizes = [2, 16, 8], strides = [1, 1, 1]} : vector<2x16x32xf32> to vector<2x16x8xf32>
    "tpu.trace_start"() <{level = 10 : i32, message = "btd,bsd->bts"}> : () -> ()
    %cst_146 = arith.constant dense<0.000000e+00> : vector<2x8x16xf32>
    %448 = tpu.matmul %446, %447, %cst_146 {dimension_numbers = #tpu.dot_dimension_numbers<[2], [2], [1], [1], [0, 0, 0, 1, 1, 1], [0], [0]>} : vector<2x8x8xf32>, vector<2x16x8xf32>, vector<2x8x16xf32> -> vector<2x8x16xf32>
    "tpu.trace_stop"() : () -> ()
    %cst_147 = arith.constant dense<0xFF800000> : vector<2x8xf32>
    %449 = vector.multi_reduction <maximumf>, %448, %cst_147 [2] : vector<2x8x16xf32> to vector<2x8xf32>
    %450 = vector.shape_cast %449 : vector<2x8xf32> to vector<2x8x1xf32>
    %451 = vector.broadcast %450 : vector<2x8x1xf32> to vector<2x8x16xf32>
    %452 = arith.subf %448, %451 : vector<2x8x16xf32>
    %453 = math.exp %452 : vector<2x8x16xf32>
    %cst_148 = arith.constant dense<0.000000e+00> : vector<2x8xf32>
    %454 = vector.multi_reduction <add>, %453, %cst_148 [2] : vector<2x8x16xf32> to vector<2x8xf32>
    %455 = vector.shape_cast %454 : vector<2x8xf32> to vector<2x8x1xf32>
    %456 = tpu.reciprocal %455 {approx = true} : vector<2x8x1xf32> -> vector<2x8x1xf32>
    %457 = vector.broadcast %456 : vector<2x8x1xf32> to vector<2x8x16xf32>
    %458 = arith.mulf %453, %457 : vector<2x8x16xf32>
    %459 = vector.extract_strided_slice %400 {offsets = [0, 0, 24], sizes = [2, 16, 8], strides = [1, 1, 1]} : vector<2x16x32xf32> to vector<2x16x8xf32>
    "tpu.trace_start"() <{level = 10 : i32, message = "bts,bsd->btd"}> : () -> ()
    %cst_149 = arith.constant dense<0.000000e+00> : vector<2x8x8xf32>
    %460 = tpu.matmul %458, %459, %cst_149 {dimension_numbers = #tpu.dot_dimension_numbers<[2], [1], [1], [2], [0, 0, 0, 1, 1, 2], [0], [0]>} : vector<2x8x16xf32>, vector<2x16x8xf32>, vector<2x8x8xf32> -> vector<2x8x8xf32>
    "tpu.trace_stop"() : () -> ()
    %461 = tpu.concatenate %415, %430, %445, %460 in 2 : vector<2x8x8xf32>, vector<2x8x8xf32>, vector<2x8x8xf32>, vector<2x8x8xf32> -> vector<2x8x32xf32>
    %462 = vector.shape_cast %461 : vector<2x8x32xf32> to vector<16x32xf32>
    %cst_150 = arith.constant dense<0.000000e+00> : vector<16x32xf32>
    %463 = tpu.matmul %462, %6, %cst_150 {dimension_numbers = #tpu.dot_dimension_numbers<[1], [0], [0], [1], [0, 0, 1, 1], [], []>} : vector<16x32xf32>, vector<32x32xf32>, vector<16x32xf32> -> vector<16x32xf32>
    %464 = vector.broadcast %7 : vector<1x32xf32> to vector<16x32xf32>
    %465 = arith.addf %463, %464 : vector<16x32xf32>
    %466 = arith.addf %389, %465 : vector<16x32xf32>
    %cst_151 = arith.constant dense<0.000000e+00> : vector<16xf32>
    %467 = vector.multi_reduction <add>, %466, %cst_151 [1] : vector<16x32xf32> to vector<16xf32>
    %468 = vector.shape_cast %467 : vector<16xf32> to vector<16x1xf32>
    %cst_152 = arith.constant 3.200000e+01 : f32
    %469 = vector.broadcast %cst_152 : f32 to vector<16x1xf32>
    %470 = arith.divf %468, %469 : vector<16x1xf32>
    %471 = vector.broadcast %470 : vector<16x1xf32> to vector<16x32xf32>
    %472 = arith.subf %466, %471 : vector<16x32xf32>
    %473 = arith.mulf %472, %472 : vector<16x32xf32>
    %cst_153 = arith.constant dense<0.000000e+00> : vector<16xf32>
    %474 = vector.multi_reduction <add>, %473, %cst_153 [1] : vector<16x32xf32> to vector<16xf32>
    %475 = vector.shape_cast %474 : vector<16xf32> to vector<16x1xf32>
    %cst_154 = arith.constant 3.200000e+01 : f32
    %476 = vector.broadcast %cst_154 : f32 to vector<16x1xf32>
    %477 = arith.divf %475, %476 : vector<16x1xf32>
    %478 = vector.broadcast %470 : vector<16x1xf32> to vector<16x32xf32>
    %479 = arith.subf %466, %478 : vector<16x32xf32>
    %cst_155 = arith.constant 9.99999974E-6 : f32
    %480 = vector.broadcast %cst_155 : f32 to vector<16x1xf32>
    %481 = arith.addf %477, %480 : vector<16x1xf32>
    %482 = math.rsqrt %481 : vector<16x1xf32>
    %483 = vector.broadcast %482 : vector<16x1xf32> to vector<16x32xf32>
    %484 = arith.mulf %479, %483 : vector<16x32xf32>
    %485 = vector.broadcast %14 : vector<1x32xf32> to vector<16x32xf32>
    %486 = arith.mulf %484, %485 : vector<16x32xf32>
    %487 = vector.broadcast %15 : vector<1x32xf32> to vector<16x32xf32>
    %488 = arith.addf %486, %487 : vector<16x32xf32>
    %cst_156 = arith.constant dense<0.000000e+00> : vector<16x64xf32>
    %489 = tpu.matmul %488, %8, %cst_156 {dimension_numbers = #tpu.dot_dimension_numbers<[1], [0], [0], [1], [0, 0, 1, 1], [], []>} : vector<16x32xf32>, vector<32x64xf32>, vector<16x64xf32> -> vector<16x64xf32>
    %490 = vector.broadcast %9 : vector<1x64xf32> to vector<16x64xf32>
    %491 = arith.addf %489, %490 : vector<16x64xf32>
    %cst_157 = arith.constant 0.000000e+00 : f32
    %492 = vector.broadcast %cst_157 : f32 to vector<16x64xf32>
    %493 = arith.maximumf %491, %492 : vector<16x64xf32>
    %cst_158 = arith.constant dense<0.000000e+00> : vector<16x32xf32>
    %494 = tpu.matmul %493, %10, %cst_158 {dimension_numbers = #tpu.dot_dimension_numbers<[1], [0], [0], [1], [0, 0, 1, 1], [], []>} : vector<16x64xf32>, vector<64x32xf32>, vector<16x32xf32> -> vector<16x32xf32>
    %495 = vector.broadcast %11 : vector<1x32xf32> to vector<16x32xf32>
    %496 = arith.addf %494, %495 : vector<16x32xf32>
    %497 = arith.addf %488, %496 : vector<16x32xf32>
    %cst_159 = arith.constant dense<0.000000e+00> : vector<16xf32>
    %498 = vector.multi_reduction <add>, %497, %cst_159 [1] : vector<16x32xf32> to vector<16xf32>
    %499 = vector.shape_cast %498 : vector<16xf32> to vector<16x1xf32>
    %cst_160 = arith.constant 3.200000e+01 : f32
    %500 = vector.broadcast %cst_160 : f32 to vector<16x1xf32>
    %501 = arith.divf %499, %500 : vector<16x1xf32>
    %502 = vector.broadcast %501 : vector<16x1xf32> to vector<16x32xf32>
    %503 = arith.subf %497, %502 : vector<16x32xf32>
    %504 = arith.mulf %503, %503 : vector<16x32xf32>
    %cst_161 = arith.constant dense<0.000000e+00> : vector<16xf32>
    %505 = vector.multi_reduction <add>, %504, %cst_161 [1] : vector<16x32xf32> to vector<16xf32>
    %506 = vector.shape_cast %505 : vector<16xf32> to vector<16x1xf32>
    %cst_162 = arith.constant 3.200000e+01 : f32
    %507 = vector.broadcast %cst_162 : f32 to vector<16x1xf32>
    %508 = arith.divf %506, %507 : vector<16x1xf32>
    %509 = vector.broadcast %501 : vector<16x1xf32> to vector<16x32xf32>
    %510 = arith.subf %497, %509 : vector<16x32xf32>
    %cst_163 = arith.constant 9.99999974E-6 : f32
    %511 = vector.broadcast %cst_163 : f32 to vector<16x1xf32>
    %512 = arith.addf %508, %511 : vector<16x1xf32>
    %513 = math.rsqrt %512 : vector<16x1xf32>
    %514 = vector.broadcast %513 : vector<16x1xf32> to vector<16x32xf32>
    %515 = arith.mulf %510, %514 : vector<16x32xf32>
    %516 = vector.broadcast %16 : vector<1x32xf32> to vector<16x32xf32>
    %517 = arith.mulf %515, %516 : vector<16x32xf32>
    %518 = vector.broadcast %17 : vector<1x32xf32> to vector<16x32xf32>
    %519 = arith.addf %517, %518 : vector<16x32xf32>
    %cst_164 = arith.constant dense<0.000000e+00> : vector<16xf32>
    %520 = vector.multi_reduction <add>, %519, %cst_164 [1] : vector<16x32xf32> to vector<16xf32>
    %521 = vector.shape_cast %520 : vector<16xf32> to vector<16x1xf32>
    %cst_165 = arith.constant 3.200000e+01 : f32
    %522 = vector.broadcast %cst_165 : f32 to vector<16x1xf32>
    %523 = arith.divf %521, %522 : vector<16x1xf32>
    %524 = vector.broadcast %523 : vector<16x1xf32> to vector<16x32xf32>
    %525 = arith.subf %519, %524 : vector<16x32xf32>
    %526 = arith.mulf %525, %525 : vector<16x32xf32>
    %cst_166 = arith.constant dense<0.000000e+00> : vector<16xf32>
    %527 = vector.multi_reduction <add>, %526, %cst_166 [1] : vector<16x32xf32> to vector<16xf32>
    %528 = vector.shape_cast %527 : vector<16xf32> to vector<16x1xf32>
    %cst_167 = arith.constant 3.200000e+01 : f32
    %529 = vector.broadcast %cst_167 : f32 to vector<16x1xf32>
    %530 = arith.divf %528, %529 : vector<16x1xf32>
    %531 = vector.broadcast %523 : vector<16x1xf32> to vector<16x32xf32>
    %532 = arith.subf %519, %531 : vector<16x32xf32>
    %cst_168 = arith.constant 9.99999974E-6 : f32
    %533 = vector.broadcast %cst_168 : f32 to vector<16x1xf32>
    %534 = arith.addf %530, %533 : vector<16x1xf32>
    %535 = math.rsqrt %534 : vector<16x1xf32>
    %536 = vector.broadcast %535 : vector<16x1xf32> to vector<16x32xf32>
    %537 = arith.mulf %532, %536 : vector<16x32xf32>
    %538 = vector.broadcast %18 : vector<1x32xf32> to vector<16x32xf32>
    %539 = arith.mulf %537, %538 : vector<16x32xf32>
    %540 = vector.broadcast %19 : vector<1x32xf32> to vector<16x32xf32>
    %541 = arith.addf %539, %540 : vector<16x32xf32>
    %542 = vector.extract_strided_slice %541 {offsets = [0, 0], sizes = [8, 32], strides = [1, 1]} : vector<16x32xf32> to vector<8x32xf32>
    %543 = vector.extract_strided_slice %541 {offsets = [8, 0], sizes = [8, 32], strides = [1, 1]} : vector<16x32xf32> to vector<8x32xf32>
    %544 = tpu.concatenate %542, %543 in 1 : vector<8x32xf32>, vector<8x32xf32> -> vector<8x64xf32>
    %c0_169 = arith.constant 0 : index
    %c0_170 = arith.constant 0 : index
    %545 = vector.load %arg25[%c0_169, %c0_170] : memref<8x64xf32, #tpu.memory_space<vmem>>, vector<8x64xf32>
    tpu.vector_store %arg25[%c0_169, %c0_170], %544 {strides = array<i32>} : memref<8x64xf32, #tpu.memory_space<vmem>>, vector<8x64xf32>,
    return
  }
  func.func @transform_0(%arg0: i32) -> (i32, i32) {
    %c0_i32 = arith.constant 0 : i32
    %c0_i32_0 = arith.constant 0 : i32
    %c0_i32_1 = arith.constant 0 : i32
    return %c0_i32, %c0_i32_0 : i32, i32
  }
  func.func @transform_1(%arg0: i32) -> (i32, i32) {
    %c0_i32 = arith.constant 0 : i32
    %c0_i32_0 = arith.constant 0 : i32
    %c0_i32_1 = arith.constant 0 : i32
    return %c0_i32, %c0_i32_0 : i32, i32
  }
  func.func @transform_2(%arg0: i32) -> (i32, i32) {
    %c0_i32 = arith.constant 0 : i32
    %c0_i32_0 = arith.constant 0 : i32
    %c0_i32_1 = arith.constant 0 : i32
    return %c0_i32, %c0_i32_0 : i32, i32
  }
  func.func @transform_3(%arg0: i32) -> (i32, i32) {
    %c0_i32 = arith.constant 0 : i32
    %c0_i32_0 = arith.constant 0 : i32
    %c0_i32_1 = arith.constant 0 : i32
    return %c0_i32, %c0_i32_0 : i32, i32
  }
  func.func @transform_4(%arg0: i32) -> (i32, i32) {
    %c0_i32 = arith.constant 0 : i32
    %c0_i32_0 = arith.constant 0 : i32
    %c0_i32_1 = arith.constant 0 : i32
    return %c0_i32, %c0_i32_0 : i32, i32
  }
  func.func @transform_5(%arg0: i32) -> (i32, i32) {
    %c0_i32 = arith.constant 0 : i32
    %c0_i32_0 = arith.constant 0 : i32
    %c0_i32_1 = arith.constant 0 : i32
    return %c0_i32, %c0_i32_0 : i32, i32
  }
  func.func @transform_6(%arg0: i32) -> (i32, i32) {
    %c0_i32 = arith.constant 0 : i32
    %c0_i32_0 = arith.constant 0 : i32
    %c0_i32_1 = arith.constant 0 : i32
    return %c0_i32, %c0_i32_0 : i32, i32
  }
  func.func @transform_7(%arg0: i32) -> (i32, i32) {
    %c0_i32 = arith.constant 0 : i32
    %c0_i32_0 = arith.constant 0 : i32
    %c0_i32_1 = arith.constant 0 : i32
    return %c0_i32, %c0_i32_0 : i32, i32
  }
  func.func @transform_8(%arg0: i32) -> (i32, i32) {
    %c0_i32 = arith.constant 0 : i32
    %c0_i32_0 = arith.constant 0 : i32
    %c0_i32_1 = arith.constant 0 : i32
    return %c0_i32, %c0_i32_0 : i32, i32
  }
  func.func @transform_9(%arg0: i32) -> (i32, i32) {
    %c0_i32 = arith.constant 0 : i32
    %c0_i32_0 = arith.constant 0 : i32
    %c0_i32_1 = arith.constant 0 : i32
    return %c0_i32, %c0_i32_0 : i32, i32
  }
  func.func @transform_10(%arg0: i32) -> (i32, i32) {
    %c0_i32 = arith.constant 0 : i32
    %c0_i32_0 = arith.constant 0 : i32
    %c0_i32_1 = arith.constant 0 : i32
    return %c0_i32, %c0_i32_0 : i32, i32
  }
  func.func @transform_11(%arg0: i32) -> (i32, i32) {
    %c0_i32 = arith.constant 0 : i32
    %c0_i32_0 = arith.constant 0 : i32
    %c0_i32_1 = arith.constant 0 : i32
    return %c0_i32, %c0_i32_0 : i32, i32
  }
  func.func @transform_12(%arg0: i32) -> (i32, i32) {
    %c0_i32 = arith.constant 0 : i32
    %c0_i32_0 = arith.constant 0 : i32
    %c0_i32_1 = arith.constant 0 : i32
    return %c0_i32, %c0_i32_0 : i32, i32
  }
  func.func @transform_13(%arg0: i32) -> (i32, i32) {
    %c0_i32 = arith.constant 0 : i32
    %c0_i32_0 = arith.constant 0 : i32
    %c0_i32_1 = arith.constant 0 : i32
    return %c0_i32, %c0_i32_0 : i32, i32
  }
  func.func @transform_14(%arg0: i32) -> (i32, i32) {
    %c0_i32 = arith.constant 0 : i32
    %c0_i32_0 = arith.constant 0 : i32
    %c0_i32_1 = arith.constant 0 : i32
    return %c0_i32, %c0_i32_0 : i32, i32
  }
  func.func @transform_15(%arg0: i32) -> (i32, i32) {
    %c0_i32 = arith.constant 0 : i32
    %c0_i32_0 = arith.constant 0 : i32
    %c0_i32_1 = arith.constant 0 : i32
    return %c0_i32, %c0_i32_0 : i32, i32
  }
  func.func @transform_16(%arg0: i32) -> (i32, i32) {
    %c0_i32 = arith.constant 0 : i32
    %c0_i32_0 = arith.constant 0 : i32
    %c0_i32_1 = arith.constant 0 : i32
    return %c0_i32, %c0_i32_0 : i32, i32
  }
  func.func @transform_17(%arg0: i32) -> (i32, i32) {
    %c0_i32 = arith.constant 0 : i32
    %c0_i32_0 = arith.constant 0 : i32
    %c0_i32_1 = arith.constant 0 : i32
    return %c0_i32, %c0_i32_0 : i32, i32
  }
  func.func @transform_18(%arg0: i32) -> (i32, i32) {
    %c0_i32 = arith.constant 0 : i32
    %c0_i32_0 = arith.constant 0 : i32
    %c0_i32_1 = arith.constant 0 : i32
    return %c0_i32, %c0_i32_0 : i32, i32
  }
  func.func @transform_19(%arg0: i32) -> (i32, i32) {
    %c0_i32 = arith.constant 0 : i32
    %c0_i32_0 = arith.constant 0 : i32
    %c0_i32_1 = arith.constant 0 : i32
    return %c0_i32, %c0_i32_0 : i32, i32
  }
  func.func @transform_20(%arg0: i32) -> (i32, i32) {
    %c0_i32 = arith.constant 0 : i32
    %c0_i32_0 = arith.constant 0 : i32
    %c0_i32_1 = arith.constant 0 : i32
    return %c0_i32, %c0_i32_0 : i32, i32
  }
  func.func @transform_21(%arg0: i32) -> (i32, i32) {
    %c0_i32 = arith.constant 0 : i32
    %c0_i32_0 = arith.constant 0 : i32
    %c0_i32_1 = arith.constant 0 : i32
    return %c0_i32, %c0_i32_0 : i32, i32
  }
  func.func @transform_22(%arg0: i32) -> (i32, i32) {
    %c0_i32 = arith.constant 0 : i32
    %c0_i32_0 = arith.constant 0 : i32
    %c0_i32_1 = arith.constant 0 : i32
    return %c0_i32, %c0_i32_0 : i32, i32
  }
  func.func @transform_23(%arg0: i32) -> (i32, i32) {
    %c0_i32 = arith.constant 0 : i32
    %c0_i32_0 = arith.constant 0 : i32
    %c0_i32_1 = arith.constant 0 : i32
    return %c0_i32, %c0_i32_0 : i32, i32
  }
  func.func @transform_24(%arg0: i32) -> (i32, i32) {
    %c0_i32 = arith.constant 0 : i32
    %c0_i32_0 = arith.constant 0 : i32
    %c0_i32_1 = arith.constant 0 : i32
    return %c0_i32, %c0_i32_0 : i32, i32
  }
}

</mosaic_0001>

<llo_original>
// kernel: transformer_decoder_forward.1
$region0: #{transformer_decoder_forward.1}
  #allocation0 [shape = 'u32[]', space=smem, size = 0x4, offset = 0x4, fixed_abs, tag = 'smem constant byte address 0x4 - core index']
  #allocation1 [shape = 'u32[72,128]{1,0:T(1,128)}', space=vmem, size = 0x9000, scoped, tag = 'internal scratch']
  %s0 = inlined_call_operand.vmem [shape: f32[8,64], index: 0, kind: input, shape index: {}]
  %s1 = inlined_call_operand.vmem [shape: f32[16,64], index: 1, kind: input, shape index: {}]
  %s2 = inlined_call_operand.vmem [shape: f32[8,64], index: 2, kind: input, shape index: {}]
  %s3 = inlined_call_operand.vmem [shape: f32[16,64], index: 3, kind: input, shape index: {}]
  %s4 = inlined_call_operand.vmem [shape: f32[32,96], index: 4, kind: input, shape index: {}]
  %s5 = inlined_call_operand.vmem [shape: f32[1,96], index: 5, kind: input, shape index: {}]
  %s6 = inlined_call_operand.vmem [shape: f32[32,32], index: 6, kind: input, shape index: {}]
  %s7 = inlined_call_operand.vmem [shape: f32[1,32], index: 7, kind: input, shape index: {}]
  %s8 = inlined_call_operand.vmem [shape: f32[32,96], index: 8, kind: input, shape index: {}]
  %s9 = inlined_call_operand.vmem [shape: f32[1,96], index: 9, kind: input, shape index: {}]
  %s10 = inlined_call_operand.vmem [shape: f32[32,32], index: 10, kind: input, shape index: {}]
  %s11 = inlined_call_operand.vmem [shape: f32[1,32], index: 11, kind: input, shape index: {}]
  %s12 = inlined_call_operand.hbm [shape: f32[32,64], index: 12, kind: input, shape index: {}]
  %s13 = inlined_call_operand.vmem [shape: f32[1,64], index: 13, kind: input, shape index: {}]
  %s14 = inlined_call_operand.vmem [shape: f32[64,32], index: 14, kind: input, shape index: {}]
  %s15 = inlined_call_operand.vmem [shape: f32[1,32], index: 15, kind: input, shape index: {}]
  %s16 = inlined_call_operand.vmem [shape: f32[1,32], index: 16, kind: input, shape index: {}]
  %s17 = inlined_call_operand.vmem [shape: f32[1,32], index: 17, kind: input, shape index: {}]
  %s18 = inlined_call_operand.vmem [shape: f32[1,32], index: 18, kind: input, shape index: {}]
  %s19 = inlined_call_operand.vmem [shape: f32[1,32], index: 19, kind: input, shape index: {}]
  %s20 = inlined_call_operand.vmem [shape: f32[1,32], index: 20, kind: input, shape index: {}]
  %s21 = inlined_call_operand.hbm [shape: f32[1,32], index: 21, kind: input, shape index: {}]
  %s22 = inlined_call_operand.vmem [shape: f32[1,32], index: 22, kind: input, shape index: {}]
  %s23 = inlined_call_operand.vmem [shape: f32[1,32], index: 23, kind: input, shape index: {}]
  %s24 = inlined_call_operand.vmem [shape: f32[8,64], index: 24, kind: output, shape index: {}]
  %s25 = sld [smem:[#allocation0]]
  $region114: #{transformer_decoder_forward.1} parent=0
    _
  %s27 = ssub.s32 1, %s25
  %s28 = scalar_select 0, %s27, %s25
  $region1: #{transformer_decoder_forward.1} parent=0
    #allocation2 [shape = 'u8[16384]{0}', space=vmem, size = 0x4000, scoped, tag = 'input window, operand 12, single buffered']
    #allocation3 [shape = 's32[1]{0}', space=sflag, size = 0x4, scoped, tag = 'scoped memory for transformer_decoder_forward.1']
    #allocation4 [shape = 'u8[512]{0}', space=vmem, size = 0x400, scoped, tag = 'input window, operand 21, single buffered']
    #allocation5 [shape = 's32[1]{0}', space=sflag, size = 0x4, scoped, tag = 'scoped memory for transformer_decoder_forward.1']
    %29 = vsyncpa [#allocation3], 0
    %30 = vsyncpa [#allocation5], 0
    // Predicated region
    $region2: #{transformer_decoder_forward.1} parent=1 // pred_check
      _
    $region3: #{transformer_decoder_forward.1} parent=1 // pred_check_branch
      %32 = sbr.rel (0) target = $region5
    $region4: #{transformer_decoder_forward.1} parent=1 // pred_region
      _
    $region5: #{transformer_decoder_forward.1} parent=1 // pred_fallthru
      _
    // Predicated region
    $region6: #{transformer_decoder_forward.1} parent=1 // pred_check
      _
    $region7: #{transformer_decoder_forward.1} parent=1 // pred_check_branch
      %34 = sbr.rel (0) target = $region9
    $region8: #{transformer_decoder_forward.1} parent=1 // pred_region
      _
    $region9: #{transformer_decoder_forward.1} parent=1 // pred_fallthru
      _
    // Predicated region
    $region10: #{transformer_decoder_forward.1} parent=1 // pred_check
      _
    $region11: #{transformer_decoder_forward.1} parent=1 // pred_check_branch
      %36 = sbr.rel (0) target = $region13
    $region12: #{transformer_decoder_forward.1} parent=1 // pred_region
      _
    $region13: #{transformer_decoder_forward.1} parent=1 // pred_fallthru
      _
    // Predicated region
    $region14: #{transformer_decoder_forward.1} parent=1 // pred_check
      _
    $region15: #{transformer_decoder_forward.1} parent=1 // pred_check_branch
      %38 = sbr.rel (0) target = $region17
    $region16: #{transformer_decoder_forward.1} parent=1 // pred_region
      _
    $region17: #{transformer_decoder_forward.1} parent=1 // pred_fallthru
      _
    // Predicated region
    $region18: #{transformer_decoder_forward.1} parent=1 // pred_check
      _
    $region19: #{transformer_decoder_forward.1} parent=1 // pred_check_branch
      %40 = sbr.rel (0) target = $region21
    $region20: #{transformer_decoder_forward.1} parent=1 // pred_region
      _
    $region21: #{transformer_decoder_forward.1} parent=1 // pred_fallthru
      _
    // Predicated region
    $region22: #{transformer_decoder_forward.1} parent=1 // pred_check
      _
    $region23: #{transformer_decoder_forward.1} parent=1 // pred_check_branch
      %42 = sbr.rel (0) target = $region25
    $region24: #{transformer_decoder_forward.1} parent=1 // pred_region
      _
    $region25: #{transformer_decoder_forward.1} parent=1 // pred_fallthru
      _
    // Predicated region
    $region26: #{transformer_decoder_forward.1} parent=1 // pred_check
      _
    $region27: #{transformer_decoder_forward.1} parent=1 // pred_check_branch
      %44 = sbr.rel (0) target = $region29
    $region28: #{transformer_decoder_forward.1} parent=1 // pred_region
      _
    $region29: #{transformer_decoder_forward.1} parent=1 // pred_fallthru
      _
    // Predicated region
    $region30: #{transformer_decoder_forward.1} parent=1 // pred_check
      _
    $region31: #{transformer_decoder_forward.1} parent=1 // pred_check_branch
      %46 = sbr.rel (0) target = $region33
    $region32: #{transformer_decoder_forward.1} parent=1 // pred_region
      _
    $region33: #{transformer_decoder_forward.1} parent=1 // pred_fallthru
      _
    // Predicated region
    $region34: #{transformer_decoder_forward.1} parent=1 // pred_check
      _
    $region35: #{transformer_decoder_forward.1} parent=1 // pred_check_branch
      %48 = sbr.rel (0) target = $region37
    $region36: #{transformer_decoder_forward.1} parent=1 // pred_region
      _
    $region37: #{transformer_decoder_forward.1} parent=1 // pred_fallthru
      _
    // Predicated region
    $region38: #{transformer_decoder_forward.1} parent=1 // pred_check
      _
    $region39: #{transformer_decoder_forward.1} parent=1 // pred_check_branch
      %50 = sbr.rel (0) target = $region41
    $region40: #{transformer_decoder_forward.1} parent=1 // pred_region
      _
    $region41: #{transformer_decoder_forward.1} parent=1 // pred_fallthru
      _
    // Predicated region
    $region42: #{transformer_decoder_forward.1} parent=1 // pred_check
      _
    $region43: #{transformer_decoder_forward.1} parent=1 // pred_check_branch
      %52 = sbr.rel (0) target = $region45
    $region44: #{transformer_decoder_forward.1} parent=1 // pred_region
      _
    $region45: #{transformer_decoder_forward.1} parent=1 // pred_fallthru
      _
    // Predicated region
    $region46: #{transformer_decoder_forward.1} parent=1 // pred_check
      _
    $region47: #{transformer_decoder_forward.1} parent=1 // pred_check_branch
      %54 = sbr.rel (0) target = $region49
    $region48: #{transformer_decoder_forward.1} parent=1 // pred_region
      _
    $region49: #{transformer_decoder_forward.1} parent=1 // pred_fallthru
      _
    // Predicated region
    $region50: #{transformer_decoder_forward.1} parent=1 // pred_check
      _
    $region51: #{transformer_decoder_forward.1} parent=1 // pred_check_branch
      %56 = sbr.rel (0) target = $region53
    $region52: #{transformer_decoder_forward.1} parent=1 // pred_region
      %58 = vsyncadd [#allocation3], 0
      %s59 = sshll.u32 %s12, 4
      %s60 = int_to_ptr.hbm [resolvable:$true] %s59
      %s61 = sshll.u32 [#allocation2], 4
      %s62 = int_to_ptr.vmem [resolvable:$true] %s61
      %67 = dma.hbm_to_vmem [thread:$0]  %s60, 512, %s62, [#allocation3], 128, 128, 8
    $region53: #{transformer_decoder_forward.1} parent=1 // pred_fallthru
      _
    // Predicated region
    $region54: #{transformer_decoder_forward.1} parent=1 // pred_check
      _
    $region55: #{transformer_decoder_forward.1} parent=1 // pred_check_branch
      %69 = sbr.rel (0) target = $region57
    $region56: #{transformer_decoder_forward.1} parent=1 // pred_region
      _
    $region57: #{transformer_decoder_forward.1} parent=1 // pred_fallthru
      _
    // Predicated region
    $region58: #{transformer_decoder_forward.1} parent=1 // pred_check
      _
    $region59: #{transformer_decoder_forward.1} parent=1 // pred_check_branch
      %71 = sbr.rel (0) target = $region61
    $region60: #{transformer_decoder_forward.1} parent=1 // pred_region
      _
    $region61: #{transformer_decoder_forward.1} parent=1 // pred_fallthru
      _
    // Predicated region
    $region62: #{transformer_decoder_forward.1} parent=1 // pred_check
      _
    $region63: #{transformer_decoder_forward.1} parent=1 // pred_check_branch
      %73 = sbr.rel (0) target = $region65
    $region64: #{transformer_decoder_forward.1} parent=1 // pred_region
      _
    $region65: #{transformer_decoder_forward.1} parent=1 // pred_fallthru
      _
    // Predicated region
    $region66: #{transformer_decoder_forward.1} parent=1 // pred_check
      _
    $region67: #{transformer_decoder_forward.1} parent=1 // pred_check_branch
      %75 = sbr.rel (0) target = $region69
    $region68: #{transformer_decoder_forward.1} parent=1 // pred_region
      _
    $region69: #{transformer_decoder_forward.1} parent=1 // pred_fallthru
      _
    // Predicated region
    $region70: #{transformer_decoder_forward.1} parent=1 // pred_check
      _
    $region71: #{transformer_decoder_forward.1} parent=1 // pred_check_branch
      %77 = sbr.rel (0) target = $region73
    $region72: #{transformer_decoder_forward.1} parent=1 // pred_region
      _
    $region73: #{transformer_decoder_forward.1} parent=1 // pred_fallthru
      _
    // Predicated region
    $region74: #{transformer_decoder_forward.1} parent=1 // pred_check
      _
    $region75: #{transformer_decoder_forward.1} parent=1 // pred_check_branch
      %79 = sbr.rel (0) target = $region77
    $region76: #{transformer_decoder_forward.1} parent=1 // pred_region
      _
    $region77: #{transformer_decoder_forward.1} parent=1 // pred_fallthru
      _
    // Predicated region
    $region78: #{transformer_decoder_forward.1} parent=1 // pred_check
      _
    $region79: #{transformer_decoder_forward.1} parent=1 // pred_check_branch
      %81 = sbr.rel (0) target = $region81
    $region80: #{transformer_decoder_forward.1} parent=1 // pred_region
      _
    $region81: #{transformer_decoder_forward.1} parent=1 // pred_fallthru
      _
    // Predicated region
    $region82: #{transformer_decoder_forward.1} parent=1 // pred_check
      _
    $region83: #{transformer_decoder_forward.1} parent=1 // pred_check_branch
      %83 = sbr.rel (0) target = $region85
    $region84: #{transformer_decoder_forward.1} parent=1 // pred_region
      _
    $region85: #{transformer_decoder_forward.1} parent=1 // pred_fallthru
      _
    // Predicated region
    $region86: #{transformer_decoder_forward.1} parent=1 // pred_check
      _
    $region87: #{transformer_decoder_forward.1} parent=1 // pred_check_branch
      %85 = sbr.rel (0) target = $region89
    $region88: #{transformer_decoder_forward.1} parent=1 // pred_region
      %87 = vsyncadd [#allocation5], 0
      %s89 = sshll.u32 %s21, 4
      %s90 = int_to_ptr.hbm [resolvable:$true] %s89
      %s91 = sshll.u32 [#allocation4], 4
      %s92 = int_to_ptr.vmem [resolvable:$true] %s91
      %94 = dma.hbm_to_vmem [thread:$0]  %s90, 16, %s92, [#allocation5]
    $region89: #{transformer_decoder_forward.1} parent=1 // pred_fallthru
      _
    // Predicated region
    $region90: #{transformer_decoder_forward.1} parent=1 // pred_check
      _
    $region91: #{transformer_decoder_forward.1} parent=1 // pred_check_branch
      %96 = sbr.rel (0) target = $region93
    $region92: #{transformer_decoder_forward.1} parent=1 // pred_region
      _
    $region93: #{transformer_decoder_forward.1} parent=1 // pred_fallthru
      _
    // Predicated region
    $region94: #{transformer_decoder_forward.1} parent=1 // pred_check
      _
    $region95: #{transformer_decoder_forward.1} parent=1 // pred_check_branch
      %98 = sbr.rel (0) target = $region97
    $region96: #{transformer_decoder_forward.1} parent=1 // pred_region
      _
    $region97: #{transformer_decoder_forward.1} parent=1 // pred_fallthru
      _
    // Predicated region
    $region98: #{transformer_decoder_forward.1} parent=1 // pred_check
      _
    $region99: #{transformer_decoder_forward.1} parent=1 // pred_check_branch
      %100 = sbr.rel (0) target = $region101
    $region100: #{transformer_decoder_forward.1} parent=1 // pred_region
      %102 = dma.done [#allocation3], 512
    $region101: #{transformer_decoder_forward.1} parent=1 // pred_fallthru
      _
    // Predicated region
    $region102: #{transformer_decoder_forward.1} parent=1 // pred_check
      _
    $region103: #{transformer_decoder_forward.1} parent=1 // pred_check_branch
      %104 = sbr.rel (0) target = $region105
    $region104: #{transformer_decoder_forward.1} parent=1 // pred_region
      %106 = dma.done [#allocation5], 16
    $region105: #{transformer_decoder_forward.1} parent=1 // pred_fallthru
      _
    %v107 = vld [vmem:[%s4] sm:$0xff]
    %v108 = vld [vmem:[%s4 + $0x8] sm:$0xff]
    %v109 = vld [vmem:[%s4 + $0x10] sm:$0xff]
    %v110 = vld [vmem:[%s4 + $0x18] sm:$0xff]
    %v111 = vld [vmem:[%s5] sm:$0x1]
    %v112 = vld [vmem:[%s6] sm:$0xff]
    %v113 = vld [vmem:[%s6 + $0x8] sm:$0xff]
    %v114 = vld [vmem:[%s6 + $0x10] sm:$0xff]
    %v115 = vld [vmem:[%s6 + $0x18] sm:$0xff]
    %v116 = vld [vmem:[%s7] sm:$0x1]
    %v117 = vld [vmem:[%s8] sm:$0xff]
    %v118 = vld [vmem:[%s8 + $0x8] sm:$0xff]
    %v119 = vld [vmem:[%s8 + $0x10] sm:$0xff]
    %v120 = vld [vmem:[%s8 + $0x18] sm:$0xff]
    %v121 = vld [vmem:[%s9] sm:$0x1]
    %v122 = vld [vmem:[%s10] sm:$0xff]
    %v123 = vld [vmem:[%s10 + $0x8] sm:$0xff]
    %v124 = vld [vmem:[%s10 + $0x10] sm:$0xff]
    %v125 = vld [vmem:[%s10 + $0x18] sm:$0xff]
    %v126 = vld [vmem:[%s11] sm:$0x1]
    %v127 = vld [vmem:[#allocation2] sm:$0xff]
    %v128 = vld [vmem:[#allocation2 + $0x8] sm:$0xff]
    %v129 = vld [vmem:[#allocation2 + $0x10] sm:$0xff]
    %v130 = vld [vmem:[#allocation2 + $0x18] sm:$0xff]
    %v131 = vld [vmem:[%s13] sm:$0x1]
    %v132 = vld [vmem:[%s14] sm:$0xff]
    %v133 = vld [vmem:[%s14 + $0x8] sm:$0xff]
    %v134 = vld [vmem:[%s14 + $0x10] sm:$0xff]
    %v135 = vld [vmem:[%s14 + $0x18] sm:$0xff]
    %v136 = vld [vmem:[%s14 + $0x20] sm:$0xff]
    %v137 = vld [vmem:[%s14 + $0x28] sm:$0xff]
    %v138 = vld [vmem:[%s14 + $0x30] sm:$0xff]
    %v139 = vld [vmem:[%s14 + $0x38] sm:$0xff]
    %v140 = vld [vmem:[%s15] sm:$0x1]
    %v141 = vld [vmem:[%s16] sm:$0x1]
    %v142 = vld [vmem:[%s17] sm:$0x1]
    %v143 = vld [vmem:[%s18] sm:$0x1]
    %v144 = vld [vmem:[%s19] sm:$0x1]
    %v145 = vld [vmem:[%s20] sm:$0x1]
    %v146 = vld [vmem:[#allocation4] sm:$0x1]
    %v147 = vld [vmem:[%s22] sm:$0x1]
    %v148 = vld [vmem:[%s23] sm:$0x1]
    %v149 = vld [vmem:[%s0] sm:$0xff]
    %151 = vrot.lane.b32.xlu0 %v149, 96
    %v152 = vpop.permute.xlu0 %151
    %v154 = vld [vmem:[%s1] sm:$0xff]
    %v155 = vld [vmem:[%s1 + $0x8] sm:$0xff]
    %158 = vrot.lane.b32.xlu0 %v154, 96
    %v159 = vpop.permute.xlu0 %158
    %160 = vrot.lane.b32.xlu0 %v155, 96
    %v161 = vpop.permute.xlu0 %160
    %v162 = vld [vmem:[%s2] sm:$0xff]
    %164 = vrot.lane.b32.xlu0 %v162, 96
    %v165 = vpop.permute.xlu0 %164
    %v167 = vld [vmem:[%s3] sm:$0xff]
    %v168 = vld [vmem:[%s3 + $0x8] sm:$0xff]
    %v169 = vadd.f32 %v154, %v167
    %v170 = vadd.f32 %v155, %v168
    %173 = vrot.lane.b32.xlu0 %v169, 96
    %v174 = vpop.permute.xlu0 %173
    %175 = vrot.lane.b32.xlu0 %v170, 96
    %v176 = vpop.permute.xlu0 %175
    %v178 = vperm.slane %v121, 0
    %183 = vrot.lane.b32.xlu0 %v117, 96
    %v184 = vpop.permute.xlu0 %183
    %185 = vrot.lane.b32.xlu0 %v118, 96
    %v186 = vpop.permute.xlu0 %185
    %187 = vrot.lane.b32.xlu0 %v119, 96
    %v188 = vpop.permute.xlu0 %187
    %189 = vrot.lane.b32.xlu0 %v120, 96
    %v190 = vpop.permute.xlu0 %189
    %195 = vrot.lane.b32.xlu0 %v178, 96
    %v196 = vpop.permute.xlu0 %195
    %vm198 = vcmask 261120
    %v199 = vsel %vm198, %v169, 0
    %v201 = vsel %vm198, %v170, 0
    %v203 = vsel %vm198, %v174, 0
    %v205 = vsel %vm198, %v176, 0
    %207 = vmatpush.msra.mxu0 0.0
    %208 = vmatpush.msra.mxu0 0.0
    %209 = vmatpush.msra.mxu0 0.0
    %210 = vmatpush.msra.mxu0 0.0
    %211 = vmatpush.msra.mxu0 0.0
    %212 = vmatpush.msra.mxu0 0.0
    %213 = vmatpush.msra.mxu0 0.0
    %214 = vmatpush.msra.mxu0 0.0
    %215 = vmatpush.msra.mxu0 0.0
    %216 = vmatpush.msra.mxu0 0.0
    %217 = vmatpush.msra.mxu0 0.0
    %218 = vmatpush.msra.mxu0 0.0
    %219 = vmatpush.msra.mxu0 %v190
    %220 = vmatpush.msra.mxu0 %v188
    %221 = vmatpush.msra.mxu0 %v186
    %222 = vmatpush.msra.mxu0 %v184
    %223 = vmatmul.f32.gmra.mxu0 %v199
    %v224 = vpop.f32.mrf.mxu0
    %v225 = vadd.f32 %v196, %v224
    %226 = vmatmul.f32.gmra.mxu0 %v201
    %v227 = vpop.f32.mrf.mxu0
    %v228 = vadd.f32 %v196, %v227
    %229 = vmatmul.f32.gmra.mxu0 %v203
    %v230 = vpop.f32.mrf.mxu0
    %v231 = vadd.f32 %v196, %v230
    %232 = vmatmul.f32.gmra.mxu0 %v205
    %v233 = vpop.f32.mrf.mxu0
    %v234 = vadd.f32 %v196, %v233
    %235 = vdwg.mxu0
    %236 = vrot.lane.b32.xlu0 %v117, 64
    %v237 = vpop.permute.xlu0 %236
    %238 = vrot.lane.b32.xlu0 %v118, 64
    %v239 = vpop.permute.xlu0 %238
    %240 = vrot.lane.b32.xlu0 %v119, 64
    %v241 = vpop.permute.xlu0 %240
    %242 = vrot.lane.b32.xlu0 %v120, 64
    %v243 = vpop.permute.xlu0 %242
    %248 = vrot.lane.b32.xlu0 %v178, 64
    %v249 = vpop.permute.xlu0 %248
    %v251 = vsel %vm198, %v154, 0
    %v253 = vsel %vm198, %v155, 0
    %v255 = vsel %vm198, %v159, 0
    %v257 = vsel %vm198, %v161, 0
    %259 = vmatpush.msra.mxu0 0.0
    %260 = vmatpush.msra.mxu0 0.0
    %261 = vmatpush.msra.mxu0 0.0
    %262 = vmatpush.msra.mxu0 0.0
    %263 = vmatpush.msra.mxu0 0.0
    %264 = vmatpush.msra.mxu0 0.0
    %265 = vmatpush.msra.mxu0 0.0
    %266 = vmatpush.msra.mxu0 0.0
    %267 = vmatpush.msra.mxu0 0.0
    %268 = vmatpush.msra.mxu0 0.0
    %269 = vmatpush.msra.mxu0 0.0
    %270 = vmatpush.msra.mxu0 0.0
    %271 = vmatpush.msra.mxu0 %v243
    %272 = vmatpush.msra.mxu0 %v241
    %273 = vmatpush.msra.mxu0 %v239
    %274 = vmatpush.msra.mxu0 %v237
    %275 = vmatmul.f32.gmra.mxu0 %v251
    %v276 = vpop.f32.mrf.mxu0
    %v277 = vadd.f32 %v249, %v276
    %278 = vmatmul.f32.gmra.mxu0 %v253
    %v279 = vpop.f32.mrf.mxu0
    %v280 = vadd.f32 %v249, %v279
    %281 = vmatmul.f32.gmra.mxu0 %v255
    %v282 = vpop.f32.mrf.mxu0
    %v283 = vadd.f32 %v249, %v282
    %284 = vmatmul.f32.gmra.mxu0 %v257
    %v285 = vpop.f32.mrf.mxu0
    %v286 = vadd.f32 %v249, %v285
    %287 = vdwg.mxu0
    %v288 = vadd.f32 %v149, %v162
    %v289 = vadd.f32 %v152, %v165
    %v291 = vperm.slane %v111, 0
    %v294 = vsel %vm198, %v288, 0
    %v297 = vsel %vm198, %v289, 0
    %299 = vmatpush.msra.mxu0 0.0
    %300 = vmatpush.msra.mxu0 0.0
    %301 = vmatpush.msra.mxu0 0.0
    %302 = vmatpush.msra.mxu0 0.0
    %303 = vmatpush.msra.mxu0 0.0
    %304 = vmatpush.msra.mxu0 0.0
    %305 = vmatpush.msra.mxu0 0.0
    %306 = vmatpush.msra.mxu0 0.0
    %307 = vmatpush.msra.mxu0 0.0
    %308 = vmatpush.msra.mxu0 0.0
    %309 = vmatpush.msra.mxu0 0.0
    %310 = vmatpush.msra.mxu0 0.0
    %311 = vmatpush.msra.mxu0 %v110
    %312 = vmatpush.msra.mxu0 %v109
    %313 = vmatpush.msra.mxu0 %v108
    %314 = vmatpush.msra.mxu0 %v107
    %315 = vmatmul.f32.gmra.mxu0 %v294
    %v316 = vpop.f32.mrf.mxu0
    %v317 = vadd.f32 %v291, %v316
    %318 = vmatmul.f32.gmra.mxu0 %v297
    %v319 = vpop.f32.mrf.mxu0
    %v320 = vadd.f32 %v291, %v319
    %321 = vdwg.mxu0
    %326 = vrot.lane.b32.xlu0 %v107, 64
    %v327 = vpop.permute.xlu0 %326
    %328 = vrot.lane.b32.xlu0 %v108, 64
    %v329 = vpop.permute.xlu0 %328
    %330 = vrot.lane.b32.xlu0 %v109, 64
    %v331 = vpop.permute.xlu0 %330
    %332 = vrot.lane.b32.xlu0 %v110, 64
    %v333 = vpop.permute.xlu0 %332
    %338 = vrot.lane.b32.xlu0 %v291, 64
    %v339 = vpop.permute.xlu0 %338
    %v341 = vsel %vm198, %v149, 0
    %v343 = vsel %vm198, %v152, 0
    %345 = vmatpush.msra.mxu0 0.0
    %346 = vmatpush.msra.mxu0 0.0
    %347 = vmatpush.msra.mxu0 0.0
    %348 = vmatpush.msra.mxu0 0.0
    %349 = vmatpush.msra.mxu0 0.0
    %350 = vmatpush.msra.mxu0 0.0
    %351 = vmatpush.msra.mxu0 0.0
    %352 = vmatpush.msra.mxu0 0.0
    %353 = vmatpush.msra.mxu0 0.0
    %354 = vmatpush.msra.mxu0 0.0
    %355 = vmatpush.msra.mxu0 0.0
    %356 = vmatpush.msra.mxu0 0.0
    %357 = vmatpush.msra.mxu0 %v333
    %358 = vmatpush.msra.mxu0 %v331
    %359 = vmatpush.msra.mxu0 %v329
    %360 = vmatpush.msra.mxu0 %v327
    %361 = vmatmul.f32.gmra.mxu0 %v341
    %v362 = vpop.f32.mrf.mxu0
    %v363 = vadd.f32 %v339, %v362
    %364 = vmatmul.f32.gmra.mxu0 %v343
    %v365 = vpop.f32.mrf.mxu0
    %v366 = vadd.f32 %v339, %v365
    %367 = vdwg.mxu0
    %v368 = vmul.f32 %v317, 0.35355338
    %v369 = vmul.f32 %v320, 0.35355338
    %371 = vrot.lane.b32.xlu0 %v317, 96
    %v372 = vpop.permute.xlu0 %371
    %vm373 = vcmask 64512
    %v375 = vsel %vm373, %v368, 0
    %v377 = vsel %vm373, %v372, 0
    %379 = vmatpush.xpose.msra.mxu0 0.0
    %380 = vmatpush.xpose.msra.mxu0 0.0
    %381 = vmatpush.xpose.msra.mxu0 0.0
    %382 = vmatpush.xpose.msra.mxu0 0.0
    %383 = vmatpush.xpose.msra.mxu0 0.0
    %384 = vmatpush.xpose.msra.mxu0 0.0
    %385 = vmatpush.xpose.msra.mxu0 0.0
    %386 = vmatpush.xpose.msra.mxu0 0.0
    %387 = vmatpush.xpose.msra.mxu0 0.0
    %388 = vmatpush.xpose.msra.mxu0 0.0
    %389 = vmatpush.xpose.msra.mxu0 0.0
    %390 = vmatpush.xpose.msra.mxu0 0.0
    %391 = vmatpush.xpose.msra.mxu0 0.0
    %392 = vmatpush.xpose.msra.mxu0 0.0
    %393 = vmatpush.xpose.msra.mxu0 0.0
    %394 = vmatpush.xpose.msra.mxu0 %v377
    %395 = vmatmul.f32.gmra.mxu0 %v375
    %v396 = vpop.f32.mrf.mxu0
    %v397 = vadd.f32 0.0, %v396
    %398 = vdwg.mxu0
    %400 = vrot.lane.b32.xlu0 %v320, 96
    %v401 = vpop.permute.xlu0 %400
    %v403 = vsel %vm373, %v369, 0
    %v405 = vsel %vm373, %v401, 0
    %407 = vmatpush.xpose.msra.mxu0 0.0
    %408 = vmatpush.xpose.msra.mxu0 0.0
    %409 = vmatpush.xpose.msra.mxu0 0.0
    %410 = vmatpush.xpose.msra.mxu0 0.0
    %411 = vmatpush.xpose.msra.mxu0 0.0
    %412 = vmatpush.xpose.msra.mxu0 0.0
    %413 = vmatpush.xpose.msra.mxu0 0.0
    %414 = vmatpush.xpose.msra.mxu0 0.0
    %415 = vmatpush.xpose.msra.mxu0 0.0
    %416 = vmatpush.xpose.msra.mxu0 0.0
    %417 = vmatpush.xpose.msra.mxu0 0.0
    %418 = vmatpush.xpose.msra.mxu0 0.0
    %419 = vmatpush.xpose.msra.mxu0 0.0
    %420 = vmatpush.xpose.msra.mxu0 0.0
    %421 = vmatpush.xpose.msra.mxu0 0.0
    %422 = vmatpush.xpose.msra.mxu0 %v405
    %423 = vmatmul.f32.gmra.mxu0 %v403
    %v424 = vpop.f32.mrf.mxu0
    %v425 = vadd.f32 0.0, %v424
    %426 = vdwg.mxu0
    %v427 = vsel %vm373, %v397, -inf
    %428 = vmax.xlane.f32.xlu0 %v427
    %v429 = vpop.xlane.xlu0 %428
    %v430 = vsel %vm373, %v425, -inf
    %431 = vmax.xlane.f32.xlu0 %v430
    %v432 = vpop.xlane.xlu0 %431
    %v433 = vsub.f32 %v397, %v429
    %v434 = vsub.f32 %v425, %v432
    %v435 = vmul.f32 %v433, 1.442695
    %v436 = vpow.pop %v435
    %v437 = vmul.f32 %v434, 1.442695
    %v438 = vpow.pop %v437
    %v439 = vsel %vm373, %v436, 0.0
    %440 = vadd.xlane.f32.xlu0 %v439
    %v441 = vpop.xlane.xlu0 %440
    %v442 = vsel %vm373, %v438, 0.0
    %443 = vadd.xlane.f32.xlu0 %v442
    %v444 = vpop.xlane.xlu0 %443
    %v445 = vrcp.pop %v441
    %v446 = vrcp.pop %v444
    %v447 = vmul.f32 %v436, %v445
    %v448 = vmul.f32 %v438, %v446
    %v450 = vsel %vm373, %v447, 0
    %452 = vmatpush.msra.mxu0 0.0
    %453 = vmatpush.msra.mxu0 0.0
    %454 = vmatpush.msra.mxu0 0.0
    %455 = vmatpush.msra.mxu0 0.0
    %456 = vmatpush.msra.mxu0 0.0
    %457 = vmatpush.msra.mxu0 0.0
    %458 = vmatpush.msra.mxu0 0.0
    %459 = vmatpush.msra.mxu0 0.0
    %460 = vmatpush.msra.mxu0 0.0
    %461 = vmatpush.msra.mxu0 0.0
    %462 = vmatpush.msra.mxu0 0.0
    %463 = vmatpush.msra.mxu0 0.0
    %464 = vmatpush.msra.mxu0 0.0
    %465 = vmatpush.msra.mxu0 0.0
    %466 = vmatpush.msra.mxu0 0.0
    %467 = vmatpush.msra.mxu0 %v363
    %468 = vmatmul.f32.gmra.mxu0 %v450
    %v469 = vpop.f32.mrf.mxu0
    %v470 = vadd.f32 0.0, %v469
    %471 = vdwg.mxu0
    %v473 = vsel %vm373, %v448, 0
    %475 = vmatpush.msra.mxu0 0.0
    %476 = vmatpush.msra.mxu0 0.0
    %477 = vmatpush.msra.mxu0 0.0
    %478 = vmatpush.msra.mxu0 0.0
    %479 = vmatpush.msra.mxu0 0.0
    %480 = vmatpush.msra.mxu0 0.0
    %481 = vmatpush.msra.mxu0 0.0
    %482 = vmatpush.msra.mxu0 0.0
    %483 = vmatpush.msra.mxu0 0.0
    %484 = vmatpush.msra.mxu0 0.0
    %485 = vmatpush.msra.mxu0 0.0
    %486 = vmatpush.msra.mxu0 0.0
    %487 = vmatpush.msra.mxu0 0.0
    %488 = vmatpush.msra.mxu0 0.0
    %489 = vmatpush.msra.mxu0 0.0
    %490 = vmatpush.msra.mxu0 %v366
    %491 = vmatmul.f32.gmra.mxu0 %v473
    %v492 = vpop.f32.mrf.mxu0
    %v493 = vadd.f32 0.0, %v492
    %494 = vdwg.mxu0
    %495 = vrot.lane.b32.xlu0 %v368, 120
    %v496 = vpop.permute.xlu0 %495
    %497 = vrot.lane.b32.xlu0 %v317, 88
    %v498 = vpop.permute.xlu0 %497
    %v499 = vsel %vm373, %v496, 0
    %v501 = vsel %vm373, %v498, 0
    %503 = vmatpush.xpose.msra.mxu0 0.0
    %504 = vmatpush.xpose.msra.mxu0 0.0
    %505 = vmatpush.xpose.msra.mxu0 0.0
    %506 = vmatpush.xpose.msra.mxu0 0.0
    %507 = vmatpush.xpose.msra.mxu0 0.0
    %508 = vmatpush.xpose.msra.mxu0 0.0
    %509 = vmatpush.xpose.msra.mxu0 0.0
    %510 = vmatpush.xpose.msra.mxu0 0.0
    %511 = vmatpush.xpose.msra.mxu0 0.0
    %512 = vmatpush.xpose.msra.mxu0 0.0
    %513 = vmatpush.xpose.msra.mxu0 0.0
    %514 = vmatpush.xpose.msra.mxu0 0.0
    %515 = vmatpush.xpose.msra.mxu0 0.0
    %516 = vmatpush.xpose.msra.mxu0 0.0
    %517 = vmatpush.xpose.msra.mxu0 0.0
    %518 = vmatpush.xpose.msra.mxu0 %v501
    %519 = vmatmul.f32.gmra.mxu0 %v499
    %v520 = vpop.f32.mrf.mxu0
    %v521 = vadd.f32 0.0, %v520
    %522 = vdwg.mxu0
    %523 = vrot.lane.b32.xlu0 %v369, 120
    %v524 = vpop.permute.xlu0 %523
    %525 = vrot.lane.b32.xlu0 %v320, 88
    %v526 = vpop.permute.xlu0 %525
    %v527 = vsel %vm373, %v524, 0
    %v529 = vsel %vm373, %v526, 0
    %531 = vmatpush.xpose.msra.mxu0 0.0
    %532 = vmatpush.xpose.msra.mxu0 0.0
    %533 = vmatpush.xpose.msra.mxu0 0.0
    %534 = vmatpush.xpose.msra.mxu0 0.0
    %535 = vmatpush.xpose.msra.mxu0 0.0
    %536 = vmatpush.xpose.msra.mxu0 0.0
    %537 = vmatpush.xpose.msra.mxu0 0.0
    %538 = vmatpush.xpose.msra.mxu0 0.0
    %539 = vmatpush.xpose.msra.mxu0 0.0
    %540 = vmatpush.xpose.msra.mxu0 0.0
    %541 = vmatpush.xpose.msra.mxu0 0.0
    %542 = vmatpush.xpose.msra.mxu0 0.0
    %543 = vmatpush.xpose.msra.mxu0 0.0
    %544 = vmatpush.xpose.msra.mxu0 0.0
    %545 = vmatpush.xpose.msra.mxu0 0.0
    %546 = vmatpush.xpose.msra.mxu0 %v529
    %547 = vmatmul.f32.gmra.mxu0 %v527
    %v548 = vpop.f32.mrf.mxu0
    %v549 = vadd.f32 0.0, %v548
    %550 = vdwg.mxu0
    %v551 = vsel %vm373, %v521, -inf
    %552 = vmax.xlane.f32.xlu0 %v551
    %v553 = vpop.xlane.xlu0 %552
    %v554 = vsel %vm373, %v549, -inf
    %555 = vmax.xlane.f32.xlu0 %v554
    %v556 = vpop.xlane.xlu0 %555
    %v557 = vsub.f32 %v521, %v553
    %v558 = vsub.f32 %v549, %v556
    %v559 = vmul.f32 %v557, 1.442695
    %v560 = vpow.pop %v559
    %v561 = vmul.f32 %v558, 1.442695
    %v562 = vpow.pop %v561
    %v563 = vsel %vm373, %v560, 0.0
    %564 = vadd.xlane.f32.xlu0 %v563
    %v565 = vpop.xlane.xlu0 %564
    %v566 = vsel %vm373, %v562, 0.0
    %567 = vadd.xlane.f32.xlu0 %v566
    %v568 = vpop.xlane.xlu0 %567
    %v569 = vrcp.pop %v565
    %v570 = vrcp.pop %v568
    %v571 = vmul.f32 %v560, %v569
    %v572 = vmul.f32 %v562, %v570
    %574 = vrot.lane.b32.xlu0 %v363, 120
    %v575 = vpop.permute.xlu0 %574
    %v578 = vsel %vm373, %v571, 0
    %580 = vmatpush.msra.mxu0 0.0
    %581 = vmatpush.msra.mxu0 0.0
    %582 = vmatpush.msra.mxu0 0.0
    %583 = vmatpush.msra.mxu0 0.0
    %584 = vmatpush.msra.mxu0 0.0
    %585 = vmatpush.msra.mxu0 0.0
    %586 = vmatpush.msra.mxu0 0.0
    %587 = vmatpush.msra.mxu0 0.0
    %588 = vmatpush.msra.mxu0 0.0
    %589 = vmatpush.msra.mxu0 0.0
    %590 = vmatpush.msra.mxu0 0.0
    %591 = vmatpush.msra.mxu0 0.0
    %592 = vmatpush.msra.mxu0 0.0
    %593 = vmatpush.msra.mxu0 0.0
    %594 = vmatpush.msra.mxu0 0.0
    %595 = vmatpush.msra.mxu0 %v575
    %596 = vmatmul.f32.gmra.mxu0 %v578
    %v597 = vpop.f32.mrf.mxu0
    %v598 = vadd.f32 0.0, %v597
    %599 = vdwg.mxu0
    %601 = vrot.lane.b32.xlu0 %v366, 120
    %v602 = vpop.permute.xlu0 %601
    %v605 = vsel %vm373, %v572, 0
    %607 = vmatpush.msra.mxu0 0.0
    %608 = vmatpush.msra.mxu0 0.0
    %609 = vmatpush.msra.mxu0 0.0
    %610 = vmatpush.msra.mxu0 0.0
    %611 = vmatpush.msra.mxu0 0.0
    %612 = vmatpush.msra.mxu0 0.0
    %613 = vmatpush.msra.mxu0 0.0
    %614 = vmatpush.msra.mxu0 0.0
    %615 = vmatpush.msra.mxu0 0.0
    %616 = vmatpush.msra.mxu0 0.0
    %617 = vmatpush.msra.mxu0 0.0
    %618 = vmatpush.msra.mxu0 0.0
    %619 = vmatpush.msra.mxu0 0.0
    %620 = vmatpush.msra.mxu0 0.0
    %621 = vmatpush.msra.mxu0 0.0
    %622 = vmatpush.msra.mxu0 %v602
    %623 = vmatmul.f32.gmra.mxu0 %v605
    %v624 = vpop.f32.mrf.mxu0
    %v625 = vadd.f32 0.0, %v624
    %626 = vdwg.mxu0
    %627 = vrot.lane.b32.xlu0 %v368, 112
    %v628 = vpop.permute.xlu0 %627
    %629 = vrot.lane.b32.xlu0 %v317, 80
    %v630 = vpop.permute.xlu0 %629
    %v631 = vsel %vm373, %v628, 0
    %v633 = vsel %vm373, %v630, 0
    %635 = vmatpush.xpose.msra.mxu0 0.0
    %636 = vmatpush.xpose.msra.mxu0 0.0
    %637 = vmatpush.xpose.msra.mxu0 0.0
    %638 = vmatpush.xpose.msra.mxu0 0.0
    %639 = vmatpush.xpose.msra.mxu0 0.0
    %640 = vmatpush.xpose.msra.mxu0 0.0
    %641 = vmatpush.xpose.msra.mxu0 0.0
    %642 = vmatpush.xpose.msra.mxu0 0.0
    %643 = vmatpush.xpose.msra.mxu0 0.0
    %644 = vmatpush.xpose.msra.mxu0 0.0
    %645 = vmatpush.xpose.msra.mxu0 0.0
    %646 = vmatpush.xpose.msra.mxu0 0.0
    %647 = vmatpush.xpose.msra.mxu0 0.0
    %648 = vmatpush.xpose.msra.mxu0 0.0
    %649 = vmatpush.xpose.msra.mxu0 0.0
    %650 = vmatpush.xpose.msra.mxu0 %v633
    %651 = vmatmul.f32.gmra.mxu0 %v631
    %v652 = vpop.f32.mrf.mxu0
    %v653 = vadd.f32 0.0, %v652
    %654 = vdwg.mxu0
    %655 = vrot.lane.b32.xlu0 %v369, 112
    %v656 = vpop.permute.xlu0 %655
    %657 = vrot.lane.b32.xlu0 %v320, 80
    %v658 = vpop.permute.xlu0 %657
    %v659 = vsel %vm373, %v656, 0
    %v661 = vsel %vm373, %v658, 0
    %663 = vmatpush.xpose.msra.mxu0 0.0
    %664 = vmatpush.xpose.msra.mxu0 0.0
    %665 = vmatpush.xpose.msra.mxu0 0.0
    %666 = vmatpush.xpose.msra.mxu0 0.0
    %667 = vmatpush.xpose.msra.mxu0 0.0
    %668 = vmatpush.xpose.msra.mxu0 0.0
    %669 = vmatpush.xpose.msra.mxu0 0.0
    %670 = vmatpush.xpose.msra.mxu0 0.0
    %671 = vmatpush.xpose.msra.mxu0 0.0
    %672 = vmatpush.xpose.msra.mxu0 0.0
    %673 = vmatpush.xpose.msra.mxu0 0.0
    %674 = vmatpush.xpose.msra.mxu0 0.0
    %675 = vmatpush.xpose.msra.mxu0 0.0
    %676 = vmatpush.xpose.msra.mxu0 0.0
    %677 = vmatpush.xpose.msra.mxu0 0.0
    %678 = vmatpush.xpose.msra.mxu0 %v661
    %679 = vmatmul.f32.gmra.mxu0 %v659
    %v680 = vpop.f32.mrf.mxu0
    %v681 = vadd.f32 0.0, %v680
    %682 = vdwg.mxu0
    %v683 = vsel %vm373, %v653, -inf
    %684 = vmax.xlane.f32.xlu0 %v683
    %v685 = vpop.xlane.xlu0 %684
    %v686 = vsel %vm373, %v681, -inf
    %687 = vmax.xlane.f32.xlu0 %v686
    %v688 = vpop.xlane.xlu0 %687
    %v689 = vsub.f32 %v653, %v685
    %v690 = vsub.f32 %v681, %v688
    %v691 = vmul.f32 %v689, 1.442695
    %v692 = vpow.pop %v691
    %v693 = vmul.f32 %v690, 1.442695
    %v694 = vpow.pop %v693
    %v695 = vsel %vm373, %v692, 0.0
    %696 = vadd.xlane.f32.xlu0 %v695
    %v697 = vpop.xlane.xlu0 %696
    %v698 = vsel %vm373, %v694, 0.0
    %699 = vadd.xlane.f32.xlu0 %v698
    %v700 = vpop.xlane.xlu0 %699
    %v701 = vrcp.pop %v697
    %v702 = vrcp.pop %v700
    %v703 = vmul.f32 %v692, %v701
    %v704 = vmul.f32 %v694, %v702
    %705 = vrot.lane.b32.xlu0 %v363, 112
    %v706 = vpop.permute.xlu0 %705
    %v709 = vsel %vm373, %v703, 0
    %711 = vmatpush.msra.mxu0 0.0
    %712 = vmatpush.msra.mxu0 0.0
    %713 = vmatpush.msra.mxu0 0.0
    %714 = vmatpush.msra.mxu0 0.0
    %715 = vmatpush.msra.mxu0 0.0
    %716 = vmatpush.msra.mxu0 0.0
    %717 = vmatpush.msra.mxu0 0.0
    %718 = vmatpush.msra.mxu0 0.0
    %719 = vmatpush.msra.mxu0 0.0
    %720 = vmatpush.msra.mxu0 0.0
    %721 = vmatpush.msra.mxu0 0.0
    %722 = vmatpush.msra.mxu0 0.0
    %723 = vmatpush.msra.mxu0 0.0
    %724 = vmatpush.msra.mxu0 0.0
    %725 = vmatpush.msra.mxu0 0.0
    %726 = vmatpush.msra.mxu0 %v706
    %727 = vmatmul.f32.gmra.mxu0 %v709
    %v728 = vpop.f32.mrf.mxu0
    %v729 = vadd.f32 0.0, %v728
    %730 = vdwg.mxu0
    %731 = vrot.lane.b32.xlu0 %v366, 112
    %v732 = vpop.permute.xlu0 %731
    %v735 = vsel %vm373, %v704, 0
    %737 = vmatpush.msra.mxu0 0.0
    %738 = vmatpush.msra.mxu0 0.0
    %739 = vmatpush.msra.mxu0 0.0
    %740 = vmatpush.msra.mxu0 0.0
    %741 = vmatpush.msra.mxu0 0.0
    %742 = vmatpush.msra.mxu0 0.0
    %743 = vmatpush.msra.mxu0 0.0
    %744 = vmatpush.msra.mxu0 0.0
    %745 = vmatpush.msra.mxu0 0.0
    %746 = vmatpush.msra.mxu0 0.0
    %747 = vmatpush.msra.mxu0 0.0
    %748 = vmatpush.msra.mxu0 0.0
    %749 = vmatpush.msra.mxu0 0.0
    %750 = vmatpush.msra.mxu0 0.0
    %751 = vmatpush.msra.mxu0 0.0
    %752 = vmatpush.msra.mxu0 %v732
    %753 = vmatmul.f32.gmra.mxu0 %v735
    %v754 = vpop.f32.mrf.mxu0
    %v755 = vadd.f32 0.0, %v754
    %756 = vdwg.mxu0
    %757 = vrot.lane.b32.xlu0 %v368, 104
    %v758 = vpop.permute.xlu0 %757
    %759 = vrot.lane.b32.xlu0 %v317, 72
    %v760 = vpop.permute.xlu0 %759
    %v761 = vsel %vm373, %v758, 0
    %v763 = vsel %vm373, %v760, 0
    %765 = vmatpush.xpose.msra.mxu0 0.0
    %766 = vmatpush.xpose.msra.mxu0 0.0
    %767 = vmatpush.xpose.msra.mxu0 0.0
    %768 = vmatpush.xpose.msra.mxu0 0.0
    %769 = vmatpush.xpose.msra.mxu0 0.0
    %770 = vmatpush.xpose.msra.mxu0 0.0
    %771 = vmatpush.xpose.msra.mxu0 0.0
    %772 = vmatpush.xpose.msra.mxu0 0.0
    %773 = vmatpush.xpose.msra.mxu0 0.0
    %774 = vmatpush.xpose.msra.mxu0 0.0
    %775 = vmatpush.xpose.msra.mxu0 0.0
    %776 = vmatpush.xpose.msra.mxu0 0.0
    %777 = vmatpush.xpose.msra.mxu0 0.0
    %778 = vmatpush.xpose.msra.mxu0 0.0
    %779 = vmatpush.xpose.msra.mxu0 0.0
    %780 = vmatpush.xpose.msra.mxu0 %v763
    %781 = vmatmul.f32.gmra.mxu0 %v761
    %v782 = vpop.f32.mrf.mxu0
    %v783 = vadd.f32 0.0, %v782
    %784 = vdwg.mxu0
    %785 = vrot.lane.b32.xlu0 %v369, 104
    %v786 = vpop.permute.xlu0 %785
    %787 = vrot.lane.b32.xlu0 %v320, 72
    %v788 = vpop.permute.xlu0 %787
    %v789 = vsel %vm373, %v786, 0
    %v791 = vsel %vm373, %v788, 0
    %793 = vmatpush.xpose.msra.mxu0 0.0
    %794 = vmatpush.xpose.msra.mxu0 0.0
    %795 = vmatpush.xpose.msra.mxu0 0.0
    %796 = vmatpush.xpose.msra.mxu0 0.0
    %797 = vmatpush.xpose.msra.mxu0 0.0
    %798 = vmatpush.xpose.msra.mxu0 0.0
    %799 = vmatpush.xpose.msra.mxu0 0.0
    %800 = vmatpush.xpose.msra.mxu0 0.0
    %801 = vmatpush.xpose.msra.mxu0 0.0
    %802 = vmatpush.xpose.msra.mxu0 0.0
    %803 = vmatpush.xpose.msra.mxu0 0.0
    %804 = vmatpush.xpose.msra.mxu0 0.0
    %805 = vmatpush.xpose.msra.mxu0 0.0
    %806 = vmatpush.xpose.msra.mxu0 0.0
    %807 = vmatpush.xpose.msra.mxu0 0.0
    %808 = vmatpush.xpose.msra.mxu0 %v791
    %809 = vmatmul.f32.gmra.mxu0 %v789
    %v810 = vpop.f32.mrf.mxu0
    %v811 = vadd.f32 0.0, %v810
    %812 = vdwg.mxu0
    %v813 = vsel %vm373, %v783, -inf
    %814 = vmax.xlane.f32.xlu0 %v813
    %v815 = vpop.xlane.xlu0 %814
    %v816 = vsel %vm373, %v811, -inf
    %817 = vmax.xlane.f32.xlu0 %v816
    %v818 = vpop.xlane.xlu0 %817
    %v819 = vsub.f32 %v783, %v815
    %v820 = vsub.f32 %v811, %v818
    %v821 = vmul.f32 %v819, 1.442695
    %v822 = vpow.pop %v821
    %v823 = vmul.f32 %v820, 1.442695
    %v824 = vpow.pop %v823
    %v825 = vsel %vm373, %v822, 0.0
    %826 = vadd.xlane.f32.xlu0 %v825
    %v827 = vpop.xlane.xlu0 %826
    %v828 = vsel %vm373, %v824, 0.0
    %829 = vadd.xlane.f32.xlu0 %v828
    %v830 = vpop.xlane.xlu0 %829
    %v831 = vrcp.pop %v827
    %v832 = vrcp.pop %v830
    %v833 = vmul.f32 %v822, %v831
    %v834 = vmul.f32 %v824, %v832
    %835 = vrot.lane.b32.xlu0 %v363, 104
    %v836 = vpop.permute.xlu0 %835
    %v839 = vsel %vm373, %v833, 0
    %841 = vmatpush.msra.mxu0 0.0
    %842 = vmatpush.msra.mxu0 0.0
    %843 = vmatpush.msra.mxu0 0.0
    %844 = vmatpush.msra.mxu0 0.0
    %845 = vmatpush.msra.mxu0 0.0
    %846 = vmatpush.msra.mxu0 0.0
    %847 = vmatpush.msra.mxu0 0.0
    %848 = vmatpush.msra.mxu0 0.0
    %849 = vmatpush.msra.mxu0 0.0
    %850 = vmatpush.msra.mxu0 0.0
    %851 = vmatpush.msra.mxu0 0.0
    %852 = vmatpush.msra.mxu0 0.0
    %853 = vmatpush.msra.mxu0 0.0
    %854 = vmatpush.msra.mxu0 0.0
    %855 = vmatpush.msra.mxu0 0.0
    %856 = vmatpush.msra.mxu0 %v836
    %857 = vmatmul.f32.gmra.mxu0 %v839
    %v858 = vpop.f32.mrf.mxu0
    %v859 = vadd.f32 0.0, %v858
    %860 = vdwg.mxu0
    %861 = vrot.lane.b32.xlu0 %v366, 104
    %v862 = vpop.permute.xlu0 %861
    %v865 = vsel %vm373, %v834, 0
    %867 = vmatpush.msra.mxu0 0.0
    %868 = vmatpush.msra.mxu0 0.0
    %869 = vmatpush.msra.mxu0 0.0
    %870 = vmatpush.msra.mxu0 0.0
    %871 = vmatpush.msra.mxu0 0.0
    %872 = vmatpush.msra.mxu0 0.0
    %873 = vmatpush.msra.mxu0 0.0
    %874 = vmatpush.msra.mxu0 0.0
    %875 = vmatpush.msra.mxu0 0.0
    %876 = vmatpush.msra.mxu0 0.0
    %877 = vmatpush.msra.mxu0 0.0
    %878 = vmatpush.msra.mxu0 0.0
    %879 = vmatpush.msra.mxu0 0.0
    %880 = vmatpush.msra.mxu0 0.0
    %881 = vmatpush.msra.mxu0 0.0
    %882 = vmatpush.msra.mxu0 %v862
    %883 = vmatmul.f32.gmra.mxu0 %v865
    %v884 = vpop.f32.mrf.mxu0
    %v885 = vadd.f32 0.0, %v884
    %886 = vdwg.mxu0
    %889 = vrot.lane.b32.xlu0 %v598, 8
    %v890 = vpop.permute.xlu0 %889
    %891 = vrot.lane.b32.xlu0 %v625, 8
    %v892 = vpop.permute.xlu0 %891
    %897 = vrot.lane.b32.xlu0 %v729, 16
    %v898 = vpop.permute.xlu0 %897
    %899 = vrot.lane.b32.xlu0 %v755, 16
    %v900 = vpop.permute.xlu0 %899
    %905 = vrot.lane.b32.xlu0 %v859, 24
    %v906 = vpop.permute.xlu0 %905
    %907 = vrot.lane.b32.xlu0 %v885, 24
    %v908 = vpop.permute.xlu0 %907
    %v911 = vsel %vm373, %v470, %v890
    %v912 = vsel %vm373, %v493, %v892
    %vm913 = vcmask 130048
    %v914 = vsel %vm913, %v911, %v898
    %v915 = vsel %vm913, %v912, %v900
    %vm916 = vcmask 195584
    %v917 = vsel %vm916, %v914, %v906
    %v918 = vsel %vm916, %v915, %v908
    %v920 = vperm.slane %v116, 0
    %v923 = vsel %vm198, %v917, 0
    %v926 = vsel %vm198, %v918, 0
    %928 = vmatpush.msra.mxu0 0.0
    %929 = vmatpush.msra.mxu0 0.0
    %930 = vmatpush.msra.mxu0 0.0
    %931 = vmatpush.msra.mxu0 0.0
    %932 = vmatpush.msra.mxu0 0.0
    %933 = vmatpush.msra.mxu0 0.0
    %934 = vmatpush.msra.mxu0 0.0
    %935 = vmatpush.msra.mxu0 0.0
    %936 = vmatpush.msra.mxu0 0.0
    %937 = vmatpush.msra.mxu0 0.0
    %938 = vmatpush.msra.mxu0 0.0
    %939 = vmatpush.msra.mxu0 0.0
    %940 = vmatpush.msra.mxu0 %v115
    %941 = vmatpush.msra.mxu0 %v114
    %942 = vmatpush.msra.mxu0 %v113
    %943 = vmatpush.msra.mxu0 %v112
    %944 = vmatmul.f32.gmra.mxu0 %v923
    %v945 = vpop.f32.mrf.mxu0
    %v946 = vadd.f32 %v920, %v945
    %947 = vmatmul.f32.gmra.mxu0 %v926
    %v948 = vpop.f32.mrf.mxu0
    %v949 = vadd.f32 %v920, %v948
    %950 = vdwg.mxu0
    %v951 = vadd.f32 %v149, %v946
    %v952 = vadd.f32 %v152, %v949
    %v953 = vsel %vm198, %v951, 0.0
    %954 = vadd.xlane.f32.xlu0 %v953
    %v955 = vpop.xlane.xlu0 %954
    %v956 = vsel %vm198, %v952, 0.0
    %957 = vadd.xlane.f32.xlu0 %v956
    %v958 = vpop.xlane.xlu0 %957
    %v959 = vrcp.pop 32.0
    %v960 = vmul.f32 32.0, %v959
    %v961 = vsub.f32 1.0, %v960
    %v962 = vmul.f32 %v959, %v961
    %v963 = vadd.f32 %v959, %v962
    %vm964 = vweird.f32 %v959
    %v965 = vsel %vm964, %v959, %v963
    %v966 = vmul.f32 %v955, %v965
    %v967 = vmul.f32 %v958, %v965
    %v968 = vsub.f32 %v951, %v966
    %v969 = vsub.f32 %v952, %v967
    %v970 = vmul.f32 %v968, %v968
    %v971 = vmul.f32 %v969, %v969
    %v972 = vsel %vm198, %v970, 0.0
    %973 = vadd.xlane.f32.xlu0 %v972
    %v974 = vpop.xlane.xlu0 %973
    %v975 = vsel %vm198, %v971, 0.0
    %976 = vadd.xlane.f32.xlu0 %v975
    %v977 = vpop.xlane.xlu0 %976
    %v978 = vmul.f32 %v974, %v965
    %v979 = vmul.f32 %v977, %v965
    %v980 = vadd.f32 %v978, 1e-05
    %v981 = vadd.f32 %v979, 1e-05
    %v982 = vrsqrt.pop %v980
    %v983 = vmul.f32 %v982, %v980
    %v984 = vmul.f32 %v983, %v982
    %v985 = vmul.f32 0.5, %v984
    %v986 = vsub.f32 1.5, %v985
    %v987 = vmul.f32 %v982, %v986
    %vm988 = vweird.f32 %v980
    %vm989 = vweird.f32 %v982
    %vm990 = vmor %vm988, %vm989
    %v991 = vsel %vm990, %v982, %v987
    %v992 = vrsqrt.pop %v981
    %v993 = vmul.f32 %v992, %v981
    %v994 = vmul.f32 %v993, %v992
    %v995 = vmul.f32 0.5, %v994
    %v996 = vsub.f32 1.5, %v995
    %v997 = vmul.f32 %v992, %v996
    %vm998 = vweird.f32 %v981
    %vm999 = vweird.f32 %v992
    %vm1000 = vmor %vm998, %vm999
    %v1001 = vsel %vm1000, %v992, %v997
    %v1002 = vmul.f32 %v968, %v991
    %v1003 = vmul.f32 %v969, %v1001
    %v1005 = vperm.slane %v141, 0
    %v1007 = vmul.f32 %v1002, %v1005
    %v1008 = vmul.f32 %v1003, %v1005
    %v1010 = vperm.slane %v142, 0
    %v1012 = vadd.f32 %v1007, %v1010
    %v1013 = vadd.f32 %v1008, %v1010
    %v1014 = vadd.f32 %v1012, %v162
    %v1015 = vadd.f32 %v1013, %v165
    %v1018 = vsel %vm198, %v1014, 0
    %v1021 = vsel %vm198, %v1015, 0
    %1023 = vmatpush.msra.mxu0 0.0
    %1024 = vmatpush.msra.mxu0 0.0
    %1025 = vmatpush.msra.mxu0 0.0
    %1026 = vmatpush.msra.mxu0 0.0
    %1027 = vmatpush.msra.mxu0 0.0
    %1028 = vmatpush.msra.mxu0 0.0
    %1029 = vmatpush.msra.mxu0 0.0
    %1030 = vmatpush.msra.mxu0 0.0
    %1031 = vmatpush.msra.mxu0 0.0
    %1032 = vmatpush.msra.mxu0 0.0
    %1033 = vmatpush.msra.mxu0 0.0
    %1034 = vmatpush.msra.mxu0 0.0
    %1035 = vmatpush.msra.mxu0 %v120
    %1036 = vmatpush.msra.mxu0 %v119
    %1037 = vmatpush.msra.mxu0 %v118
    %1038 = vmatpush.msra.mxu0 %v117
    %1039 = vmatmul.f32.gmra.mxu0 %v1018
    %v1040 = vpop.f32.mrf.mxu0
    %v1041 = vadd.f32 %v178, %v1040
    %1042 = vmatmul.f32.gmra.mxu0 %v1021
    %v1043 = vpop.f32.mrf.mxu0
    %v1044 = vadd.f32 %v178, %v1043
    %1045 = vdwg.mxu0
    %v1046 = vmul.f32 %v1041, 0.35355338
    %v1047 = vmul.f32 %v1044, 0.35355338
    %v1049 = vsel %vm373, %v1046, 0
    %v1052 = vsel %vm373, %v225, 0
    %v1055 = vsel %vm373, %v228, 0
    %1057 = vmatpush.xpose.msra.mxu0 0.0
    %1058 = vmatpush.xpose.msra.mxu0 0.0
    %1059 = vmatpush.xpose.msra.mxu0 0.0
    %1060 = vmatpush.xpose.msra.mxu0 0.0
    %1061 = vmatpush.xpose.msra.mxu0 0.0
    %1062 = vmatpush.xpose.msra.mxu0 0.0
    %1063 = vmatpush.xpose.msra.mxu0 0.0
    %1064 = vmatpush.xpose.msra.mxu0 0.0
    %1065 = vmatpush.xpose.msra.mxu0 0.0
    %1066 = vmatpush.xpose.msra.mxu0 0.0
    %1067 = vmatpush.xpose.msra.mxu0 0.0
    %1068 = vmatpush.xpose.msra.mxu0 0.0
    %1069 = vmatpush.xpose.msra.mxu0 0.0
    %1070 = vmatpush.xpose.msra.mxu0 0.0
    %1071 = vmatpush.xpose.msra.mxu0 %v1055
    %1072 = vmatpush.xpose.msra.mxu0 %v1052
    %1073 = vmatmul.f32.gmra.mxu0 %v1049
    %v1074 = vpop.f32.mrf.mxu0
    %v1075 = vadd.f32 0.0, %v1074
    %1076 = vdwg.mxu0
    %v1078 = vsel %vm373, %v1047, 0
    %v1081 = vsel %vm373, %v231, 0
    %v1084 = vsel %vm373, %v234, 0
    %1086 = vmatpush.xpose.msra.mxu0 0.0
    %1087 = vmatpush.xpose.msra.mxu0 0.0
    %1088 = vmatpush.xpose.msra.mxu0 0.0
    %1089 = vmatpush.xpose.msra.mxu0 0.0
    %1090 = vmatpush.xpose.msra.mxu0 0.0
    %1091 = vmatpush.xpose.msra.mxu0 0.0
    %1092 = vmatpush.xpose.msra.mxu0 0.0
    %1093 = vmatpush.xpose.msra.mxu0 0.0
    %1094 = vmatpush.xpose.msra.mxu0 0.0
    %1095 = vmatpush.xpose.msra.mxu0 0.0
    %1096 = vmatpush.xpose.msra.mxu0 0.0
    %1097 = vmatpush.xpose.msra.mxu0 0.0
    %1098 = vmatpush.xpose.msra.mxu0 0.0
    %1099 = vmatpush.xpose.msra.mxu0 0.0
    %1100 = vmatpush.xpose.msra.mxu0 %v1084
    %1101 = vmatpush.xpose.msra.mxu0 %v1081
    %1102 = vmatmul.f32.gmra.mxu0 %v1078
    %v1103 = vpop.f32.mrf.mxu0
    %v1104 = vadd.f32 0.0, %v1103
    %1105 = vdwg.mxu0
    %v1106 = vsel %vm913, %v1075, -inf
    %1107 = vmax.xlane.f32.xlu0 %v1106
    %v1108 = vpop.xlane.xlu0 %1107
    %v1109 = vsel %vm913, %v1104, -inf
    %1110 = vmax.xlane.f32.xlu0 %v1109
    %v1111 = vpop.xlane.xlu0 %1110
    %v1112 = vsub.f32 %v1075, %v1108
    %v1113 = vsub.f32 %v1104, %v1111
    %v1114 = vmul.f32 %v1112, 1.442695
    %v1115 = vpow.pop %v1114
    %v1116 = vmul.f32 %v1113, 1.442695
    %v1117 = vpow.pop %v1116
    %v1118 = vsel %vm913, %v1115, 0.0
    %1119 = vadd.xlane.f32.xlu0 %v1118
    %v1120 = vpop.xlane.xlu0 %1119
    %v1121 = vsel %vm913, %v1117, 0.0
    %1122 = vadd.xlane.f32.xlu0 %v1121
    %v1123 = vpop.xlane.xlu0 %1122
    %v1124 = vrcp.pop %v1120
    %v1125 = vrcp.pop %v1123
    %v1126 = vmul.f32 %v1115, %v1124
    %v1127 = vmul.f32 %v1117, %v1125
    %v1129 = vsel %vm913, %v1126, 0
    %1131 = vmatpush.msra.mxu0 0.0
    %1132 = vmatpush.msra.mxu0 0.0
    %1133 = vmatpush.msra.mxu0 0.0
    %1134 = vmatpush.msra.mxu0 0.0
    %1135 = vmatpush.msra.mxu0 0.0
    %1136 = vmatpush.msra.mxu0 0.0
    %1137 = vmatpush.msra.mxu0 0.0
    %1138 = vmatpush.msra.mxu0 0.0
    %1139 = vmatpush.msra.mxu0 0.0
    %1140 = vmatpush.msra.mxu0 0.0
    %1141 = vmatpush.msra.mxu0 0.0
    %1142 = vmatpush.msra.mxu0 0.0
    %1143 = vmatpush.msra.mxu0 0.0
    %1144 = vmatpush.msra.mxu0 0.0
    %1145 = vmatpush.msra.mxu0 %v280
    %1146 = vmatpush.msra.mxu0 %v277
    %1147 = vmatmul.f32.gmra.mxu0 %v1129
    %v1148 = vpop.f32.mrf.mxu0
    %v1149 = vadd.f32 0.0, %v1148
    %1150 = vdwg.mxu0
    %v1152 = vsel %vm913, %v1127, 0
    %1154 = vmatpush.msra.mxu0 0.0
    %1155 = vmatpush.msra.mxu0 0.0
    %1156 = vmatpush.msra.mxu0 0.0
    %1157 = vmatpush.msra.mxu0 0.0
    %1158 = vmatpush.msra.mxu0 0.0
    %1159 = vmatpush.msra.mxu0 0.0
    %1160 = vmatpush.msra.mxu0 0.0
    %1161 = vmatpush.msra.mxu0 0.0
    %1162 = vmatpush.msra.mxu0 0.0
    %1163 = vmatpush.msra.mxu0 0.0
    %1164 = vmatpush.msra.mxu0 0.0
    %1165 = vmatpush.msra.mxu0 0.0
    %1166 = vmatpush.msra.mxu0 0.0
    %1167 = vmatpush.msra.mxu0 0.0
    %1168 = vmatpush.msra.mxu0 %v286
    %1169 = vmatpush.msra.mxu0 %v283
    %1170 = vmatmul.f32.gmra.mxu0 %v1152
    %v1171 = vpop.f32.mrf.mxu0
    %v1172 = vadd.f32 0.0, %v1171
    %1173 = vdwg.mxu0
    %1174 = vrot.lane.b32.xlu0 %v1046, 120
    %v1175 = vpop.permute.xlu0 %1174
    %1176 = vrot.lane.b32.xlu0 %v225, 120
    %v1177 = vpop.permute.xlu0 %1176
    %1178 = vrot.lane.b32.xlu0 %v228, 120
    %v1179 = vpop.permute.xlu0 %1178
    %v1180 = vsel %vm373, %v1175, 0
    %v1182 = vsel %vm373, %v1177, 0
    %v1184 = vsel %vm373, %v1179, 0
    %1186 = vmatpush.xpose.msra.mxu0 0.0
    %1187 = vmatpush.xpose.msra.mxu0 0.0
    %1188 = vmatpush.xpose.msra.mxu0 0.0
    %1189 = vmatpush.xpose.msra.mxu0 0.0
    %1190 = vmatpush.xpose.msra.mxu0 0.0
    %1191 = vmatpush.xpose.msra.mxu0 0.0
    %1192 = vmatpush.xpose.msra.mxu0 0.0
    %1193 = vmatpush.xpose.msra.mxu0 0.0
    %1194 = vmatpush.xpose.msra.mxu0 0.0
    %1195 = vmatpush.xpose.msra.mxu0 0.0
    %1196 = vmatpush.xpose.msra.mxu0 0.0
    %1197 = vmatpush.xpose.msra.mxu0 0.0
    %1198 = vmatpush.xpose.msra.mxu0 0.0
    %1199 = vmatpush.xpose.msra.mxu0 0.0
    %1200 = vmatpush.xpose.msra.mxu0 %v1184
    %1201 = vmatpush.xpose.msra.mxu0 %v1182
    %1202 = vmatmul.f32.gmra.mxu0 %v1180
    %v1203 = vpop.f32.mrf.mxu0
    %v1204 = vadd.f32 0.0, %v1203
    %1205 = vdwg.mxu0
    %1206 = vrot.lane.b32.xlu0 %v1047, 120
    %v1207 = vpop.permute.xlu0 %1206
    %1208 = vrot.lane.b32.xlu0 %v231, 120
    %v1209 = vpop.permute.xlu0 %1208
    %1210 = vrot.lane.b32.xlu0 %v234, 120
    %v1211 = vpop.permute.xlu0 %1210
    %v1212 = vsel %vm373, %v1207, 0
    %v1214 = vsel %vm373, %v1209, 0
    %v1216 = vsel %vm373, %v1211, 0
    %1218 = vmatpush.xpose.msra.mxu0 0.0
    %1219 = vmatpush.xpose.msra.mxu0 0.0
    %1220 = vmatpush.xpose.msra.mxu0 0.0
    %1221 = vmatpush.xpose.msra.mxu0 0.0
    %1222 = vmatpush.xpose.msra.mxu0 0.0
    %1223 = vmatpush.xpose.msra.mxu0 0.0
    %1224 = vmatpush.xpose.msra.mxu0 0.0
    %1225 = vmatpush.xpose.msra.mxu0 0.0
    %1226 = vmatpush.xpose.msra.mxu0 0.0
    %1227 = vmatpush.xpose.msra.mxu0 0.0
    %1228 = vmatpush.xpose.msra.mxu0 0.0
    %1229 = vmatpush.xpose.msra.mxu0 0.0
    %1230 = vmatpush.xpose.msra.mxu0 0.0
    %1231 = vmatpush.xpose.msra.mxu0 0.0
    %1232 = vmatpush.xpose.msra.mxu0 %v1216
    %1233 = vmatpush.xpose.msra.mxu0 %v1214
    %1234 = vmatmul.f32.gmra.mxu0 %v1212
    %v1235 = vpop.f32.mrf.mxu0
    %v1236 = vadd.f32 0.0, %v1235
    %1237 = vdwg.mxu0
    %v1238 = vsel %vm913, %v1204, -inf
    %1239 = vmax.xlane.f32.xlu0 %v1238
    %v1240 = vpop.xlane.xlu0 %1239
    %v1241 = vsel %vm913, %v1236, -inf
    %1242 = vmax.xlane.f32.xlu0 %v1241
    %v1243 = vpop.xlane.xlu0 %1242
    %v1244 = vsub.f32 %v1204, %v1240
    %v1245 = vsub.f32 %v1236, %v1243
    %v1246 = vmul.f32 %v1244, 1.442695
    %v1247 = vpow.pop %v1246
    %v1248 = vmul.f32 %v1245, 1.442695
    %v1249 = vpow.pop %v1248
    %v1250 = vsel %vm913, %v1247, 0.0
    %1251 = vadd.xlane.f32.xlu0 %v1250
    %v1252 = vpop.xlane.xlu0 %1251
    %v1253 = vsel %vm913, %v1249, 0.0
    %1254 = vadd.xlane.f32.xlu0 %v1253
    %v1255 = vpop.xlane.xlu0 %1254
    %v1256 = vrcp.pop %v1252
    %v1257 = vrcp.pop %v1255
    %v1258 = vmul.f32 %v1247, %v1256
    %v1259 = vmul.f32 %v1249, %v1257
    %1262 = vrot.lane.b32.xlu0 %v277, 120
    %v1263 = vpop.permute.xlu0 %1262
    %1264 = vrot.lane.b32.xlu0 %v280, 120
    %v1265 = vpop.permute.xlu0 %1264
    %v1269 = vsel %vm913, %v1258, 0
    %1271 = vmatpush.msra.mxu0 0.0
    %1272 = vmatpush.msra.mxu0 0.0
    %1273 = vmatpush.msra.mxu0 0.0
    %1274 = vmatpush.msra.mxu0 0.0
    %1275 = vmatpush.msra.mxu0 0.0
    %1276 = vmatpush.msra.mxu0 0.0
    %1277 = vmatpush.msra.mxu0 0.0
    %1278 = vmatpush.msra.mxu0 0.0
    %1279 = vmatpush.msra.mxu0 0.0
    %1280 = vmatpush.msra.mxu0 0.0
    %1281 = vmatpush.msra.mxu0 0.0
    %1282 = vmatpush.msra.mxu0 0.0
    %1283 = vmatpush.msra.mxu0 0.0
    %1284 = vmatpush.msra.mxu0 0.0
    %1285 = vmatpush.msra.mxu0 %v1265
    %1286 = vmatpush.msra.mxu0 %v1263
    %1287 = vmatmul.f32.gmra.mxu0 %v1269
    %v1288 = vpop.f32.mrf.mxu0
    %v1289 = vadd.f32 0.0, %v1288
    %1290 = vdwg.mxu0
    %1293 = vrot.lane.b32.xlu0 %v283, 120
    %v1294 = vpop.permute.xlu0 %1293
    %1295 = vrot.lane.b32.xlu0 %v286, 120
    %v1296 = vpop.permute.xlu0 %1295
    %v1300 = vsel %vm913, %v1259, 0
    %1302 = vmatpush.msra.mxu0 0.0
    %1303 = vmatpush.msra.mxu0 0.0
    %1304 = vmatpush.msra.mxu0 0.0
    %1305 = vmatpush.msra.mxu0 0.0
    %1306 = vmatpush.msra.mxu0 0.0
    %1307 = vmatpush.msra.mxu0 0.0
    %1308 = vmatpush.msra.mxu0 0.0
    %1309 = vmatpush.msra.mxu0 0.0
    %1310 = vmatpush.msra.mxu0 0.0
    %1311 = vmatpush.msra.mxu0 0.0
    %1312 = vmatpush.msra.mxu0 0.0
    %1313 = vmatpush.msra.mxu0 0.0
    %1314 = vmatpush.msra.mxu0 0.0
    %1315 = vmatpush.msra.mxu0 0.0
    %1316 = vmatpush.msra.mxu0 %v1296
    %1317 = vmatpush.msra.mxu0 %v1294
    %1318 = vmatmul.f32.gmra.mxu0 %v1300
    %v1319 = vpop.f32.mrf.mxu0
    %v1320 = vadd.f32 0.0, %v1319
    %1321 = vdwg.mxu0
    %1322 = vrot.lane.b32.xlu0 %v1046, 112
    %v1323 = vpop.permute.xlu0 %1322
    %1324 = vrot.lane.b32.xlu0 %v225, 112
    %v1325 = vpop.permute.xlu0 %1324
    %1326 = vrot.lane.b32.xlu0 %v228, 112
    %v1327 = vpop.permute.xlu0 %1326
    %v1328 = vsel %vm373, %v1323, 0
    %v1330 = vsel %vm373, %v1325, 0
    %v1332 = vsel %vm373, %v1327, 0
    %1334 = vmatpush.xpose.msra.mxu0 0.0
    %1335 = vmatpush.xpose.msra.mxu0 0.0
    %1336 = vmatpush.xpose.msra.mxu0 0.0
    %1337 = vmatpush.xpose.msra.mxu0 0.0
    %1338 = vmatpush.xpose.msra.mxu0 0.0
    %1339 = vmatpush.xpose.msra.mxu0 0.0
    %1340 = vmatpush.xpose.msra.mxu0 0.0
    %1341 = vmatpush.xpose.msra.mxu0 0.0
    %1342 = vmatpush.xpose.msra.mxu0 0.0
    %1343 = vmatpush.xpose.msra.mxu0 0.0
    %1344 = vmatpush.xpose.msra.mxu0 0.0
    %1345 = vmatpush.xpose.msra.mxu0 0.0
    %1346 = vmatpush.xpose.msra.mxu0 0.0
    %1347 = vmatpush.xpose.msra.mxu0 0.0
    %1348 = vmatpush.xpose.msra.mxu0 %v1332
    %1349 = vmatpush.xpose.msra.mxu0 %v1330
    %1350 = vmatmul.f32.gmra.mxu0 %v1328
    %v1351 = vpop.f32.mrf.mxu0
    %v1352 = vadd.f32 0.0, %v1351
    %1353 = vdwg.mxu0
    %1354 = vrot.lane.b32.xlu0 %v1047, 112
    %v1355 = vpop.permute.xlu0 %1354
    %1356 = vrot.lane.b32.xlu0 %v231, 112
    %v1357 = vpop.permute.xlu0 %1356
    %1358 = vrot.lane.b32.xlu0 %v234, 112
    %v1359 = vpop.permute.xlu0 %1358
    %v1360 = vsel %vm373, %v1355, 0
    %v1362 = vsel %vm373, %v1357, 0
    %v1364 = vsel %vm373, %v1359, 0
    %1366 = vmatpush.xpose.msra.mxu0 0.0
    %1367 = vmatpush.xpose.msra.mxu0 0.0
    %1368 = vmatpush.xpose.msra.mxu0 0.0
    %1369 = vmatpush.xpose.msra.mxu0 0.0
    %1370 = vmatpush.xpose.msra.mxu0 0.0
    %1371 = vmatpush.xpose.msra.mxu0 0.0
    %1372 = vmatpush.xpose.msra.mxu0 0.0
    %1373 = vmatpush.xpose.msra.mxu0 0.0
    %1374 = vmatpush.xpose.msra.mxu0 0.0
    %1375 = vmatpush.xpose.msra.mxu0 0.0
    %1376 = vmatpush.xpose.msra.mxu0 0.0
    %1377 = vmatpush.xpose.msra.mxu0 0.0
    %1378 = vmatpush.xpose.msra.mxu0 0.0
    %1379 = vmatpush.xpose.msra.mxu0 0.0
    %1380 = vmatpush.xpose.msra.mxu0 %v1364
    %1381 = vmatpush.xpose.msra.mxu0 %v1362
    %1382 = vmatmul.f32.gmra.mxu0 %v1360
    %v1383 = vpop.f32.mrf.mxu0
    %v1384 = vadd.f32 0.0, %v1383
    %1385 = vdwg.mxu0
    %v1386 = vsel %vm913, %v1352, -inf
    %1387 = vmax.xlane.f32.xlu0 %v1386
    %v1388 = vpop.xlane.xlu0 %1387
    %v1389 = vsel %vm913, %v1384, -inf
    %1390 = vmax.xlane.f32.xlu0 %v1389
    %v1391 = vpop.xlane.xlu0 %1390
    %v1392 = vsub.f32 %v1352, %v1388
    %v1393 = vsub.f32 %v1384, %v1391
    %v1394 = vmul.f32 %v1392, 1.442695
    %v1395 = vpow.pop %v1394
    %v1396 = vmul.f32 %v1393, 1.442695
    %v1397 = vpow.pop %v1396
    %v1398 = vsel %vm913, %v1395, 0.0
    %1399 = vadd.xlane.f32.xlu0 %v1398
    %v1400 = vpop.xlane.xlu0 %1399
    %v1401 = vsel %vm913, %v1397, 0.0
    %1402 = vadd.xlane.f32.xlu0 %v1401
    %v1403 = vpop.xlane.xlu0 %1402
    %v1404 = vrcp.pop %v1400
    %v1405 = vrcp.pop %v1403
    %v1406 = vmul.f32 %v1395, %v1404
    %v1407 = vmul.f32 %v1397, %v1405
    %1408 = vrot.lane.b32.xlu0 %v277, 112
    %v1409 = vpop.permute.xlu0 %1408
    %1410 = vrot.lane.b32.xlu0 %v280, 112
    %v1411 = vpop.permute.xlu0 %1410
    %v1415 = vsel %vm913, %v1406, 0
    %1417 = vmatpush.msra.mxu0 0.0
    %1418 = vmatpush.msra.mxu0 0.0
    %1419 = vmatpush.msra.mxu0 0.0
    %1420 = vmatpush.msra.mxu0 0.0
    %1421 = vmatpush.msra.mxu0 0.0
    %1422 = vmatpush.msra.mxu0 0.0
    %1423 = vmatpush.msra.mxu0 0.0
    %1424 = vmatpush.msra.mxu0 0.0
    %1425 = vmatpush.msra.mxu0 0.0
    %1426 = vmatpush.msra.mxu0 0.0
    %1427 = vmatpush.msra.mxu0 0.0
    %1428 = vmatpush.msra.mxu0 0.0
    %1429 = vmatpush.msra.mxu0 0.0
    %1430 = vmatpush.msra.mxu0 0.0
    %1431 = vmatpush.msra.mxu0 %v1411
    %1432 = vmatpush.msra.mxu0 %v1409
    %1433 = vmatmul.f32.gmra.mxu0 %v1415
    %v1434 = vpop.f32.mrf.mxu0
    %v1435 = vadd.f32 0.0, %v1434
    %1436 = vdwg.mxu0
    %1437 = vrot.lane.b32.xlu0 %v283, 112
    %v1438 = vpop.permute.xlu0 %1437
    %1439 = vrot.lane.b32.xlu0 %v286, 112
    %v1440 = vpop.permute.xlu0 %1439
    %v1444 = vsel %vm913, %v1407, 0
    %1446 = vmatpush.msra.mxu0 0.0
    %1447 = vmatpush.msra.mxu0 0.0
    %1448 = vmatpush.msra.mxu0 0.0
    %1449 = vmatpush.msra.mxu0 0.0
    %1450 = vmatpush.msra.mxu0 0.0
    %1451 = vmatpush.msra.mxu0 0.0
    %1452 = vmatpush.msra.mxu0 0.0
    %1453 = vmatpush.msra.mxu0 0.0
    %1454 = vmatpush.msra.mxu0 0.0
    %1455 = vmatpush.msra.mxu0 0.0
    %1456 = vmatpush.msra.mxu0 0.0
    %1457 = vmatpush.msra.mxu0 0.0
    %1458 = vmatpush.msra.mxu0 0.0
    %1459 = vmatpush.msra.mxu0 0.0
    %1460 = vmatpush.msra.mxu0 %v1440
    %1461 = vmatpush.msra.mxu0 %v1438
    %1462 = vmatmul.f32.gmra.mxu0 %v1444
    %v1463 = vpop.f32.mrf.mxu0
    %v1464 = vadd.f32 0.0, %v1463
    %1465 = vdwg.mxu0
    %1466 = vrot.lane.b32.xlu0 %v1046, 104
    %v1467 = vpop.permute.xlu0 %1466
    %1468 = vrot.lane.b32.xlu0 %v225, 104
    %v1469 = vpop.permute.xlu0 %1468
    %1470 = vrot.lane.b32.xlu0 %v228, 104
    %v1471 = vpop.permute.xlu0 %1470
    %v1472 = vsel %vm373, %v1467, 0
    %v1474 = vsel %vm373, %v1469, 0
    %v1476 = vsel %vm373, %v1471, 0
    %1478 = vmatpush.xpose.msra.mxu0 0.0
    %1479 = vmatpush.xpose.msra.mxu0 0.0
    %1480 = vmatpush.xpose.msra.mxu0 0.0
    %1481 = vmatpush.xpose.msra.mxu0 0.0
    %1482 = vmatpush.xpose.msra.mxu0 0.0
    %1483 = vmatpush.xpose.msra.mxu0 0.0
    %1484 = vmatpush.xpose.msra.mxu0 0.0
    %1485 = vmatpush.xpose.msra.mxu0 0.0
    %1486 = vmatpush.xpose.msra.mxu0 0.0
    %1487 = vmatpush.xpose.msra.mxu0 0.0
    %1488 = vmatpush.xpose.msra.mxu0 0.0
    %1489 = vmatpush.xpose.msra.mxu0 0.0
    %1490 = vmatpush.xpose.msra.mxu0 0.0
    %1491 = vmatpush.xpose.msra.mxu0 0.0
    %1492 = vmatpush.xpose.msra.mxu0 %v1476
    %1493 = vmatpush.xpose.msra.mxu0 %v1474
    %1494 = vmatmul.f32.gmra.mxu0 %v1472
    %v1495 = vpop.f32.mrf.mxu0
    %v1496 = vadd.f32 0.0, %v1495
    %1497 = vdwg.mxu0
    %1498 = vrot.lane.b32.xlu0 %v1047, 104
    %v1499 = vpop.permute.xlu0 %1498
    %1500 = vrot.lane.b32.xlu0 %v231, 104
    %v1501 = vpop.permute.xlu0 %1500
    %1502 = vrot.lane.b32.xlu0 %v234, 104
    %v1503 = vpop.permute.xlu0 %1502
    %v1504 = vsel %vm373, %v1499, 0
    %v1506 = vsel %vm373, %v1501, 0
    %v1508 = vsel %vm373, %v1503, 0
    %1510 = vmatpush.xpose.msra.mxu0 0.0
    %1511 = vmatpush.xpose.msra.mxu0 0.0
    %1512 = vmatpush.xpose.msra.mxu0 0.0
    %1513 = vmatpush.xpose.msra.mxu0 0.0
    %1514 = vmatpush.xpose.msra.mxu0 0.0
    %1515 = vmatpush.xpose.msra.mxu0 0.0
    %1516 = vmatpush.xpose.msra.mxu0 0.0
    %1517 = vmatpush.xpose.msra.mxu0 0.0
    %1518 = vmatpush.xpose.msra.mxu0 0.0
    %1519 = vmatpush.xpose.msra.mxu0 0.0
    %1520 = vmatpush.xpose.msra.mxu0 0.0
    %1521 = vmatpush.xpose.msra.mxu0 0.0
    %1522 = vmatpush.xpose.msra.mxu0 0.0
    %1523 = vmatpush.xpose.msra.mxu0 0.0
    %1524 = vmatpush.xpose.msra.mxu0 %v1508
    %1525 = vmatpush.xpose.msra.mxu0 %v1506
    %1526 = vmatmul.f32.gmra.mxu0 %v1504
    %v1527 = vpop.f32.mrf.mxu0
    %v1528 = vadd.f32 0.0, %v1527
    %1529 = vdwg.mxu0
    %v1530 = vsel %vm913, %v1496, -inf
    %1531 = vmax.xlane.f32.xlu0 %v1530
    %v1532 = vpop.xlane.xlu0 %1531
    %v1533 = vsel %vm913, %v1528, -inf
    %1534 = vmax.xlane.f32.xlu0 %v1533
    %v1535 = vpop.xlane.xlu0 %1534
    %v1536 = vsub.f32 %v1496, %v1532
    %v1537 = vsub.f32 %v1528, %v1535
    %v1538 = vmul.f32 %v1536, 1.442695
    %v1539 = vpow.pop %v1538
    %v1540 = vmul.f32 %v1537, 1.442695
    %v1541 = vpow.pop %v1540
    %v1542 = vsel %vm913, %v1539, 0.0
    %1543 = vadd.xlane.f32.xlu0 %v1542
    %v1544 = vpop.xlane.xlu0 %1543
    %v1545 = vsel %vm913, %v1541, 0.0
    %1546 = vadd.xlane.f32.xlu0 %v1545
    %v1547 = vpop.xlane.xlu0 %1546
    %v1548 = vrcp.pop %v1544
    %v1549 = vrcp.pop %v1547
    %v1550 = vmul.f32 %v1539, %v1548
    %v1551 = vmul.f32 %v1541, %v1549
    %1552 = vrot.lane.b32.xlu0 %v277, 104
    %v1553 = vpop.permute.xlu0 %1552
    %1554 = vrot.lane.b32.xlu0 %v280, 104
    %v1555 = vpop.permute.xlu0 %1554
    %v1559 = vsel %vm913, %v1550, 0
    %1561 = vmatpush.msra.mxu0 0.0
    %1562 = vmatpush.msra.mxu0 0.0
    %1563 = vmatpush.msra.mxu0 0.0
    %1564 = vmatpush.msra.mxu0 0.0
    %1565 = vmatpush.msra.mxu0 0.0
    %1566 = vmatpush.msra.mxu0 0.0
    %1567 = vmatpush.msra.mxu0 0.0
    %1568 = vmatpush.msra.mxu0 0.0
    %1569 = vmatpush.msra.mxu0 0.0
    %1570 = vmatpush.msra.mxu0 0.0
    %1571 = vmatpush.msra.mxu0 0.0
    %1572 = vmatpush.msra.mxu0 0.0
    %1573 = vmatpush.msra.mxu0 0.0
    %1574 = vmatpush.msra.mxu0 0.0
    %1575 = vmatpush.msra.mxu0 %v1555
    %1576 = vmatpush.msra.mxu0 %v1553
    %1577 = vmatmul.f32.gmra.mxu0 %v1559
    %v1578 = vpop.f32.mrf.mxu0
    %v1579 = vadd.f32 0.0, %v1578
    %1580 = vdwg.mxu0
    %1581 = vrot.lane.b32.xlu0 %v283, 104
    %v1582 = vpop.permute.xlu0 %1581
    %1583 = vrot.lane.b32.xlu0 %v286, 104
    %v1584 = vpop.permute.xlu0 %1583
    %v1588 = vsel %vm913, %v1551, 0
    %1590 = vmatpush.msra.mxu0 0.0
    %1591 = vmatpush.msra.mxu0 0.0
    %1592 = vmatpush.msra.mxu0 0.0
    %1593 = vmatpush.msra.mxu0 0.0
    %1594 = vmatpush.msra.mxu0 0.0
    %1595 = vmatpush.msra.mxu0 0.0
    %1596 = vmatpush.msra.mxu0 0.0
    %1597 = vmatpush.msra.mxu0 0.0
    %1598 = vmatpush.msra.mxu0 0.0
    %1599 = vmatpush.msra.mxu0 0.0
    %1600 = vmatpush.msra.mxu0 0.0
    %1601 = vmatpush.msra.mxu0 0.0
    %1602 = vmatpush.msra.mxu0 0.0
    %1603 = vmatpush.msra.mxu0 0.0
    %1604 = vmatpush.msra.mxu0 %v1584
    %1605 = vmatpush.msra.mxu0 %v1582
    %1606 = vmatmul.f32.gmra.mxu0 %v1588
    %v1607 = vpop.f32.mrf.mxu0
    %v1608 = vadd.f32 0.0, %v1607
    %1609 = vdwg.mxu0
    %1612 = vrot.lane.b32.xlu0 %v1289, 8
    %v1613 = vpop.permute.xlu0 %1612
    %1614 = vrot.lane.b32.xlu0 %v1320, 8
    %v1615 = vpop.permute.xlu0 %1614
    %1620 = vrot.lane.b32.xlu0 %v1435, 16
    %v1621 = vpop.permute.xlu0 %1620
    %1622 = vrot.lane.b32.xlu0 %v1464, 16
    %v1623 = vpop.permute.xlu0 %1622
    %1628 = vrot.lane.b32.xlu0 %v1579, 24
    %v1629 = vpop.permute.xlu0 %1628
    %1630 = vrot.lane.b32.xlu0 %v1608, 24
    %v1631 = vpop.permute.xlu0 %1630
    %v1634 = vsel %vm373, %v1149, %v1613
    %v1635 = vsel %vm373, %v1172, %v1615
    %v1636 = vsel %vm913, %v1634, %v1621
    %v1637 = vsel %vm913, %v1635, %v1623
    %v1638 = vsel %vm916, %v1636, %v1629
    %v1639 = vsel %vm916, %v1637, %v1631
    %v1641 = vperm.slane %v126, 0
    %v1644 = vsel %vm198, %v1638, 0
    %v1647 = vsel %vm198, %v1639, 0
    %1649 = vmatpush.msra.mxu0 0.0
    %1650 = vmatpush.msra.mxu0 0.0
    %1651 = vmatpush.msra.mxu0 0.0
    %1652 = vmatpush.msra.mxu0 0.0
    %1653 = vmatpush.msra.mxu0 0.0
    %1654 = vmatpush.msra.mxu0 0.0
    %1655 = vmatpush.msra.mxu0 0.0
    %1656 = vmatpush.msra.mxu0 0.0
    %1657 = vmatpush.msra.mxu0 0.0
    %1658 = vmatpush.msra.mxu0 0.0
    %1659 = vmatpush.msra.mxu0 0.0
    %1660 = vmatpush.msra.mxu0 0.0
    %1661 = vmatpush.msra.mxu0 %v125
    %1662 = vmatpush.msra.mxu0 %v124
    %1663 = vmatpush.msra.mxu0 %v123
    %1664 = vmatpush.msra.mxu0 %v122
    %1665 = vmatmul.f32.gmra.mxu0 %v1644
    %v1666 = vpop.f32.mrf.mxu0
    %v1667 = vadd.f32 %v1641, %v1666
    %1668 = vmatmul.f32.gmra.mxu0 %v1647
    %v1669 = vpop.f32.mrf.mxu0
    %v1670 = vadd.f32 %v1641, %v1669
    %1671 = vdwg.mxu0
    %v1672 = vadd.f32 %v1012, %v1667
    %v1673 = vadd.f32 %v1013, %v1670
    %v1674 = vsel %vm198, %v1672, 0.0
    %1675 = vadd.xlane.f32.xlu0 %v1674
    %v1676 = vpop.xlane.xlu0 %1675
    %v1677 = vsel %vm198, %v1673, 0.0
    %1678 = vadd.xlane.f32.xlu0 %v1677
    %v1679 = vpop.xlane.xlu0 %1678
    %v1680 = vmul.f32 %v1676, %v965
    %v1681 = vmul.f32 %v1679, %v965
    %v1682 = vsub.f32 %v1672, %v1680
    %v1683 = vsub.f32 %v1673, %v1681
    %v1684 = vmul.f32 %v1682, %v1682
    %v1685 = vmul.f32 %v1683, %v1683
    %v1686 = vsel %vm198, %v1684, 0.0
    %1687 = vadd.xlane.f32.xlu0 %v1686
    %v1688 = vpop.xlane.xlu0 %1687
    %v1689 = vsel %vm198, %v1685, 0.0
    %1690 = vadd.xlane.f32.xlu0 %v1689
    %v1691 = vpop.xlane.xlu0 %1690
    %v1692 = vmul.f32 %v1688, %v965
    %v1693 = vmul.f32 %v1691, %v965
    %v1694 = vadd.f32 %v1692, 1e-05
    %v1695 = vadd.f32 %v1693, 1e-05
    %v1696 = vrsqrt.pop %v1694
    %v1697 = vmul.f32 %v1696, %v1694
    %v1698 = vmul.f32 %v1697, %v1696
    %v1699 = vmul.f32 0.5, %v1698
    %v1700 = vsub.f32 1.5, %v1699
    %v1701 = vmul.f32 %v1696, %v1700
    %vm1702 = vweird.f32 %v1694
    %vm1703 = vweird.f32 %v1696
    %vm1704 = vmor %vm1702, %vm1703
    %v1705 = vsel %vm1704, %v1696, %v1701
    %v1706 = vrsqrt.pop %v1695
    %v1707 = vmul.f32 %v1706, %v1695
    %v1708 = vmul.f32 %v1707, %v1706
    %v1709 = vmul.f32 0.5, %v1708
    %v1710 = vsub.f32 1.5, %v1709
    %v1711 = vmul.f32 %v1706, %v1710
    %vm1712 = vweird.f32 %v1695
    %vm1713 = vweird.f32 %v1706
    %vm1714 = vmor %vm1712, %vm1713
    %v1715 = vsel %vm1714, %v1706, %v1711
    %v1716 = vmul.f32 %v1682, %v1705
    %v1717 = vmul.f32 %v1683, %v1715
    %v1719 = vperm.slane %v143, 0
    %v1721 = vmul.f32 %v1716, %v1719
    %v1722 = vmul.f32 %v1717, %v1719
    %v1724 = vperm.slane %v144, 0
    %v1726 = vadd.f32 %v1721, %v1724
    %v1727 = vadd.f32 %v1722, %v1724
    %v1729 = vperm.slane %v131, 0
    %v1732 = vsel %vm198, %v1726, 0
    %v1735 = vsel %vm198, %v1727, 0
    %1737 = vmatpush.msra.mxu0 0.0
    %1738 = vmatpush.msra.mxu0 0.0
    %1739 = vmatpush.msra.mxu0 0.0
    %1740 = vmatpush.msra.mxu0 0.0
    %1741 = vmatpush.msra.mxu0 0.0
    %1742 = vmatpush.msra.mxu0 0.0
    %1743 = vmatpush.msra.mxu0 0.0
    %1744 = vmatpush.msra.mxu0 0.0
    %1745 = vmatpush.msra.mxu0 0.0
    %1746 = vmatpush.msra.mxu0 0.0
    %1747 = vmatpush.msra.mxu0 0.0
    %1748 = vmatpush.msra.mxu0 0.0
    %1749 = vmatpush.msra.mxu0 %v130
    %1750 = vmatpush.msra.mxu0 %v129
    %1751 = vmatpush.msra.mxu0 %v128
    %1752 = vmatpush.msra.mxu0 %v127
    %1753 = vmatmul.f32.gmra.mxu0 %v1732
    %v1754 = vpop.f32.mrf.mxu0
    %v1755 = vadd.f32 %v1729, %v1754
    %1756 = vmatmul.f32.gmra.mxu0 %v1735
    %v1757 = vpop.f32.mrf.mxu0
    %v1758 = vadd.f32 %v1729, %v1757
    %1759 = vdwg.mxu0
    %v1760 = vmax.f32 %v1755, 0.0
    %v1761 = vmax.f32 %v1758, 0.0
    %v1763 = vperm.slane %v140, 0
    %vm1765 = vcmask 523264
    %v1767 = vsel %vm1765, %v1760, 0
    %v1770 = vsel %vm1765, %v1761, 0
    %1772 = vmatpush.msra.mxu0 0.0
    %1773 = vmatpush.msra.mxu0 0.0
    %1774 = vmatpush.msra.mxu0 0.0
    %1775 = vmatpush.msra.mxu0 0.0
    %1776 = vmatpush.msra.mxu0 0.0
    %1777 = vmatpush.msra.mxu0 0.0
    %1778 = vmatpush.msra.mxu0 0.0
    %1779 = vmatpush.msra.mxu0 0.0
    %1780 = vmatpush.msra.mxu0 %v139
    %1781 = vmatpush.msra.mxu0 %v138
    %1782 = vmatpush.msra.mxu0 %v137
    %1783 = vmatpush.msra.mxu0 %v136
    %1784 = vmatpush.msra.mxu0 %v135
    %1785 = vmatpush.msra.mxu0 %v134
    %1786 = vmatpush.msra.mxu0 %v133
    %1787 = vmatpush.msra.mxu0 %v132
    %1788 = vmatmul.f32.gmra.mxu0 %v1767
    %v1789 = vpop.f32.mrf.mxu0
    %v1790 = vadd.f32 %v1763, %v1789
    %1791 = vmatmul.f32.gmra.mxu0 %v1770
    %v1792 = vpop.f32.mrf.mxu0
    %v1793 = vadd.f32 %v1763, %v1792
    %1794 = vdwg.mxu0
    %v1795 = vadd.f32 %v1726, %v1790
    %v1796 = vadd.f32 %v1727, %v1793
    %v1797 = vsel %vm198, %v1795, 0.0
    %1798 = vadd.xlane.f32.xlu0 %v1797
    %v1799 = vpop.xlane.xlu0 %1798
    %v1800 = vsel %vm198, %v1796, 0.0
    %1801 = vadd.xlane.f32.xlu0 %v1800
    %v1802 = vpop.xlane.xlu0 %1801
    %v1803 = vmul.f32 %v1799, %v965
    %v1804 = vmul.f32 %v1802, %v965
    %v1805 = vsub.f32 %v1795, %v1803
    %v1806 = vsub.f32 %v1796, %v1804
    %v1807 = vmul.f32 %v1805, %v1805
    %v1808 = vmul.f32 %v1806, %v1806
    %v1809 = vsel %vm198, %v1807, 0.0
    %1810 = vadd.xlane.f32.xlu0 %v1809
    %v1811 = vpop.xlane.xlu0 %1810
    %v1812 = vsel %vm198, %v1808, 0.0
    %1813 = vadd.xlane.f32.xlu0 %v1812
    %v1814 = vpop.xlane.xlu0 %1813
    %v1815 = vmul.f32 %v1811, %v965
    %v1816 = vmul.f32 %v1814, %v965
    %v1817 = vadd.f32 %v1815, 1e-05
    %v1818 = vadd.f32 %v1816, 1e-05
    %v1819 = vrsqrt.pop %v1817
    %v1820 = vmul.f32 %v1819, %v1817
    %v1821 = vmul.f32 %v1820, %v1819
    %v1822 = vmul.f32 0.5, %v1821
    %v1823 = vsub.f32 1.5, %v1822
    %v1824 = vmul.f32 %v1819, %v1823
    %vm1825 = vweird.f32 %v1817
    %vm1826 = vweird.f32 %v1819
    %vm1827 = vmor %vm1825, %vm1826
    %v1828 = vsel %vm1827, %v1819, %v1824
    %v1829 = vrsqrt.pop %v1818
    %v1830 = vmul.f32 %v1829, %v1818
    %v1831 = vmul.f32 %v1830, %v1829
    %v1832 = vmul.f32 0.5, %v1831
    %v1833 = vsub.f32 1.5, %v1832
    %v1834 = vmul.f32 %v1829, %v1833
    %vm1835 = vweird.f32 %v1818
    %vm1836 = vweird.f32 %v1829
    %vm1837 = vmor %vm1835, %vm1836
    %v1838 = vsel %vm1837, %v1829, %v1834
    %v1839 = vmul.f32 %v1805, %v1828
    %v1840 = vmul.f32 %v1806, %v1838
    %v1842 = vperm.slane %v145, 0
    %v1844 = vmul.f32 %v1839, %v1842
    %v1845 = vmul.f32 %v1840, %v1842
    %v1847 = vperm.slane %v146, 0
    %v1849 = vadd.f32 %v1844, %v1847
    %v1850 = vadd.f32 %v1845, %v1847
    %v1851 = vadd.f32 %v1849, %v162
    %v1852 = vadd.f32 %v1850, %v165
    %v1854 = vsel %vm198, %v1851, 0
    %v1857 = vsel %vm198, %v1852, 0
    %1859 = vmatpush.msra.mxu0 0.0
    %1860 = vmatpush.msra.mxu0 0.0
    %1861 = vmatpush.msra.mxu0 0.0
    %1862 = vmatpush.msra.mxu0 0.0
    %1863 = vmatpush.msra.mxu0 0.0
    %1864 = vmatpush.msra.mxu0 0.0
    %1865 = vmatpush.msra.mxu0 0.0
    %1866 = vmatpush.msra.mxu0 0.0
    %1867 = vmatpush.msra.mxu0 0.0
    %1868 = vmatpush.msra.mxu0 0.0
    %1869 = vmatpush.msra.mxu0 0.0
    %1870 = vmatpush.msra.mxu0 0.0
    %1871 = vmatpush.msra.mxu0 %v110
    %1872 = vmatpush.msra.mxu0 %v109
    %1873 = vmatpush.msra.mxu0 %v108
    %1874 = vmatpush.msra.mxu0 %v107
    %1875 = vmatmul.f32.gmra.mxu0 %v1854
    %v1876 = vpop.f32.mrf.mxu0
    %v1877 = vadd.f32 %v291, %v1876
    %1878 = vmatmul.f32.gmra.mxu0 %v1857
    %v1879 = vpop.f32.mrf.mxu0
    %v1880 = vadd.f32 %v291, %v1879
    %1881 = vdwg.mxu0
    %v1883 = vsel %vm198, %v1849, 0
    %v1886 = vsel %vm198, %v1850, 0
    %1888 = vmatpush.msra.mxu0 0.0
    %1889 = vmatpush.msra.mxu0 0.0
    %1890 = vmatpush.msra.mxu0 0.0
    %1891 = vmatpush.msra.mxu0 0.0
    %1892 = vmatpush.msra.mxu0 0.0
    %1893 = vmatpush.msra.mxu0 0.0
    %1894 = vmatpush.msra.mxu0 0.0
    %1895 = vmatpush.msra.mxu0 0.0
    %1896 = vmatpush.msra.mxu0 0.0
    %1897 = vmatpush.msra.mxu0 0.0
    %1898 = vmatpush.msra.mxu0 0.0
    %1899 = vmatpush.msra.mxu0 0.0
    %1900 = vmatpush.msra.mxu0 %v333
    %1901 = vmatpush.msra.mxu0 %v331
    %1902 = vmatpush.msra.mxu0 %v329
    %1903 = vmatpush.msra.mxu0 %v327
    %1904 = vmatmul.f32.gmra.mxu0 %v1883
    %v1905 = vpop.f32.mrf.mxu0
    %v1906 = vadd.f32 %v339, %v1905
    %1907 = vmatmul.f32.gmra.mxu0 %v1886
    %v1908 = vpop.f32.mrf.mxu0
    %v1909 = vadd.f32 %v339, %v1908
    %1910 = vdwg.mxu0
    %v1911 = vmul.f32 %v1877, 0.35355338
    %v1912 = vmul.f32 %v1880, 0.35355338
    %1914 = vrot.lane.b32.xlu0 %v1877, 96
    %v1915 = vpop.permute.xlu0 %1914
    %v1917 = vsel %vm373, %v1911, 0
    %v1919 = vsel %vm373, %v1915, 0
    %1921 = vmatpush.xpose.msra.mxu0 0.0
    %1922 = vmatpush.xpose.msra.mxu0 0.0
    %1923 = vmatpush.xpose.msra.mxu0 0.0
    %1924 = vmatpush.xpose.msra.mxu0 0.0
    %1925 = vmatpush.xpose.msra.mxu0 0.0
    %1926 = vmatpush.xpose.msra.mxu0 0.0
    %1927 = vmatpush.xpose.msra.mxu0 0.0
    %1928 = vmatpush.xpose.msra.mxu0 0.0
    %1929 = vmatpush.xpose.msra.mxu0 0.0
    %1930 = vmatpush.xpose.msra.mxu0 0.0
    %1931 = vmatpush.xpose.msra.mxu0 0.0
    %1932 = vmatpush.xpose.msra.mxu0 0.0
    %1933 = vmatpush.xpose.msra.mxu0 0.0
    %1934 = vmatpush.xpose.msra.mxu0 0.0
    %1935 = vmatpush.xpose.msra.mxu0 0.0
    %1936 = vmatpush.xpose.msra.mxu0 %v1919
    %1937 = vmatmul.f32.gmra.mxu0 %v1917
    %v1938 = vpop.f32.mrf.mxu0
    %v1939 = vadd.f32 0.0, %v1938
    %1940 = vdwg.mxu0
    %1942 = vrot.lane.b32.xlu0 %v1880, 96
    %v1943 = vpop.permute.xlu0 %1942
    %v1945 = vsel %vm373, %v1912, 0
    %v1947 = vsel %vm373, %v1943, 0
    %1949 = vmatpush.xpose.msra.mxu0 0.0
    %1950 = vmatpush.xpose.msra.mxu0 0.0
    %1951 = vmatpush.xpose.msra.mxu0 0.0
    %1952 = vmatpush.xpose.msra.mxu0 0.0
    %1953 = vmatpush.xpose.msra.mxu0 0.0
    %1954 = vmatpush.xpose.msra.mxu0 0.0
    %1955 = vmatpush.xpose.msra.mxu0 0.0
    %1956 = vmatpush.xpose.msra.mxu0 0.0
    %1957 = vmatpush.xpose.msra.mxu0 0.0
    %1958 = vmatpush.xpose.msra.mxu0 0.0
    %1959 = vmatpush.xpose.msra.mxu0 0.0
    %1960 = vmatpush.xpose.msra.mxu0 0.0
    %1961 = vmatpush.xpose.msra.mxu0 0.0
    %1962 = vmatpush.xpose.msra.mxu0 0.0
    %1963 = vmatpush.xpose.msra.mxu0 0.0
    %1964 = vmatpush.xpose.msra.mxu0 %v1947
    %1965 = vmatmul.f32.gmra.mxu0 %v1945
    %v1966 = vpop.f32.mrf.mxu0
    %v1967 = vadd.f32 0.0, %v1966
    %1968 = vdwg.mxu0
    %v1969 = vsel %vm373, %v1939, -inf
    %1970 = vmax.xlane.f32.xlu0 %v1969
    %v1971 = vpop.xlane.xlu0 %1970
    %v1972 = vsel %vm373, %v1967, -inf
    %1973 = vmax.xlane.f32.xlu0 %v1972
    %v1974 = vpop.xlane.xlu0 %1973
    %v1975 = vsub.f32 %v1939, %v1971
    %v1976 = vsub.f32 %v1967, %v1974
    %v1977 = vmul.f32 %v1975, 1.442695
    %v1978 = vpow.pop %v1977
    %v1979 = vmul.f32 %v1976, 1.442695
    %v1980 = vpow.pop %v1979
    %v1981 = vsel %vm373, %v1978, 0.0
    %1982 = vadd.xlane.f32.xlu0 %v1981
    %v1983 = vpop.xlane.xlu0 %1982
    %v1984 = vsel %vm373, %v1980, 0.0
    %1985 = vadd.xlane.f32.xlu0 %v1984
    %v1986 = vpop.xlane.xlu0 %1985
    %v1987 = vrcp.pop %v1983
    %v1988 = vrcp.pop %v1986
    %v1989 = vmul.f32 %v1978, %v1987
    %v1990 = vmul.f32 %v1980, %v1988
    %v1992 = vsel %vm373, %v1989, 0
    %1994 = vmatpush.msra.mxu0 0.0
    %1995 = vmatpush.msra.mxu0 0.0
    %1996 = vmatpush.msra.mxu0 0.0
    %1997 = vmatpush.msra.mxu0 0.0
    %1998 = vmatpush.msra.mxu0 0.0
    %1999 = vmatpush.msra.mxu0 0.0
    %2000 = vmatpush.msra.mxu0 0.0
    %2001 = vmatpush.msra.mxu0 0.0
    %2002 = vmatpush.msra.mxu0 0.0
    %2003 = vmatpush.msra.mxu0 0.0
    %2004 = vmatpush.msra.mxu0 0.0
    %2005 = vmatpush.msra.mxu0 0.0
    %2006 = vmatpush.msra.mxu0 0.0
    %2007 = vmatpush.msra.mxu0 0.0
    %2008 = vmatpush.msra.mxu0 0.0
    %2009 = vmatpush.msra.mxu0 %v1906
    %2010 = vmatmul.f32.gmra.mxu0 %v1992
    %v2011 = vpop.f32.mrf.mxu0
    %v2012 = vadd.f32 0.0, %v2011
    %2013 = vdwg.mxu0
    %v2015 = vsel %vm373, %v1990, 0
    %2017 = vmatpush.msra.mxu0 0.0
    %2018 = vmatpush.msra.mxu0 0.0
    %2019 = vmatpush.msra.mxu0 0.0
    %2020 = vmatpush.msra.mxu0 0.0
    %2021 = vmatpush.msra.mxu0 0.0
    %2022 = vmatpush.msra.mxu0 0.0
    %2023 = vmatpush.msra.mxu0 0.0
    %2024 = vmatpush.msra.mxu0 0.0
    %2025 = vmatpush.msra.mxu0 0.0
    %2026 = vmatpush.msra.mxu0 0.0
    %2027 = vmatpush.msra.mxu0 0.0
    %2028 = vmatpush.msra.mxu0 0.0
    %2029 = vmatpush.msra.mxu0 0.0
    %2030 = vmatpush.msra.mxu0 0.0
    %2031 = vmatpush.msra.mxu0 0.0
    %2032 = vmatpush.msra.mxu0 %v1909
    %2033 = vmatmul.f32.gmra.mxu0 %v2015
    %v2034 = vpop.f32.mrf.mxu0
    %v2035 = vadd.f32 0.0, %v2034
    %2036 = vdwg.mxu0
    %2037 = vrot.lane.b32.xlu0 %v1911, 120
    %v2038 = vpop.permute.xlu0 %2037
    %2039 = vrot.lane.b32.xlu0 %v1877, 88
    %v2040 = vpop.permute.xlu0 %2039
    %v2041 = vsel %vm373, %v2038, 0
    %v2043 = vsel %vm373, %v2040, 0
    %2045 = vmatpush.xpose.msra.mxu0 0.0
    %2046 = vmatpush.xpose.msra.mxu0 0.0
    %2047 = vmatpush.xpose.msra.mxu0 0.0
    %2048 = vmatpush.xpose.msra.mxu0 0.0
    %2049 = vmatpush.xpose.msra.mxu0 0.0
    %2050 = vmatpush.xpose.msra.mxu0 0.0
    %2051 = vmatpush.xpose.msra.mxu0 0.0
    %2052 = vmatpush.xpose.msra.mxu0 0.0
    %2053 = vmatpush.xpose.msra.mxu0 0.0
    %2054 = vmatpush.xpose.msra.mxu0 0.0
    %2055 = vmatpush.xpose.msra.mxu0 0.0
    %2056 = vmatpush.xpose.msra.mxu0 0.0
    %2057 = vmatpush.xpose.msra.mxu0 0.0
    %2058 = vmatpush.xpose.msra.mxu0 0.0
    %2059 = vmatpush.xpose.msra.mxu0 0.0
    %2060 = vmatpush.xpose.msra.mxu0 %v2043
    %2061 = vmatmul.f32.gmra.mxu0 %v2041
    %v2062 = vpop.f32.mrf.mxu0
    %v2063 = vadd.f32 0.0, %v2062
    %2064 = vdwg.mxu0
    %2065 = vrot.lane.b32.xlu0 %v1912, 120
    %v2066 = vpop.permute.xlu0 %2065
    %2067 = vrot.lane.b32.xlu0 %v1880, 88
    %v2068 = vpop.permute.xlu0 %2067
    %v2069 = vsel %vm373, %v2066, 0
    %v2071 = vsel %vm373, %v2068, 0
    %2073 = vmatpush.xpose.msra.mxu0 0.0
    %2074 = vmatpush.xpose.msra.mxu0 0.0
    %2075 = vmatpush.xpose.msra.mxu0 0.0
    %2076 = vmatpush.xpose.msra.mxu0 0.0
    %2077 = vmatpush.xpose.msra.mxu0 0.0
    %2078 = vmatpush.xpose.msra.mxu0 0.0
    %2079 = vmatpush.xpose.msra.mxu0 0.0
    %2080 = vmatpush.xpose.msra.mxu0 0.0
    %2081 = vmatpush.xpose.msra.mxu0 0.0
    %2082 = vmatpush.xpose.msra.mxu0 0.0
    %2083 = vmatpush.xpose.msra.mxu0 0.0
    %2084 = vmatpush.xpose.msra.mxu0 0.0
    %2085 = vmatpush.xpose.msra.mxu0 0.0
    %2086 = vmatpush.xpose.msra.mxu0 0.0
    %2087 = vmatpush.xpose.msra.mxu0 0.0
    %2088 = vmatpush.xpose.msra.mxu0 %v2071
    %2089 = vmatmul.f32.gmra.mxu0 %v2069
    %v2090 = vpop.f32.mrf.mxu0
    %v2091 = vadd.f32 0.0, %v2090
    %2092 = vdwg.mxu0
    %v2093 = vsel %vm373, %v2063, -inf
    %2094 = vmax.xlane.f32.xlu0 %v2093
    %v2095 = vpop.xlane.xlu0 %2094
    %v2096 = vsel %vm373, %v2091, -inf
    %2097 = vmax.xlane.f32.xlu0 %v2096
    %v2098 = vpop.xlane.xlu0 %2097
    %v2099 = vsub.f32 %v2063, %v2095
    %v2100 = vsub.f32 %v2091, %v2098
    %v2101 = vmul.f32 %v2099, 1.442695
    %v2102 = vpow.pop %v2101
    %v2103 = vmul.f32 %v2100, 1.442695
    %v2104 = vpow.pop %v2103
    %v2105 = vsel %vm373, %v2102, 0.0
    %2106 = vadd.xlane.f32.xlu0 %v2105
    %v2107 = vpop.xlane.xlu0 %2106
    %v2108 = vsel %vm373, %v2104, 0.0
    %2109 = vadd.xlane.f32.xlu0 %v2108
    %v2110 = vpop.xlane.xlu0 %2109
    %v2111 = vrcp.pop %v2107
    %v2112 = vrcp.pop %v2110
    %v2113 = vmul.f32 %v2102, %v2111
    %v2114 = vmul.f32 %v2104, %v2112
    %2116 = vrot.lane.b32.xlu0 %v1906, 120
    %v2117 = vpop.permute.xlu0 %2116
    %v2120 = vsel %vm373, %v2113, 0
    %2122 = vmatpush.msra.mxu0 0.0
    %2123 = vmatpush.msra.mxu0 0.0
    %2124 = vmatpush.msra.mxu0 0.0
    %2125 = vmatpush.msra.mxu0 0.0
    %2126 = vmatpush.msra.mxu0 0.0
    %2127 = vmatpush.msra.mxu0 0.0
    %2128 = vmatpush.msra.mxu0 0.0
    %2129 = vmatpush.msra.mxu0 0.0
    %2130 = vmatpush.msra.mxu0 0.0
    %2131 = vmatpush.msra.mxu0 0.0
    %2132 = vmatpush.msra.mxu0 0.0
    %2133 = vmatpush.msra.mxu0 0.0
    %2134 = vmatpush.msra.mxu0 0.0
    %2135 = vmatpush.msra.mxu0 0.0
    %2136 = vmatpush.msra.mxu0 0.0
    %2137 = vmatpush.msra.mxu0 %v2117
    %2138 = vmatmul.f32.gmra.mxu0 %v2120
    %v2139 = vpop.f32.mrf.mxu0
    %v2140 = vadd.f32 0.0, %v2139
    %2141 = vdwg.mxu0
    %2143 = vrot.lane.b32.xlu0 %v1909, 120
    %v2144 = vpop.permute.xlu0 %2143
    %v2147 = vsel %vm373, %v2114, 0
    %2149 = vmatpush.msra.mxu0 0.0
    %2150 = vmatpush.msra.mxu0 0.0
    %2151 = vmatpush.msra.mxu0 0.0
    %2152 = vmatpush.msra.mxu0 0.0
    %2153 = vmatpush.msra.mxu0 0.0
    %2154 = vmatpush.msra.mxu0 0.0
    %2155 = vmatpush.msra.mxu0 0.0
    %2156 = vmatpush.msra.mxu0 0.0
    %2157 = vmatpush.msra.mxu0 0.0
    %2158 = vmatpush.msra.mxu0 0.0
    %2159 = vmatpush.msra.mxu0 0.0
    %2160 = vmatpush.msra.mxu0 0.0
    %2161 = vmatpush.msra.mxu0 0.0
    %2162 = vmatpush.msra.mxu0 0.0
    %2163 = vmatpush.msra.mxu0 0.0
    %2164 = vmatpush.msra.mxu0 %v2144
    %2165 = vmatmul.f32.gmra.mxu0 %v2147
    %v2166 = vpop.f32.mrf.mxu0
    %v2167 = vadd.f32 0.0, %v2166
    %2168 = vdwg.mxu0
    %2169 = vrot.lane.b32.xlu0 %v1911, 112
    %v2170 = vpop.permute.xlu0 %2169
    %2171 = vrot.lane.b32.xlu0 %v1877, 80
    %v2172 = vpop.permute.xlu0 %2171
    %v2173 = vsel %vm373, %v2170, 0
    %v2175 = vsel %vm373, %v2172, 0
    %2177 = vmatpush.xpose.msra.mxu0 0.0
    %2178 = vmatpush.xpose.msra.mxu0 0.0
    %2179 = vmatpush.xpose.msra.mxu0 0.0
    %2180 = vmatpush.xpose.msra.mxu0 0.0
    %2181 = vmatpush.xpose.msra.mxu0 0.0
    %2182 = vmatpush.xpose.msra.mxu0 0.0
    %2183 = vmatpush.xpose.msra.mxu0 0.0
    %2184 = vmatpush.xpose.msra.mxu0 0.0
    %2185 = vmatpush.xpose.msra.mxu0 0.0
    %2186 = vmatpush.xpose.msra.mxu0 0.0
    %2187 = vmatpush.xpose.msra.mxu0 0.0
    %2188 = vmatpush.xpose.msra.mxu0 0.0
    %2189 = vmatpush.xpose.msra.mxu0 0.0
    %2190 = vmatpush.xpose.msra.mxu0 0.0
    %2191 = vmatpush.xpose.msra.mxu0 0.0
    %2192 = vmatpush.xpose.msra.mxu0 %v2175
    %2193 = vmatmul.f32.gmra.mxu0 %v2173
    %v2194 = vpop.f32.mrf.mxu0
    %v2195 = vadd.f32 0.0, %v2194
    %2196 = vdwg.mxu0
    %2197 = vrot.lane.b32.xlu0 %v1912, 112
    %v2198 = vpop.permute.xlu0 %2197
    %2199 = vrot.lane.b32.xlu0 %v1880, 80
    %v2200 = vpop.permute.xlu0 %2199
    %v2201 = vsel %vm373, %v2198, 0
    %v2203 = vsel %vm373, %v2200, 0
    %2205 = vmatpush.xpose.msra.mxu0 0.0
    %2206 = vmatpush.xpose.msra.mxu0 0.0
    %2207 = vmatpush.xpose.msra.mxu0 0.0
    %2208 = vmatpush.xpose.msra.mxu0 0.0
    %2209 = vmatpush.xpose.msra.mxu0 0.0
    %2210 = vmatpush.xpose.msra.mxu0 0.0
    %2211 = vmatpush.xpose.msra.mxu0 0.0
    %2212 = vmatpush.xpose.msra.mxu0 0.0
    %2213 = vmatpush.xpose.msra.mxu0 0.0
    %2214 = vmatpush.xpose.msra.mxu0 0.0
    %2215 = vmatpush.xpose.msra.mxu0 0.0
    %2216 = vmatpush.xpose.msra.mxu0 0.0
    %2217 = vmatpush.xpose.msra.mxu0 0.0
    %2218 = vmatpush.xpose.msra.mxu0 0.0
    %2219 = vmatpush.xpose.msra.mxu0 0.0
    %2220 = vmatpush.xpose.msra.mxu0 %v2203
    %2221 = vmatmul.f32.gmra.mxu0 %v2201
    %v2222 = vpop.f32.mrf.mxu0
    %v2223 = vadd.f32 0.0, %v2222
    %2224 = vdwg.mxu0
    %v2225 = vsel %vm373, %v2195, -inf
    %2226 = vmax.xlane.f32.xlu0 %v2225
    %v2227 = vpop.xlane.xlu0 %2226
    %v2228 = vsel %vm373, %v2223, -inf
    %2229 = vmax.xlane.f32.xlu0 %v2228
    %v2230 = vpop.xlane.xlu0 %2229
    %v2231 = vsub.f32 %v2195, %v2227
    %v2232 = vsub.f32 %v2223, %v2230
    %v2233 = vmul.f32 %v2231, 1.442695
    %v2234 = vpow.pop %v2233
    %v2235 = vmul.f32 %v2232, 1.442695
    %v2236 = vpow.pop %v2235
    %v2237 = vsel %vm373, %v2234, 0.0
    %2238 = vadd.xlane.f32.xlu0 %v2237
    %v2239 = vpop.xlane.xlu0 %2238
    %v2240 = vsel %vm373, %v2236, 0.0
    %2241 = vadd.xlane.f32.xlu0 %v2240
    %v2242 = vpop.xlane.xlu0 %2241
    %v2243 = vrcp.pop %v2239
    %v2244 = vrcp.pop %v2242
    %v2245 = vmul.f32 %v2234, %v2243
    %v2246 = vmul.f32 %v2236, %v2244
    %2247 = vrot.lane.b32.xlu0 %v1906, 112
    %v2248 = vpop.permute.xlu0 %2247
    %v2251 = vsel %vm373, %v2245, 0
    %2253 = vmatpush.msra.mxu0 0.0
    %2254 = vmatpush.msra.mxu0 0.0
    %2255 = vmatpush.msra.mxu0 0.0
    %2256 = vmatpush.msra.mxu0 0.0
    %2257 = vmatpush.msra.mxu0 0.0
    %2258 = vmatpush.msra.mxu0 0.0
    %2259 = vmatpush.msra.mxu0 0.0
    %2260 = vmatpush.msra.mxu0 0.0
    %2261 = vmatpush.msra.mxu0 0.0
    %2262 = vmatpush.msra.mxu0 0.0
    %2263 = vmatpush.msra.mxu0 0.0
    %2264 = vmatpush.msra.mxu0 0.0
    %2265 = vmatpush.msra.mxu0 0.0
    %2266 = vmatpush.msra.mxu0 0.0
    %2267 = vmatpush.msra.mxu0 0.0
    %2268 = vmatpush.msra.mxu0 %v2248
    %2269 = vmatmul.f32.gmra.mxu0 %v2251
    %v2270 = vpop.f32.mrf.mxu0
    %v2271 = vadd.f32 0.0, %v2270
    %2272 = vdwg.mxu0
    %2273 = vrot.lane.b32.xlu0 %v1909, 112
    %v2274 = vpop.permute.xlu0 %2273
    %v2277 = vsel %vm373, %v2246, 0
    %2279 = vmatpush.msra.mxu0 0.0
    %2280 = vmatpush.msra.mxu0 0.0
    %2281 = vmatpush.msra.mxu0 0.0
    %2282 = vmatpush.msra.mxu0 0.0
    %2283 = vmatpush.msra.mxu0 0.0
    %2284 = vmatpush.msra.mxu0 0.0
    %2285 = vmatpush.msra.mxu0 0.0
    %2286 = vmatpush.msra.mxu0 0.0
    %2287 = vmatpush.msra.mxu0 0.0
    %2288 = vmatpush.msra.mxu0 0.0
    %2289 = vmatpush.msra.mxu0 0.0
    %2290 = vmatpush.msra.mxu0 0.0
    %2291 = vmatpush.msra.mxu0 0.0
    %2292 = vmatpush.msra.mxu0 0.0
    %2293 = vmatpush.msra.mxu0 0.0
    %2294 = vmatpush.msra.mxu0 %v2274
    %2295 = vmatmul.f32.gmra.mxu0 %v2277
    %v2296 = vpop.f32.mrf.mxu0
    %v2297 = vadd.f32 0.0, %v2296
    %2298 = vdwg.mxu0
    %2299 = vrot.lane.b32.xlu0 %v1911, 104
    %v2300 = vpop.permute.xlu0 %2299
    %2301 = vrot.lane.b32.xlu0 %v1877, 72
    %v2302 = vpop.permute.xlu0 %2301
    %v2303 = vsel %vm373, %v2300, 0
    %v2305 = vsel %vm373, %v2302, 0
    %2307 = vmatpush.xpose.msra.mxu0 0.0
    %2308 = vmatpush.xpose.msra.mxu0 0.0
    %2309 = vmatpush.xpose.msra.mxu0 0.0
    %2310 = vmatpush.xpose.msra.mxu0 0.0
    %2311 = vmatpush.xpose.msra.mxu0 0.0
    %2312 = vmatpush.xpose.msra.mxu0 0.0
    %2313 = vmatpush.xpose.msra.mxu0 0.0
    %2314 = vmatpush.xpose.msra.mxu0 0.0
    %2315 = vmatpush.xpose.msra.mxu0 0.0
    %2316 = vmatpush.xpose.msra.mxu0 0.0
    %2317 = vmatpush.xpose.msra.mxu0 0.0
    %2318 = vmatpush.xpose.msra.mxu0 0.0
    %2319 = vmatpush.xpose.msra.mxu0 0.0
    %2320 = vmatpush.xpose.msra.mxu0 0.0
    %2321 = vmatpush.xpose.msra.mxu0 0.0
    %2322 = vmatpush.xpose.msra.mxu0 %v2305
    %2323 = vmatmul.f32.gmra.mxu0 %v2303
    %v2324 = vpop.f32.mrf.mxu0
    %v2325 = vadd.f32 0.0, %v2324
    %2326 = vdwg.mxu0
    %2327 = vrot.lane.b32.xlu0 %v1912, 104
    %v2328 = vpop.permute.xlu0 %2327
    %2329 = vrot.lane.b32.xlu0 %v1880, 72
    %v2330 = vpop.permute.xlu0 %2329
    %v2331 = vsel %vm373, %v2328, 0
    %v2333 = vsel %vm373, %v2330, 0
    %2335 = vmatpush.xpose.msra.mxu0 0.0
    %2336 = vmatpush.xpose.msra.mxu0 0.0
    %2337 = vmatpush.xpose.msra.mxu0 0.0
    %2338 = vmatpush.xpose.msra.mxu0 0.0
    %2339 = vmatpush.xpose.msra.mxu0 0.0
    %2340 = vmatpush.xpose.msra.mxu0 0.0
    %2341 = vmatpush.xpose.msra.mxu0 0.0
    %2342 = vmatpush.xpose.msra.mxu0 0.0
    %2343 = vmatpush.xpose.msra.mxu0 0.0
    %2344 = vmatpush.xpose.msra.mxu0 0.0
    %2345 = vmatpush.xpose.msra.mxu0 0.0
    %2346 = vmatpush.xpose.msra.mxu0 0.0
    %2347 = vmatpush.xpose.msra.mxu0 0.0
    %2348 = vmatpush.xpose.msra.mxu0 0.0
    %2349 = vmatpush.xpose.msra.mxu0 0.0
    %2350 = vmatpush.xpose.msra.mxu0 %v2333
    %2351 = vmatmul.f32.gmra.mxu0 %v2331
    %v2352 = vpop.f32.mrf.mxu0
    %v2353 = vadd.f32 0.0, %v2352
    %2354 = vdwg.mxu0
    %v2355 = vsel %vm373, %v2325, -inf
    %2356 = vmax.xlane.f32.xlu0 %v2355
    %v2357 = vpop.xlane.xlu0 %2356
    %v2358 = vsel %vm373, %v2353, -inf
    %2359 = vmax.xlane.f32.xlu0 %v2358
    %v2360 = vpop.xlane.xlu0 %2359
    %v2361 = vsub.f32 %v2325, %v2357
    %v2362 = vsub.f32 %v2353, %v2360
    %v2363 = vmul.f32 %v2361, 1.442695
    %v2364 = vpow.pop %v2363
    %v2365 = vmul.f32 %v2362, 1.442695
    %v2366 = vpow.pop %v2365
    %v2367 = vsel %vm373, %v2364, 0.0
    %2368 = vadd.xlane.f32.xlu0 %v2367
    %v2369 = vpop.xlane.xlu0 %2368
    %v2370 = vsel %vm373, %v2366, 0.0
    %2371 = vadd.xlane.f32.xlu0 %v2370
    %v2372 = vpop.xlane.xlu0 %2371
    %v2373 = vrcp.pop %v2369
    %v2374 = vrcp.pop %v2372
    %v2375 = vmul.f32 %v2364, %v2373
    %v2376 = vmul.f32 %v2366, %v2374
    %2377 = vrot.lane.b32.xlu0 %v1906, 104
    %v2378 = vpop.permute.xlu0 %2377
    %v2381 = vsel %vm373, %v2375, 0
    %2383 = vmatpush.msra.mxu0 0.0
    %2384 = vmatpush.msra.mxu0 0.0
    %2385 = vmatpush.msra.mxu0 0.0
    %2386 = vmatpush.msra.mxu0 0.0
    %2387 = vmatpush.msra.mxu0 0.0
    %2388 = vmatpush.msra.mxu0 0.0
    %2389 = vmatpush.msra.mxu0 0.0
    %2390 = vmatpush.msra.mxu0 0.0
    %2391 = vmatpush.msra.mxu0 0.0
    %2392 = vmatpush.msra.mxu0 0.0
    %2393 = vmatpush.msra.mxu0 0.0
    %2394 = vmatpush.msra.mxu0 0.0
    %2395 = vmatpush.msra.mxu0 0.0
    %2396 = vmatpush.msra.mxu0 0.0
    %2397 = vmatpush.msra.mxu0 0.0
    %2398 = vmatpush.msra.mxu0 %v2378
    %2399 = vmatmul.f32.gmra.mxu0 %v2381
    %v2400 = vpop.f32.mrf.mxu0
    %v2401 = vadd.f32 0.0, %v2400
    %2402 = vdwg.mxu0
    %2403 = vrot.lane.b32.xlu0 %v1909, 104
    %v2404 = vpop.permute.xlu0 %2403
    %v2407 = vsel %vm373, %v2376, 0
    %2409 = vmatpush.msra.mxu0 0.0
    %2410 = vmatpush.msra.mxu0 0.0
    %2411 = vmatpush.msra.mxu0 0.0
    %2412 = vmatpush.msra.mxu0 0.0
    %2413 = vmatpush.msra.mxu0 0.0
    %2414 = vmatpush.msra.mxu0 0.0
    %2415 = vmatpush.msra.mxu0 0.0
    %2416 = vmatpush.msra.mxu0 0.0
    %2417 = vmatpush.msra.mxu0 0.0
    %2418 = vmatpush.msra.mxu0 0.0
    %2419 = vmatpush.msra.mxu0 0.0
    %2420 = vmatpush.msra.mxu0 0.0
    %2421 = vmatpush.msra.mxu0 0.0
    %2422 = vmatpush.msra.mxu0 0.0
    %2423 = vmatpush.msra.mxu0 0.0
    %2424 = vmatpush.msra.mxu0 %v2404
    %2425 = vmatmul.f32.gmra.mxu0 %v2407
    %v2426 = vpop.f32.mrf.mxu0
    %v2427 = vadd.f32 0.0, %v2426
    %2428 = vdwg.mxu0
    %2431 = vrot.lane.b32.xlu0 %v2140, 8
    %v2432 = vpop.permute.xlu0 %2431
    %2433 = vrot.lane.b32.xlu0 %v2167, 8
    %v2434 = vpop.permute.xlu0 %2433
    %2439 = vrot.lane.b32.xlu0 %v2271, 16
    %v2440 = vpop.permute.xlu0 %2439
    %2441 = vrot.lane.b32.xlu0 %v2297, 16
    %v2442 = vpop.permute.xlu0 %2441
    %2447 = vrot.lane.b32.xlu0 %v2401, 24
    %v2448 = vpop.permute.xlu0 %2447
    %2449 = vrot.lane.b32.xlu0 %v2427, 24
    %v2450 = vpop.permute.xlu0 %2449
    %v2453 = vsel %vm373, %v2012, %v2432
    %v2454 = vsel %vm373, %v2035, %v2434
    %v2455 = vsel %vm913, %v2453, %v2440
    %v2456 = vsel %vm913, %v2454, %v2442
    %v2457 = vsel %vm916, %v2455, %v2448
    %v2458 = vsel %vm916, %v2456, %v2450
    %v2460 = vsel %vm198, %v2457, 0
    %v2463 = vsel %vm198, %v2458, 0
    %2465 = vmatpush.msra.mxu0 0.0
    %2466 = vmatpush.msra.mxu0 0.0
    %2467 = vmatpush.msra.mxu0 0.0
    %2468 = vmatpush.msra.mxu0 0.0
    %2469 = vmatpush.msra.mxu0 0.0
    %2470 = vmatpush.msra.mxu0 0.0
    %2471 = vmatpush.msra.mxu0 0.0
    %2472 = vmatpush.msra.mxu0 0.0
    %2473 = vmatpush.msra.mxu0 0.0
    %2474 = vmatpush.msra.mxu0 0.0
    %2475 = vmatpush.msra.mxu0 0.0
    %2476 = vmatpush.msra.mxu0 0.0
    %2477 = vmatpush.msra.mxu0 %v115
    %2478 = vmatpush.msra.mxu0 %v114
    %2479 = vmatpush.msra.mxu0 %v113
    %2480 = vmatpush.msra.mxu0 %v112
    %2481 = vmatmul.f32.gmra.mxu0 %v2460
    %v2482 = vpop.f32.mrf.mxu0
    %v2483 = vadd.f32 %v920, %v2482
    %2484 = vmatmul.f32.gmra.mxu0 %v2463
    %v2485 = vpop.f32.mrf.mxu0
    %v2486 = vadd.f32 %v920, %v2485
    %2487 = vdwg.mxu0
    %v2488 = vadd.f32 %v1849, %v2483
    %v2489 = vadd.f32 %v1850, %v2486
    %v2490 = vsel %vm198, %v2488, 0.0
    %2491 = vadd.xlane.f32.xlu0 %v2490
    %v2492 = vpop.xlane.xlu0 %2491
    %v2493 = vsel %vm198, %v2489, 0.0
    %2494 = vadd.xlane.f32.xlu0 %v2493
    %v2495 = vpop.xlane.xlu0 %2494
    %v2496 = vmul.f32 %v2492, %v965
    %v2497 = vmul.f32 %v2495, %v965
    %v2498 = vsub.f32 %v2488, %v2496
    %v2499 = vsub.f32 %v2489, %v2497
    %v2500 = vmul.f32 %v2498, %v2498
    %v2501 = vmul.f32 %v2499, %v2499
    %v2502 = vsel %vm198, %v2500, 0.0
    %2503 = vadd.xlane.f32.xlu0 %v2502
    %v2504 = vpop.xlane.xlu0 %2503
    %v2505 = vsel %vm198, %v2501, 0.0
    %2506 = vadd.xlane.f32.xlu0 %v2505
    %v2507 = vpop.xlane.xlu0 %2506
    %v2508 = vmul.f32 %v2504, %v965
    %v2509 = vmul.f32 %v2507, %v965
    %v2510 = vadd.f32 %v2508, 1e-05
    %v2511 = vadd.f32 %v2509, 1e-05
    %v2512 = vrsqrt.pop %v2510
    %v2513 = vmul.f32 %v2512, %v2510
    %v2514 = vmul.f32 %v2513, %v2512
    %v2515 = vmul.f32 0.5, %v2514
    %v2516 = vsub.f32 1.5, %v2515
    %v2517 = vmul.f32 %v2512, %v2516
    %vm2518 = vweird.f32 %v2510
    %vm2519 = vweird.f32 %v2512
    %vm2520 = vmor %vm2518, %vm2519
    %v2521 = vsel %vm2520, %v2512, %v2517
    %v2522 = vrsqrt.pop %v2511
    %v2523 = vmul.f32 %v2522, %v2511
    %v2524 = vmul.f32 %v2523, %v2522
    %v2525 = vmul.f32 0.5, %v2524
    %v2526 = vsub.f32 1.5, %v2525
    %v2527 = vmul.f32 %v2522, %v2526
    %vm2528 = vweird.f32 %v2511
    %vm2529 = vweird.f32 %v2522
    %vm2530 = vmor %vm2528, %vm2529
    %v2531 = vsel %vm2530, %v2522, %v2527
    %v2532 = vmul.f32 %v2498, %v2521
    %v2533 = vmul.f32 %v2499, %v2531
    %v2534 = vmul.f32 %v2532, %v1005
    %v2535 = vmul.f32 %v2533, %v1005
    %v2536 = vadd.f32 %v2534, %v1010
    %v2537 = vadd.f32 %v2535, %v1010
    %v2538 = vadd.f32 %v2536, %v162
    %v2539 = vadd.f32 %v2537, %v165
    %v2541 = vsel %vm198, %v2538, 0
    %v2544 = vsel %vm198, %v2539, 0
    %2546 = vmatpush.msra.mxu0 0.0
    %2547 = vmatpush.msra.mxu0 0.0
    %2548 = vmatpush.msra.mxu0 0.0
    %2549 = vmatpush.msra.mxu0 0.0
    %2550 = vmatpush.msra.mxu0 0.0
    %2551 = vmatpush.msra.mxu0 0.0
    %2552 = vmatpush.msra.mxu0 0.0
    %2553 = vmatpush.msra.mxu0 0.0
    %2554 = vmatpush.msra.mxu0 0.0
    %2555 = vmatpush.msra.mxu0 0.0
    %2556 = vmatpush.msra.mxu0 0.0
    %2557 = vmatpush.msra.mxu0 0.0
    %2558 = vmatpush.msra.mxu0 %v120
    %2559 = vmatpush.msra.mxu0 %v119
    %2560 = vmatpush.msra.mxu0 %v118
    %2561 = vmatpush.msra.mxu0 %v117
    %2562 = vmatmul.f32.gmra.mxu0 %v2541
    %v2563 = vpop.f32.mrf.mxu0
    %v2564 = vadd.f32 %v178, %v2563
    %2565 = vmatmul.f32.gmra.mxu0 %v2544
    %v2566 = vpop.f32.mrf.mxu0
    %v2567 = vadd.f32 %v178, %v2566
    %2568 = vdwg.mxu0
    %v2569 = vmul.f32 %v2564, 0.35355338
    %v2570 = vmul.f32 %v2567, 0.35355338
    %v2572 = vsel %vm373, %v2569, 0
    %2574 = vmatpush.xpose.msra.mxu0 0.0
    %2575 = vmatpush.xpose.msra.mxu0 0.0
    %2576 = vmatpush.xpose.msra.mxu0 0.0
    %2577 = vmatpush.xpose.msra.mxu0 0.0
    %2578 = vmatpush.xpose.msra.mxu0 0.0
    %2579 = vmatpush.xpose.msra.mxu0 0.0
    %2580 = vmatpush.xpose.msra.mxu0 0.0
    %2581 = vmatpush.xpose.msra.mxu0 0.0
    %2582 = vmatpush.xpose.msra.mxu0 0.0
    %2583 = vmatpush.xpose.msra.mxu0 0.0
    %2584 = vmatpush.xpose.msra.mxu0 0.0
    %2585 = vmatpush.xpose.msra.mxu0 0.0
    %2586 = vmatpush.xpose.msra.mxu0 0.0
    %2587 = vmatpush.xpose.msra.mxu0 0.0
    %2588 = vmatpush.xpose.msra.mxu0 %v1055
    %2589 = vmatpush.xpose.msra.mxu0 %v1052
    %2590 = vmatmul.f32.gmra.mxu0 %v2572
    %v2591 = vpop.f32.mrf.mxu0
    %v2592 = vadd.f32 0.0, %v2591
    %2593 = vdwg.mxu0
    %v2595 = vsel %vm373, %v2570, 0
    %2597 = vmatpush.xpose.msra.mxu0 0.0
    %2598 = vmatpush.xpose.msra.mxu0 0.0
    %2599 = vmatpush.xpose.msra.mxu0 0.0
    %2600 = vmatpush.xpose.msra.mxu0 0.0
    %2601 = vmatpush.xpose.msra.mxu0 0.0
    %2602 = vmatpush.xpose.msra.mxu0 0.0
    %2603 = vmatpush.xpose.msra.mxu0 0.0
    %2604 = vmatpush.xpose.msra.mxu0 0.0
    %2605 = vmatpush.xpose.msra.mxu0 0.0
    %2606 = vmatpush.xpose.msra.mxu0 0.0
    %2607 = vmatpush.xpose.msra.mxu0 0.0
    %2608 = vmatpush.xpose.msra.mxu0 0.0
    %2609 = vmatpush.xpose.msra.mxu0 0.0
    %2610 = vmatpush.xpose.msra.mxu0 0.0
    %2611 = vmatpush.xpose.msra.mxu0 %v1084
    %2612 = vmatpush.xpose.msra.mxu0 %v1081
    %2613 = vmatmul.f32.gmra.mxu0 %v2595
    %v2614 = vpop.f32.mrf.mxu0
    %v2615 = vadd.f32 0.0, %v2614
    %2616 = vdwg.mxu0
    %v2617 = vsel %vm913, %v2592, -inf
    %2618 = vmax.xlane.f32.xlu0 %v2617
    %v2619 = vpop.xlane.xlu0 %2618
    %v2620 = vsel %vm913, %v2615, -inf
    %2621 = vmax.xlane.f32.xlu0 %v2620
    %v2622 = vpop.xlane.xlu0 %2621
    %v2623 = vsub.f32 %v2592, %v2619
    %v2624 = vsub.f32 %v2615, %v2622
    %v2625 = vmul.f32 %v2623, 1.442695
    %v2626 = vpow.pop %v2625
    %v2627 = vmul.f32 %v2624, 1.442695
    %v2628 = vpow.pop %v2627
    %v2629 = vsel %vm913, %v2626, 0.0
    %2630 = vadd.xlane.f32.xlu0 %v2629
    %v2631 = vpop.xlane.xlu0 %2630
    %v2632 = vsel %vm913, %v2628, 0.0
    %2633 = vadd.xlane.f32.xlu0 %v2632
    %v2634 = vpop.xlane.xlu0 %2633
    %v2635 = vrcp.pop %v2631
    %v2636 = vrcp.pop %v2634
    %v2637 = vmul.f32 %v2626, %v2635
    %v2638 = vmul.f32 %v2628, %v2636
    %v2640 = vsel %vm913, %v2637, 0
    %2642 = vmatpush.msra.mxu0 0.0
    %2643 = vmatpush.msra.mxu0 0.0
    %2644 = vmatpush.msra.mxu0 0.0
    %2645 = vmatpush.msra.mxu0 0.0
    %2646 = vmatpush.msra.mxu0 0.0
    %2647 = vmatpush.msra.mxu0 0.0
    %2648 = vmatpush.msra.mxu0 0.0
    %2649 = vmatpush.msra.mxu0 0.0
    %2650 = vmatpush.msra.mxu0 0.0
    %2651 = vmatpush.msra.mxu0 0.0
    %2652 = vmatpush.msra.mxu0 0.0
    %2653 = vmatpush.msra.mxu0 0.0
    %2654 = vmatpush.msra.mxu0 0.0
    %2655 = vmatpush.msra.mxu0 0.0
    %2656 = vmatpush.msra.mxu0 %v280
    %2657 = vmatpush.msra.mxu0 %v277
    %2658 = vmatmul.f32.gmra.mxu0 %v2640
    %v2659 = vpop.f32.mrf.mxu0
    %v2660 = vadd.f32 0.0, %v2659
    %2661 = vdwg.mxu0
    %v2663 = vsel %vm913, %v2638, 0
    %2665 = vmatpush.msra.mxu0 0.0
    %2666 = vmatpush.msra.mxu0 0.0
    %2667 = vmatpush.msra.mxu0 0.0
    %2668 = vmatpush.msra.mxu0 0.0
    %2669 = vmatpush.msra.mxu0 0.0
    %2670 = vmatpush.msra.mxu0 0.0
    %2671 = vmatpush.msra.mxu0 0.0
    %2672 = vmatpush.msra.mxu0 0.0
    %2673 = vmatpush.msra.mxu0 0.0
    %2674 = vmatpush.msra.mxu0 0.0
    %2675 = vmatpush.msra.mxu0 0.0
    %2676 = vmatpush.msra.mxu0 0.0
    %2677 = vmatpush.msra.mxu0 0.0
    %2678 = vmatpush.msra.mxu0 0.0
    %2679 = vmatpush.msra.mxu0 %v286
    %2680 = vmatpush.msra.mxu0 %v283
    %2681 = vmatmul.f32.gmra.mxu0 %v2663
    %v2682 = vpop.f32.mrf.mxu0
    %v2683 = vadd.f32 0.0, %v2682
    %2684 = vdwg.mxu0
    %2685 = vrot.lane.b32.xlu0 %v2569, 120
    %v2686 = vpop.permute.xlu0 %2685
    %v2687 = vsel %vm373, %v2686, 0
    %2689 = vmatpush.xpose.msra.mxu0 0.0
    %2690 = vmatpush.xpose.msra.mxu0 0.0
    %2691 = vmatpush.xpose.msra.mxu0 0.0
    %2692 = vmatpush.xpose.msra.mxu0 0.0
    %2693 = vmatpush.xpose.msra.mxu0 0.0
    %2694 = vmatpush.xpose.msra.mxu0 0.0
    %2695 = vmatpush.xpose.msra.mxu0 0.0
    %2696 = vmatpush.xpose.msra.mxu0 0.0
    %2697 = vmatpush.xpose.msra.mxu0 0.0
    %2698 = vmatpush.xpose.msra.mxu0 0.0
    %2699 = vmatpush.xpose.msra.mxu0 0.0
    %2700 = vmatpush.xpose.msra.mxu0 0.0
    %2701 = vmatpush.xpose.msra.mxu0 0.0
    %2702 = vmatpush.xpose.msra.mxu0 0.0
    %2703 = vmatpush.xpose.msra.mxu0 %v1184
    %2704 = vmatpush.xpose.msra.mxu0 %v1182
    %2705 = vmatmul.f32.gmra.mxu0 %v2687
    %v2706 = vpop.f32.mrf.mxu0
    %v2707 = vadd.f32 0.0, %v2706
    %2708 = vdwg.mxu0
    %2709 = vrot.lane.b32.xlu0 %v2570, 120
    %v2710 = vpop.permute.xlu0 %2709
    %v2711 = vsel %vm373, %v2710, 0
    %2713 = vmatpush.xpose.msra.mxu0 0.0
    %2714 = vmatpush.xpose.msra.mxu0 0.0
    %2715 = vmatpush.xpose.msra.mxu0 0.0
    %2716 = vmatpush.xpose.msra.mxu0 0.0
    %2717 = vmatpush.xpose.msra.mxu0 0.0
    %2718 = vmatpush.xpose.msra.mxu0 0.0
    %2719 = vmatpush.xpose.msra.mxu0 0.0
    %2720 = vmatpush.xpose.msra.mxu0 0.0
    %2721 = vmatpush.xpose.msra.mxu0 0.0
    %2722 = vmatpush.xpose.msra.mxu0 0.0
    %2723 = vmatpush.xpose.msra.mxu0 0.0
    %2724 = vmatpush.xpose.msra.mxu0 0.0
    %2725 = vmatpush.xpose.msra.mxu0 0.0
    %2726 = vmatpush.xpose.msra.mxu0 0.0
    %2727 = vmatpush.xpose.msra.mxu0 %v1216
    %2728 = vmatpush.xpose.msra.mxu0 %v1214
    %2729 = vmatmul.f32.gmra.mxu0 %v2711
    %v2730 = vpop.f32.mrf.mxu0
    %v2731 = vadd.f32 0.0, %v2730
    %2732 = vdwg.mxu0
    %v2733 = vsel %vm913, %v2707, -inf
    %2734 = vmax.xlane.f32.xlu0 %v2733
    %v2735 = vpop.xlane.xlu0 %2734
    %v2736 = vsel %vm913, %v2731, -inf
    %2737 = vmax.xlane.f32.xlu0 %v2736
    %v2738 = vpop.xlane.xlu0 %2737
    %v2739 = vsub.f32 %v2707, %v2735
    %v2740 = vsub.f32 %v2731, %v2738
    %v2741 = vmul.f32 %v2739, 1.442695
    %v2742 = vpow.pop %v2741
    %v2743 = vmul.f32 %v2740, 1.442695
    %v2744 = vpow.pop %v2743
    %v2745 = vsel %vm913, %v2742, 0.0
    %2746 = vadd.xlane.f32.xlu0 %v2745
    %v2747 = vpop.xlane.xlu0 %2746
    %v2748 = vsel %vm913, %v2744, 0.0
    %2749 = vadd.xlane.f32.xlu0 %v2748
    %v2750 = vpop.xlane.xlu0 %2749
    %v2751 = vrcp.pop %v2747
    %v2752 = vrcp.pop %v2750
    %v2753 = vmul.f32 %v2742, %v2751
    %v2754 = vmul.f32 %v2744, %v2752
    %v2756 = vsel %vm913, %v2753, 0
    %2758 = vmatpush.msra.mxu0 0.0
    %2759 = vmatpush.msra.mxu0 0.0
    %2760 = vmatpush.msra.mxu0 0.0
    %2761 = vmatpush.msra.mxu0 0.0
    %2762 = vmatpush.msra.mxu0 0.0
    %2763 = vmatpush.msra.mxu0 0.0
    %2764 = vmatpush.msra.mxu0 0.0
    %2765 = vmatpush.msra.mxu0 0.0
    %2766 = vmatpush.msra.mxu0 0.0
    %2767 = vmatpush.msra.mxu0 0.0
    %2768 = vmatpush.msra.mxu0 0.0
    %2769 = vmatpush.msra.mxu0 0.0
    %2770 = vmatpush.msra.mxu0 0.0
    %2771 = vmatpush.msra.mxu0 0.0
    %2772 = vmatpush.msra.mxu0 %v1265
    %2773 = vmatpush.msra.mxu0 %v1263
    %2774 = vmatmul.f32.gmra.mxu0 %v2756
    %v2775 = vpop.f32.mrf.mxu0
    %v2776 = vadd.f32 0.0, %v2775
    %2777 = vdwg.mxu0
    %v2779 = vsel %vm913, %v2754, 0
    %2781 = vmatpush.msra.mxu0 0.0
    %2782 = vmatpush.msra.mxu0 0.0
    %2783 = vmatpush.msra.mxu0 0.0
    %2784 = vmatpush.msra.mxu0 0.0
    %2785 = vmatpush.msra.mxu0 0.0
    %2786 = vmatpush.msra.mxu0 0.0
    %2787 = vmatpush.msra.mxu0 0.0
    %2788 = vmatpush.msra.mxu0 0.0
    %2789 = vmatpush.msra.mxu0 0.0
    %2790 = vmatpush.msra.mxu0 0.0
    %2791 = vmatpush.msra.mxu0 0.0
    %2792 = vmatpush.msra.mxu0 0.0
    %2793 = vmatpush.msra.mxu0 0.0
    %2794 = vmatpush.msra.mxu0 0.0
    %2795 = vmatpush.msra.mxu0 %v1296
    %2796 = vmatpush.msra.mxu0 %v1294
    %2797 = vmatmul.f32.gmra.mxu0 %v2779
    %v2798 = vpop.f32.mrf.mxu0
    %v2799 = vadd.f32 0.0, %v2798
    %2800 = vdwg.mxu0
    %2801 = vrot.lane.b32.xlu0 %v2569, 112
    %v2802 = vpop.permute.xlu0 %2801
    %v2803 = vsel %vm373, %v2802, 0
    %2805 = vmatpush.xpose.msra.mxu0 0.0
    %2806 = vmatpush.xpose.msra.mxu0 0.0
    %2807 = vmatpush.xpose.msra.mxu0 0.0
    %2808 = vmatpush.xpose.msra.mxu0 0.0
    %2809 = vmatpush.xpose.msra.mxu0 0.0
    %2810 = vmatpush.xpose.msra.mxu0 0.0
    %2811 = vmatpush.xpose.msra.mxu0 0.0
    %2812 = vmatpush.xpose.msra.mxu0 0.0
    %2813 = vmatpush.xpose.msra.mxu0 0.0
    %2814 = vmatpush.xpose.msra.mxu0 0.0
    %2815 = vmatpush.xpose.msra.mxu0 0.0
    %2816 = vmatpush.xpose.msra.mxu0 0.0
    %2817 = vmatpush.xpose.msra.mxu0 0.0
    %2818 = vmatpush.xpose.msra.mxu0 0.0
    %2819 = vmatpush.xpose.msra.mxu0 %v1332
    %2820 = vmatpush.xpose.msra.mxu0 %v1330
    %2821 = vmatmul.f32.gmra.mxu0 %v2803
    %v2822 = vpop.f32.mrf.mxu0
    %v2823 = vadd.f32 0.0, %v2822
    %2824 = vdwg.mxu0
    %2825 = vrot.lane.b32.xlu0 %v2570, 112
    %v2826 = vpop.permute.xlu0 %2825
    %v2827 = vsel %vm373, %v2826, 0
    %2829 = vmatpush.xpose.msra.mxu0 0.0
    %2830 = vmatpush.xpose.msra.mxu0 0.0
    %2831 = vmatpush.xpose.msra.mxu0 0.0
    %2832 = vmatpush.xpose.msra.mxu0 0.0
    %2833 = vmatpush.xpose.msra.mxu0 0.0
    %2834 = vmatpush.xpose.msra.mxu0 0.0
    %2835 = vmatpush.xpose.msra.mxu0 0.0
    %2836 = vmatpush.xpose.msra.mxu0 0.0
    %2837 = vmatpush.xpose.msra.mxu0 0.0
    %2838 = vmatpush.xpose.msra.mxu0 0.0
    %2839 = vmatpush.xpose.msra.mxu0 0.0
    %2840 = vmatpush.xpose.msra.mxu0 0.0
    %2841 = vmatpush.xpose.msra.mxu0 0.0
    %2842 = vmatpush.xpose.msra.mxu0 0.0
    %2843 = vmatpush.xpose.msra.mxu0 %v1364
    %2844 = vmatpush.xpose.msra.mxu0 %v1362
    %2845 = vmatmul.f32.gmra.mxu0 %v2827
    %v2846 = vpop.f32.mrf.mxu0
    %v2847 = vadd.f32 0.0, %v2846
    %2848 = vdwg.mxu0
    %v2849 = vsel %vm913, %v2823, -inf
    %2850 = vmax.xlane.f32.xlu0 %v2849
    %v2851 = vpop.xlane.xlu0 %2850
    %v2852 = vsel %vm913, %v2847, -inf
    %2853 = vmax.xlane.f32.xlu0 %v2852
    %v2854 = vpop.xlane.xlu0 %2853
    %v2855 = vsub.f32 %v2823, %v2851
    %v2856 = vsub.f32 %v2847, %v2854
    %v2857 = vmul.f32 %v2855, 1.442695
    %v2858 = vpow.pop %v2857
    %v2859 = vmul.f32 %v2856, 1.442695
    %v2860 = vpow.pop %v2859
    %v2861 = vsel %vm913, %v2858, 0.0
    %2862 = vadd.xlane.f32.xlu0 %v2861
    %v2863 = vpop.xlane.xlu0 %2862
    %v2864 = vsel %vm913, %v2860, 0.0
    %2865 = vadd.xlane.f32.xlu0 %v2864
    %v2866 = vpop.xlane.xlu0 %2865
    %v2867 = vrcp.pop %v2863
    %v2868 = vrcp.pop %v2866
    %v2869 = vmul.f32 %v2858, %v2867
    %v2870 = vmul.f32 %v2860, %v2868
    %v2872 = vsel %vm913, %v2869, 0
    %2874 = vmatpush.msra.mxu0 0.0
    %2875 = vmatpush.msra.mxu0 0.0
    %2876 = vmatpush.msra.mxu0 0.0
    %2877 = vmatpush.msra.mxu0 0.0
    %2878 = vmatpush.msra.mxu0 0.0
    %2879 = vmatpush.msra.mxu0 0.0
    %2880 = vmatpush.msra.mxu0 0.0
    %2881 = vmatpush.msra.mxu0 0.0
    %2882 = vmatpush.msra.mxu0 0.0
    %2883 = vmatpush.msra.mxu0 0.0
    %2884 = vmatpush.msra.mxu0 0.0
    %2885 = vmatpush.msra.mxu0 0.0
    %2886 = vmatpush.msra.mxu0 0.0
    %2887 = vmatpush.msra.mxu0 0.0
    %2888 = vmatpush.msra.mxu0 %v1411
    %2889 = vmatpush.msra.mxu0 %v1409
    %2890 = vmatmul.f32.gmra.mxu0 %v2872
    %v2891 = vpop.f32.mrf.mxu0
    %v2892 = vadd.f32 0.0, %v2891
    %2893 = vdwg.mxu0
    %v2895 = vsel %vm913, %v2870, 0
    %2897 = vmatpush.msra.mxu0 0.0
    %2898 = vmatpush.msra.mxu0 0.0
    %2899 = vmatpush.msra.mxu0 0.0
    %2900 = vmatpush.msra.mxu0 0.0
    %2901 = vmatpush.msra.mxu0 0.0
    %2902 = vmatpush.msra.mxu0 0.0
    %2903 = vmatpush.msra.mxu0 0.0
    %2904 = vmatpush.msra.mxu0 0.0
    %2905 = vmatpush.msra.mxu0 0.0
    %2906 = vmatpush.msra.mxu0 0.0
    %2907 = vmatpush.msra.mxu0 0.0
    %2908 = vmatpush.msra.mxu0 0.0
    %2909 = vmatpush.msra.mxu0 0.0
    %2910 = vmatpush.msra.mxu0 0.0
    %2911 = vmatpush.msra.mxu0 %v1440
    %2912 = vmatpush.msra.mxu0 %v1438
    %2913 = vmatmul.f32.gmra.mxu0 %v2895
    %v2914 = vpop.f32.mrf.mxu0
    %v2915 = vadd.f32 0.0, %v2914
    %2916 = vdwg.mxu0
    %2917 = vrot.lane.b32.xlu0 %v2569, 104
    %v2918 = vpop.permute.xlu0 %2917
    %v2919 = vsel %vm373, %v2918, 0
    %2921 = vmatpush.xpose.msra.mxu0 0.0
    %2922 = vmatpush.xpose.msra.mxu0 0.0
    %2923 = vmatpush.xpose.msra.mxu0 0.0
    %2924 = vmatpush.xpose.msra.mxu0 0.0
    %2925 = vmatpush.xpose.msra.mxu0 0.0
    %2926 = vmatpush.xpose.msra.mxu0 0.0
    %2927 = vmatpush.xpose.msra.mxu0 0.0
    %2928 = vmatpush.xpose.msra.mxu0 0.0
    %2929 = vmatpush.xpose.msra.mxu0 0.0
    %2930 = vmatpush.xpose.msra.mxu0 0.0
    %2931 = vmatpush.xpose.msra.mxu0 0.0
    %2932 = vmatpush.xpose.msra.mxu0 0.0
    %2933 = vmatpush.xpose.msra.mxu0 0.0
    %2934 = vmatpush.xpose.msra.mxu0 0.0
    %2935 = vmatpush.xpose.msra.mxu0 %v1476
    %2936 = vmatpush.xpose.msra.mxu0 %v1474
    %2937 = vmatmul.f32.gmra.mxu0 %v2919
    %v2938 = vpop.f32.mrf.mxu0
    %v2939 = vadd.f32 0.0, %v2938
    %2940 = vdwg.mxu0
    %2941 = vrot.lane.b32.xlu0 %v2570, 104
    %v2942 = vpop.permute.xlu0 %2941
    %v2943 = vsel %vm373, %v2942, 0
    %2945 = vmatpush.xpose.msra.mxu0 0.0
    %2946 = vmatpush.xpose.msra.mxu0 0.0
    %2947 = vmatpush.xpose.msra.mxu0 0.0
    %2948 = vmatpush.xpose.msra.mxu0 0.0
    %2949 = vmatpush.xpose.msra.mxu0 0.0
    %2950 = vmatpush.xpose.msra.mxu0 0.0
    %2951 = vmatpush.xpose.msra.mxu0 0.0
    %2952 = vmatpush.xpose.msra.mxu0 0.0
    %2953 = vmatpush.xpose.msra.mxu0 0.0
    %2954 = vmatpush.xpose.msra.mxu0 0.0
    %2955 = vmatpush.xpose.msra.mxu0 0.0
    %2956 = vmatpush.xpose.msra.mxu0 0.0
    %2957 = vmatpush.xpose.msra.mxu0 0.0
    %2958 = vmatpush.xpose.msra.mxu0 0.0
    %2959 = vmatpush.xpose.msra.mxu0 %v1508
    %2960 = vmatpush.xpose.msra.mxu0 %v1506
    %2961 = vmatmul.f32.gmra.mxu0 %v2943
    %v2962 = vpop.f32.mrf.mxu0
    %v2963 = vadd.f32 0.0, %v2962
    %2964 = vdwg.mxu0
    %v2965 = vsel %vm913, %v2939, -inf
    %2966 = vmax.xlane.f32.xlu0 %v2965
    %v2967 = vpop.xlane.xlu0 %2966
    %v2968 = vsel %vm913, %v2963, -inf
    %2969 = vmax.xlane.f32.xlu0 %v2968
    %v2970 = vpop.xlane.xlu0 %2969
    %v2971 = vsub.f32 %v2939, %v2967
    %v2972 = vsub.f32 %v2963, %v2970
    %v2973 = vmul.f32 %v2971, 1.442695
    %v2974 = vpow.pop %v2973
    %v2975 = vmul.f32 %v2972, 1.442695
    %v2976 = vpow.pop %v2975
    %v2977 = vsel %vm913, %v2974, 0.0
    %2978 = vadd.xlane.f32.xlu0 %v2977
    %v2979 = vpop.xlane.xlu0 %2978
    %v2980 = vsel %vm913, %v2976, 0.0
    %2981 = vadd.xlane.f32.xlu0 %v2980
    %v2982 = vpop.xlane.xlu0 %2981
    %v2983 = vrcp.pop %v2979
    %v2984 = vrcp.pop %v2982
    %v2985 = vmul.f32 %v2974, %v2983
    %v2986 = vmul.f32 %v2976, %v2984
    %v2988 = vsel %vm913, %v2985, 0
    %2990 = vmatpush.msra.mxu0 0.0
    %2991 = vmatpush.msra.mxu0 0.0
    %2992 = vmatpush.msra.mxu0 0.0
    %2993 = vmatpush.msra.mxu0 0.0
    %2994 = vmatpush.msra.mxu0 0.0
    %2995 = vmatpush.msra.mxu0 0.0
    %2996 = vmatpush.msra.mxu0 0.0
    %2997 = vmatpush.msra.mxu0 0.0
    %2998 = vmatpush.msra.mxu0 0.0
    %2999 = vmatpush.msra.mxu0 0.0
    %3000 = vmatpush.msra.mxu0 0.0
    %3001 = vmatpush.msra.mxu0 0.0
    %3002 = vmatpush.msra.mxu0 0.0
    %3003 = vmatpush.msra.mxu0 0.0
    %3004 = vmatpush.msra.mxu0 %v1555
    %3005 = vmatpush.msra.mxu0 %v1553
    %3006 = vmatmul.f32.gmra.mxu0 %v2988
    %v3007 = vpop.f32.mrf.mxu0
    %v3008 = vadd.f32 0.0, %v3007
    %3009 = vdwg.mxu0
    %v3011 = vsel %vm913, %v2986, 0
    %3013 = vmatpush.msra.mxu0 0.0
    %3014 = vmatpush.msra.mxu0 0.0
    %3015 = vmatpush.msra.mxu0 0.0
    %3016 = vmatpush.msra.mxu0 0.0
    %3017 = vmatpush.msra.mxu0 0.0
    %3018 = vmatpush.msra.mxu0 0.0
    %3019 = vmatpush.msra.mxu0 0.0
    %3020 = vmatpush.msra.mxu0 0.0
    %3021 = vmatpush.msra.mxu0 0.0
    %3022 = vmatpush.msra.mxu0 0.0
    %3023 = vmatpush.msra.mxu0 0.0
    %3024 = vmatpush.msra.mxu0 0.0
    %3025 = vmatpush.msra.mxu0 0.0
    %3026 = vmatpush.msra.mxu0 0.0
    %3027 = vmatpush.msra.mxu0 %v1584
    %3028 = vmatpush.msra.mxu0 %v1582
    %3029 = vmatmul.f32.gmra.mxu0 %v3011
    %v3030 = vpop.f32.mrf.mxu0
    %v3031 = vadd.f32 0.0, %v3030
    %3032 = vdwg.mxu0
    %3035 = vrot.lane.b32.xlu0 %v2776, 8
    %v3036 = vpop.permute.xlu0 %3035
    %3037 = vrot.lane.b32.xlu0 %v2799, 8
    %v3038 = vpop.permute.xlu0 %3037
    %3043 = vrot.lane.b32.xlu0 %v2892, 16
    %v3044 = vpop.permute.xlu0 %3043
    %3045 = vrot.lane.b32.xlu0 %v2915, 16
    %v3046 = vpop.permute.xlu0 %3045
    %3051 = vrot.lane.b32.xlu0 %v3008, 24
    %v3052 = vpop.permute.xlu0 %3051
    %3053 = vrot.lane.b32.xlu0 %v3031, 24
    %v3054 = vpop.permute.xlu0 %3053
    %v3057 = vsel %vm373, %v2660, %v3036
    %v3058 = vsel %vm373, %v2683, %v3038
    %v3059 = vsel %vm913, %v3057, %v3044
    %v3060 = vsel %vm913, %v3058, %v3046
    %v3061 = vsel %vm916, %v3059, %v3052
    %v3062 = vsel %vm916, %v3060, %v3054
    %v3064 = vsel %vm198, %v3061, 0
    %v3067 = vsel %vm198, %v3062, 0
    %3069 = vmatpush.msra.mxu0 0.0
    %3070 = vmatpush.msra.mxu0 0.0
    %3071 = vmatpush.msra.mxu0 0.0
    %3072 = vmatpush.msra.mxu0 0.0
    %3073 = vmatpush.msra.mxu0 0.0
    %3074 = vmatpush.msra.mxu0 0.0
    %3075 = vmatpush.msra.mxu0 0.0
    %3076 = vmatpush.msra.mxu0 0.0
    %3077 = vmatpush.msra.mxu0 0.0
    %3078 = vmatpush.msra.mxu0 0.0
    %3079 = vmatpush.msra.mxu0 0.0
    %3080 = vmatpush.msra.mxu0 0.0
    %3081 = vmatpush.msra.mxu0 %v125
    %3082 = vmatpush.msra.mxu0 %v124
    %3083 = vmatpush.msra.mxu0 %v123
    %3084 = vmatpush.msra.mxu0 %v122
    %3085 = vmatmul.f32.gmra.mxu0 %v3064
    %v3086 = vpop.f32.mrf.mxu0
    %v3087 = vadd.f32 %v1641, %v3086
    %3088 = vmatmul.f32.gmra.mxu0 %v3067
    %v3089 = vpop.f32.mrf.mxu0
    %v3090 = vadd.f32 %v1641, %v3089
    %3091 = vdwg.mxu0
    %v3092 = vadd.f32 %v2536, %v3087
    %v3093 = vadd.f32 %v2537, %v3090
    %v3094 = vsel %vm198, %v3092, 0.0
    %3095 = vadd.xlane.f32.xlu0 %v3094
    %v3096 = vpop.xlane.xlu0 %3095
    %v3097 = vsel %vm198, %v3093, 0.0
    %3098 = vadd.xlane.f32.xlu0 %v3097
    %v3099 = vpop.xlane.xlu0 %3098
    %v3100 = vmul.f32 %v3096, %v965
    %v3101 = vmul.f32 %v3099, %v965
    %v3102 = vsub.f32 %v3092, %v3100
    %v3103 = vsub.f32 %v3093, %v3101
    %v3104 = vmul.f32 %v3102, %v3102
    %v3105 = vmul.f32 %v3103, %v3103
    %v3106 = vsel %vm198, %v3104, 0.0
    %3107 = vadd.xlane.f32.xlu0 %v3106
    %v3108 = vpop.xlane.xlu0 %3107
    %v3109 = vsel %vm198, %v3105, 0.0
    %3110 = vadd.xlane.f32.xlu0 %v3109
    %v3111 = vpop.xlane.xlu0 %3110
    %v3112 = vmul.f32 %v3108, %v965
    %v3113 = vmul.f32 %v3111, %v965
    %v3114 = vadd.f32 %v3112, 1e-05
    %v3115 = vadd.f32 %v3113, 1e-05
    %v3116 = vrsqrt.pop %v3114
    %v3117 = vmul.f32 %v3116, %v3114
    %v3118 = vmul.f32 %v3117, %v3116
    %v3119 = vmul.f32 0.5, %v3118
    %v3120 = vsub.f32 1.5, %v3119
    %v3121 = vmul.f32 %v3116, %v3120
    %vm3122 = vweird.f32 %v3114
    %vm3123 = vweird.f32 %v3116
    %vm3124 = vmor %vm3122, %vm3123
    %v3125 = vsel %vm3124, %v3116, %v3121
    %v3126 = vrsqrt.pop %v3115
    %v3127 = vmul.f32 %v3126, %v3115
    %v3128 = vmul.f32 %v3127, %v3126
    %v3129 = vmul.f32 0.5, %v3128
    %v3130 = vsub.f32 1.5, %v3129
    %v3131 = vmul.f32 %v3126, %v3130
    %vm3132 = vweird.f32 %v3115
    %vm3133 = vweird.f32 %v3126
    %vm3134 = vmor %vm3132, %vm3133
    %v3135 = vsel %vm3134, %v3126, %v3131
    %v3136 = vmul.f32 %v3102, %v3125
    %v3137 = vmul.f32 %v3103, %v3135
    %v3138 = vmul.f32 %v3136, %v1719
    %v3139 = vmul.f32 %v3137, %v1719
    %v3140 = vadd.f32 %v3138, %v1724
    %v3141 = vadd.f32 %v3139, %v1724
    %v3143 = vsel %vm198, %v3140, 0
    %v3146 = vsel %vm198, %v3141, 0
    %3148 = vmatpush.msra.mxu0 0.0
    %3149 = vmatpush.msra.mxu0 0.0
    %3150 = vmatpush.msra.mxu0 0.0
    %3151 = vmatpush.msra.mxu0 0.0
    %3152 = vmatpush.msra.mxu0 0.0
    %3153 = vmatpush.msra.mxu0 0.0
    %3154 = vmatpush.msra.mxu0 0.0
    %3155 = vmatpush.msra.mxu0 0.0
    %3156 = vmatpush.msra.mxu0 0.0
    %3157 = vmatpush.msra.mxu0 0.0
    %3158 = vmatpush.msra.mxu0 0.0
    %3159 = vmatpush.msra.mxu0 0.0
    %3160 = vmatpush.msra.mxu0 %v130
    %3161 = vmatpush.msra.mxu0 %v129
    %3162 = vmatpush.msra.mxu0 %v128
    %3163 = vmatpush.msra.mxu0 %v127
    %3164 = vmatmul.f32.gmra.mxu0 %v3143
    %v3165 = vpop.f32.mrf.mxu0
    %v3166 = vadd.f32 %v1729, %v3165
    %3167 = vmatmul.f32.gmra.mxu0 %v3146
    %v3168 = vpop.f32.mrf.mxu0
    %v3169 = vadd.f32 %v1729, %v3168
    %3170 = vdwg.mxu0
    %v3171 = vmax.f32 %v3166, 0.0
    %v3172 = vmax.f32 %v3169, 0.0
    %v3174 = vsel %vm1765, %v3171, 0
    %v3177 = vsel %vm1765, %v3172, 0
    %3179 = vmatpush.msra.mxu0 0.0
    %3180 = vmatpush.msra.mxu0 0.0
    %3181 = vmatpush.msra.mxu0 0.0
    %3182 = vmatpush.msra.mxu0 0.0
    %3183 = vmatpush.msra.mxu0 0.0
    %3184 = vmatpush.msra.mxu0 0.0
    %3185 = vmatpush.msra.mxu0 0.0
    %3186 = vmatpush.msra.mxu0 0.0
    %3187 = vmatpush.msra.mxu0 %v139
    %3188 = vmatpush.msra.mxu0 %v138
    %3189 = vmatpush.msra.mxu0 %v137
    %3190 = vmatpush.msra.mxu0 %v136
    %3191 = vmatpush.msra.mxu0 %v135
    %3192 = vmatpush.msra.mxu0 %v134
    %3193 = vmatpush.msra.mxu0 %v133
    %3194 = vmatpush.msra.mxu0 %v132
    %3195 = vmatmul.f32.gmra.mxu0 %v3174
    %v3196 = vpop.f32.mrf.mxu0
    %v3197 = vadd.f32 %v1763, %v3196
    %3198 = vmatmul.f32.gmra.mxu0 %v3177
    %v3199 = vpop.f32.mrf.mxu0
    %v3200 = vadd.f32 %v1763, %v3199
    %3201 = vdwg.mxu0
    %v3202 = vadd.f32 %v3140, %v3197
    %v3203 = vadd.f32 %v3141, %v3200
    %v3204 = vsel %vm198, %v3202, 0.0
    %3205 = vadd.xlane.f32.xlu0 %v3204
    %v3206 = vpop.xlane.xlu0 %3205
    %v3207 = vsel %vm198, %v3203, 0.0
    %3208 = vadd.xlane.f32.xlu0 %v3207
    %v3209 = vpop.xlane.xlu0 %3208
    %v3210 = vmul.f32 %v3206, %v965
    %v3211 = vmul.f32 %v3209, %v965
    %v3212 = vsub.f32 %v3202, %v3210
    %v3213 = vsub.f32 %v3203, %v3211
    %v3214 = vmul.f32 %v3212, %v3212
    %v3215 = vmul.f32 %v3213, %v3213
    %v3216 = vsel %vm198, %v3214, 0.0
    %3217 = vadd.xlane.f32.xlu0 %v3216
    %v3218 = vpop.xlane.xlu0 %3217
    %v3219 = vsel %vm198, %v3215, 0.0
    %3220 = vadd.xlane.f32.xlu0 %v3219
    %v3221 = vpop.xlane.xlu0 %3220
    %v3222 = vmul.f32 %v3218, %v965
    %v3223 = vmul.f32 %v3221, %v965
    %v3224 = vadd.f32 %v3222, 1e-05
    %v3225 = vadd.f32 %v3223, 1e-05
    %v3226 = vrsqrt.pop %v3224
    %v3227 = vmul.f32 %v3226, %v3224
    %v3228 = vmul.f32 %v3227, %v3226
    %v3229 = vmul.f32 0.5, %v3228
    %v3230 = vsub.f32 1.5, %v3229
    %v3231 = vmul.f32 %v3226, %v3230
    %vm3232 = vweird.f32 %v3224
    %vm3233 = vweird.f32 %v3226
    %vm3234 = vmor %vm3232, %vm3233
    %v3235 = vsel %vm3234, %v3226, %v3231
    %v3236 = vrsqrt.pop %v3225
    %v3237 = vmul.f32 %v3236, %v3225
    %v3238 = vmul.f32 %v3237, %v3236
    %v3239 = vmul.f32 0.5, %v3238
    %v3240 = vsub.f32 1.5, %v3239
    %v3241 = vmul.f32 %v3236, %v3240
    %vm3242 = vweird.f32 %v3225
    %vm3243 = vweird.f32 %v3236
    %vm3244 = vmor %vm3242, %vm3243
    %v3245 = vsel %vm3244, %v3236, %v3241
    %v3246 = vmul.f32 %v3212, %v3235
    %v3247 = vmul.f32 %v3213, %v3245
    %v3248 = vmul.f32 %v3246, %v1842
    %v3249 = vmul.f32 %v3247, %v1842
    %v3250 = vadd.f32 %v3248, %v1847
    %v3251 = vadd.f32 %v3249, %v1847
    %v3252 = vsel %vm198, %v3250, 0.0
    %3253 = vadd.xlane.f32.xlu0 %v3252
    %v3254 = vpop.xlane.xlu0 %3253
    %v3255 = vsel %vm198, %v3251, 0.0
    %3256 = vadd.xlane.f32.xlu0 %v3255
    %v3257 = vpop.xlane.xlu0 %3256
    %v3258 = vmul.f32 %v3254, %v965
    %v3259 = vmul.f32 %v3257, %v965
    %v3260 = vsub.f32 %v3250, %v3258
    %v3261 = vsub.f32 %v3251, %v3259
    %v3262 = vmul.f32 %v3260, %v3260
    %v3263 = vmul.f32 %v3261, %v3261
    %v3264 = vsel %vm198, %v3262, 0.0
    %3265 = vadd.xlane.f32.xlu0 %v3264
    %v3266 = vpop.xlane.xlu0 %3265
    %v3267 = vsel %vm198, %v3263, 0.0
    %3268 = vadd.xlane.f32.xlu0 %v3267
    %v3269 = vpop.xlane.xlu0 %3268
    %v3270 = vmul.f32 %v3266, %v965
    %v3271 = vmul.f32 %v3269, %v965
    %v3272 = vadd.f32 %v3270, 1e-05
    %v3273 = vadd.f32 %v3271, 1e-05
    %v3274 = vrsqrt.pop %v3272
    %v3275 = vmul.f32 %v3274, %v3272
    %v3276 = vmul.f32 %v3275, %v3274
    %v3277 = vmul.f32 0.5, %v3276
    %v3278 = vsub.f32 1.5, %v3277
    %v3279 = vmul.f32 %v3274, %v3278
    %vm3280 = vweird.f32 %v3272
    %vm3281 = vweird.f32 %v3274
    %vm3282 = vmor %vm3280, %vm3281
    %v3283 = vsel %vm3282, %v3274, %v3279
    %v3284 = vrsqrt.pop %v3273
    %v3285 = vmul.f32 %v3284, %v3273
    %v3286 = vmul.f32 %v3285, %v3284
    %v3287 = vmul.f32 0.5, %v3286
    %v3288 = vsub.f32 1.5, %v3287
    %v3289 = vmul.f32 %v3284, %v3288
    %vm3290 = vweird.f32 %v3273
    %vm3291 = vweird.f32 %v3284
    %vm3292 = vmor %vm3290, %vm3291
    %v3293 = vsel %vm3292, %v3284, %v3289
    %v3294 = vmul.f32 %v3260, %v3283
    %v3295 = vmul.f32 %v3261, %v3293
    %v3297 = vperm.slane %v147, 0
    %v3299 = vmul.f32 %v3294, %v3297
    %v3300 = vmul.f32 %v3295, %v3297
    %v3302 = vperm.slane %v148, 0
    %v3304 = vadd.f32 %v3299, %v3302
    %v3305 = vadd.f32 %v3300, %v3302
    %3307 = vrot.lane.b32.xlu0 %v3305, 32
    %v3308 = vpop.permute.xlu0 %3307
    %v3310 = vsel %vm198, %v3304, %v3308
    %3311 = vst.msk [vmem:[%s24] sm:$0xff] %vm1765, %v3310
    // Predicated region
    $region106: #{transformer_decoder_forward.1} parent=1 // pred_check
      _
    $region107: #{transformer_decoder_forward.1} parent=1 // pred_check_branch
      %3313 = sbr.rel (0) target = $region109
    $region108: #{transformer_decoder_forward.1} parent=1 // pred_region
      _
    $region109: #{transformer_decoder_forward.1} parent=1 // pred_fallthru
      _
    // Predicated region
    $region110: #{transformer_decoder_forward.1} parent=1 // pred_check
      _
    $region111: #{transformer_decoder_forward.1} parent=1 // pred_check_branch
      %3315 = sbr.rel (0) target = $region113
    $region112: #{transformer_decoder_forward.1} parent=1 // pred_region
      _
    $region113: #{transformer_decoder_forward.1} parent=1 // pred_fallthru
      _
    %3316 = vsyncpa [#allocation3], 1
    %3317 = vsyncpa [#allocation5], 1

</llo_original>
